<compile_context>
chip_gen: v7x
topology: tpu7x:2x2x1
jax: 0.10.0
libtpu: 0.0.40
codegen_flags: <defaults>
</compile_context>

<pallas_src>
import jax
import jax.numpy as jnp
from jax.experimental import pallas as pl
from jax.experimental.pallas import tpu as pltpu

K_SIZE = 4  # all ConvTranspose2d layers use a 4x4 kernel


def _round_up(x, m):
    return (x + m - 1) // m * m


# ----------------------------------------------------------------------------
# Pallas kernel: fused  out = act((x @ w) * scale + bias)
#   x: (P, M, K) bf16, w: (P, K, N) bf16, scale/bias: (1, N) f32
#   K fits in a single tile -> straight-line body, no accumulator scratch.
# ----------------------------------------------------------------------------
def _make_fused_kernel(activation):
    def kernel(x_ref, w_ref, s_ref, b_ref, o_ref):
        y = jnp.dot(x_ref[0], w_ref[0], preferred_element_type=jnp.float32)
        y = y * s_ref[...] + b_ref[...]          # f32 epilogue
        if activation == "relu":
            y = jnp.maximum(y, 0.0)
        elif activation == "tanh":
            y = jnp.tanh(y)
        o_ref[0] = y.astype(o_ref.dtype)

    return kernel


def fused_matmul_bn_act(x, w, scale, bias, activation,
                        out_dtype=jnp.bfloat16, tm_cap=512, tn_cap=2048):
    """act((x @ w) * scale + bias) batched over a leading 'phase' axis.

    Returns the padded (P, Mp, Np) result; caller slices the valid region.
    """
    P, M, K = x.shape
    assert w.shape[0] == P and w.shape[1] == K
    N = w.shape[2]

    Kp = _round_up(K, 8)                      # sublane alignment; full-K tile
    tn = min(_round_up(N, 128), tn_cap)       # lane-dense output tile
    tm = min(_round_up(M, 8), tm_cap)
    Mp = _round_up(M, tm)
    Np = _round_up(N, tn)

    xp = jnp.pad(x.astype(jnp.bfloat16), ((0, 0), (0, Mp - M), (0, Kp - K)))
    wp = jnp.pad(w.astype(jnp.bfloat16), ((0, 0), (0, Kp - K), (0, Np - N)))
    sp = jnp.pad(scale.astype(jnp.float32), (0, Np - N)).reshape(1, Np)
    bp = jnp.pad(bias.astype(jnp.float32), (0, Np - N)).reshape(1, Np)

    out = pl.pallas_call(
        _make_fused_kernel(activation),
        out_shape=jax.ShapeDtypeStruct((P, Mp, Np), out_dtype),
        grid_spec=pltpu.PrefetchScalarGridSpec(
            num_scalar_prefetch=0,
            grid=(P, Mp // tm, Np // tn),
            in_specs=[
                pl.BlockSpec((1, tm, Kp), lambda p, i, j: (p, i, 0)),
                pl.BlockSpec((1, Kp, tn), lambda p, i, j: (p, 0, j)),
                pl.BlockSpec((1, tn), lambda p, i, j: (0, j)),
                pl.BlockSpec((1, tn), lambda p, i, j: (0, j)),
            ],
            out_specs=pl.BlockSpec((1, tm, tn), lambda p, i, j: (p, i, j)),
        ),
        compiler_params=pltpu.CompilerParams(
            dimension_semantics=("parallel", "parallel", "parallel")),
    )(xp, wp, sp, bp)
    return out


# ----------------------------------------------------------------------------
# Plain-JAX glue
# ----------------------------------------------------------------------------
def _bn_fold(layer, eps):
    inv = layer["gamma"] / jnp.sqrt(layer["rvar"] + eps)
    return inv, layer["beta"] - layer["rmean"] * inv


def _phase_decompose(x_nhwc, w_convT):
    """ConvTranspose2d(k=4, s=2, p=1) as 4 sub-pixel stride-1 2x2 convs.

    Returns:
      x_stack: (4, B*H*W, 4*Cin) patches (phase order ph*2+pw)
      w_stack: (4, 4*Cin, Cout)  matching sub-kernels
    The phase (ph, pw) result gives out[:, 2m+ph, 2n+pw, :].
    """
    B, H, W, C = x_nhwc.shape
    xp = jnp.pad(x_nhwc, ((0, 0), (1, 1), (1, 1), (0, 0)))  # (B, H+2, W+2, C)
    # For output-row parity ph, the two taps dh=0,1 read padded rows m+ph+dh
    # and multiply kernel rows kh = (3,1) for ph=0 and (2,0) for ph=1.
    kh_idx = ((3, 1), (2, 0))
    phases_x, phases_w = [], []
    for ph in range(2):
        for pw in range(2):
            cols, wrows = [], []
            for dh in range(2):
                for dw in range(2):
                    cols.append(xp[:, ph + dh:ph + dh + H,
                                   pw + dw:pw + dw + W, :])
                    wrows.append(w_convT[:, :, kh_idx[ph][dh], kh_idx[pw][dw]])
            xmat = jnp.concatenate(cols, axis=-1).reshape(B * H * W, 4 * C)
            wmat = jnp.concatenate(wrows, axis=0)            # (4*Cin, Cout)
            phases_x.append(xmat)
            phases_w.append(wmat)
    return jnp.stack(phases_x), jnp.stack(phases_w), (B, H, W)


# ----------------------------------------------------------------------------
# Parameter init (deterministic, DCGAN-style) and forward pass
# ----------------------------------------------------------------------------
def init_params(key, random_size=32, features=16, channels=3):
    cfg = [
        (random_size,  features * 8, 1, 0),
        (features * 8, features * 4, 2, 1),
        (features * 4, features * 2, 2, 1),
        (features * 2, features,     2, 1),
        (features,     channels,     2, 1),
    ]
    params = []
    for idx, (cin, cout, stride, pad) in enumerate(cfg):
        key, kw, kg, kb, km = jax.random.split(key, 5)
        layer = {
            "w": 0.02 * jax.random.normal(kw, (cin, cout, K_SIZE, K_SIZE),
                                          jnp.float32),
            "stride": stride,
            "pad": pad,
        }
        if idx < len(cfg) - 1:   # ConvT -> BN -> ReLU blocks
            layer.update(
                gamma=1.0 + 0.1 * jax.random.normal(kg, (cout,), jnp.float32),
                beta=0.1 * jax.random.normal(kb, (cout,), jnp.float32),
                rmean=0.05 * jax.random.normal(km, (cout,), jnp.float32),
                rvar=jnp.ones((cout,), jnp.float32),
                activation="relu",
            )
        else:                    # final ConvT -> Tanh
            layer.update(activation="tanh")
        params.append(layer)
    return params


def generator_forward(z_nchw, params, eps=1e-5):
    B = z_nchw.shape[0]

    # ---- Layer 1: 1x1 input, stride 1, pad 0  ==  dense matmul + reshape ----
    layer = params[0]
    assert layer["stride"] == 1 and layer["pad"] == 0
    w = layer["w"]                                    # (Cin, Cout, 4, 4)
    cin, cout = w.shape[0], w.shape[1]
    scale, bias = _bn_fold(layer, eps)
    # column index = (kh*4 + kw)*Cout + co  -> output reshapes directly to NHWC
    w_mat = jnp.transpose(w, (0, 2, 3, 1)).reshape(cin, K_SIZE * K_SIZE * cout)
    x_mat = z_nchw.reshape(B, cin).astype(jnp.bfloat16)
    y = fused_matmul_bn_act(x_mat[None], w_mat[None],
                            jnp.tile(scale, K_SIZE * K_SIZE),
                            jnp.tile(bias, K_SIZE * K_SIZE),
                            layer["activation"])
    x = y[0, :B, :K_SIZE * K_SIZE * cout].reshape(B, K_SIZE, K_SIZE, cout)

    # ---- Layers 2..5: stride-2 ConvT via sub-pixel phase decomposition ----
    for layer in params[1:]:
        assert layer["stride"] == 2 and layer["pad"] == 1
        w = layer["w"]
        cout = w.shape[1]
        x_stack, w_stack, (B, H, W) = _phase_decompose(x, w)
        if layer["activation"] == "relu":
            scale, bias = _bn_fold(layer, eps)
        else:  # final tanh layer has no BatchNorm
            scale = jnp.ones((cout,), jnp.float32)
            bias = jnp.zeros((cout,), jnp.float32)
        y = fused_matmul_bn_act(x_stack, w_stack, scale, bias,
                                layer["activation"])      # (4, Mp, Np)
        y = y[:, :B * H * W, :cout].reshape(2, 2, B, H, W, cout)
        # stitch phases: out[b, 2m+ph, 2n+pw, c] = y[ph, pw, b, m, n, c]
        x = jnp.transpose(y, (2, 3, 0, 4, 1, 5)).reshape(B, 2 * H, 2 * W, cout)

    return jnp.transpose(x, (0, 3, 1, 2)).astype(jnp.float32)   # -> NCHW f32


if __name__ == "__main__":
    key = jax.random.PRNGKey(0)
    kz, kp = jax.random.split(key)

    # Small shapes consistent with the module's forward:
    # input noise is (B, randomSize, 1, 1); output is (B, channels, 64, 64).
    B, RANDOM_SIZE, FEATURES, CHANNELS = 2, 32, 16, 3
    z = jax.random.normal(kz, (B, RANDOM_SIZE, 1, 1), jnp.float32)
    params = init_params(kp, random_size=RANDOM_SIZE,
                         features=FEATURES, channels=CHANNELS)

    fwd = jax.jit(lambda zz: generator_forward(zz, params))
    out = jax.block_until_ready(fwd(z))

    assert out.shape == (B, CHANNELS, 64, 64), out.shape
    assert bool(jnp.all(jnp.isfinite(out)))
    assert bool(jnp.all(jnp.abs(out) <= 1.0 + 1e-6))  # tanh range
    print("KERNEL_OK")
</pallas_src>

<mosaic_0001>
module attributes {stable_mosaic.version = 11 : i64} {
  func.func @kernel(%arg0: i32, %arg1: i32, %arg2: i32, %arg3: memref<1x32x512xbf16, #tpu.memory_space<vmem>>, %arg4: memref<1x512x128xbf16, #tpu.memory_space<vmem>>, %arg5: memref<1x128xf32, #tpu.memory_space<vmem>>, %arg6: memref<1x128xf32, #tpu.memory_space<vmem>>, %arg7: memref<1x32x128xbf16, #tpu.memory_space<vmem>>) attributes {dimension_semantics = [#tpu.dimension_semantics<parallel>, #tpu.dimension_semantics<parallel>, #tpu.dimension_semantics<parallel>], iteration_bounds = array<i64: 4, 1, 1>, scalar_prefetch = 0 : i64, scratch_operands = 0 : i64, tpu.core_type = #tpu.core_type<tc>, window_params = [{transform_indices = @transform_0, window_bounds = array<i64: 1, 32, 512>}, {transform_indices = @transform_1, window_bounds = array<i64: 1, 512, 128>}, {transform_indices = @transform_2, window_bounds = array<i64: 1, 128>}, {transform_indices = @transform_3, window_bounds = array<i64: 1, 128>}, {transform_indices = @transform_4, window_bounds = array<i64: 1, 32, 128>}]} {
    %c0 = arith.constant 0 : index
    %c0_0 = arith.constant 0 : index
    %c0_1 = arith.constant 0 : index
    %0 = vector.load %arg3[%c0, %c0_0, %c0_1] : memref<1x32x512xbf16, #tpu.memory_space<vmem>>, vector<1x32x512xbf16>
    %1 = vector.shape_cast %0 : vector<1x32x512xbf16> to vector<32x512xbf16>
    %c0_2 = arith.constant 0 : index
    %c0_3 = arith.constant 0 : index
    %c0_4 = arith.constant 0 : index
    %2 = vector.load %arg4[%c0_2, %c0_3, %c0_4] : memref<1x512x128xbf16, #tpu.memory_space<vmem>>, vector<1x512x128xbf16>
    %3 = vector.shape_cast %2 : vector<1x512x128xbf16> to vector<512x128xbf16>
    %cst = arith.constant dense<0.000000e+00> : vector<32x128xf32>
    %4 = tpu.matmul %1, %3, %cst {dimension_numbers = #tpu.dot_dimension_numbers<[1], [0], [0], [1], [0, 0, 1, 1], [], []>} : vector<32x512xbf16>, vector<512x128xbf16>, vector<32x128xf32> -> vector<32x128xf32>
    %c0_5 = arith.constant 0 : index
    %c0_6 = arith.constant 0 : index
    %5 = vector.load %arg5[%c0_5, %c0_6] : memref<1x128xf32, #tpu.memory_space<vmem>>, vector<1x128xf32>
    %6 = vector.broadcast %5 : vector<1x128xf32> to vector<32x128xf32>
    %7 = arith.mulf %4, %6 : vector<32x128xf32>
    %c0_7 = arith.constant 0 : index
    %c0_8 = arith.constant 0 : index
    %8 = vector.load %arg6[%c0_7, %c0_8] : memref<1x128xf32, #tpu.memory_space<vmem>>, vector<1x128xf32>
    %9 = vector.broadcast %8 : vector<1x128xf32> to vector<32x128xf32>
    %10 = arith.addf %7, %9 : vector<32x128xf32>
    %cst_9 = arith.constant 0.000000e+00 : f32
    %11 = vector.broadcast %cst_9 : f32 to vector<32x128xf32>
    %12 = arith.maximumf %10, %11 : vector<32x128xf32>
    %13 = arith.truncf %12 : vector<32x128xf32> to vector<32x128xbf16>
    %c0_10 = arith.constant 0 : index
    %c0_11 = arith.constant 0 : index
    %c0_12 = arith.constant 0 : index
    %14 = vector.load %arg7[%c0_10, %c0_11, %c0_12] : memref<1x32x128xbf16, #tpu.memory_space<vmem>>, vector<1x32x128xbf16>
    %15 = vector.shape_cast %14 : vector<1x32x128xbf16> to vector<32x128xbf16>
    %16 = vector.shape_cast %13 : vector<32x128xbf16> to vector<1x32x128xbf16>
    tpu.vector_store %arg7[%c0_10, %c0_11, %c0_12], %16 {strides = array<i32>} : memref<1x32x128xbf16, #tpu.memory_space<vmem>>, vector<1x32x128xbf16>,
    return
  }
  func.func @transform_0(%arg0: i32, %arg1: i32, %arg2: i32) -> (i32, i32, i32) {
    %c0_i32 = arith.constant 0 : i32
    %c0_i32_0 = arith.constant 0 : i32
    return %arg0, %arg1, %c0_i32 : i32, i32, i32
  }
  func.func @transform_1(%arg0: i32, %arg1: i32, %arg2: i32) -> (i32, i32, i32) {
    %c0_i32 = arith.constant 0 : i32
    %c0_i32_0 = arith.constant 0 : i32
    return %arg0, %c0_i32, %arg2 : i32, i32, i32
  }
  func.func @transform_2(%arg0: i32, %arg1: i32, %arg2: i32) -> (i32, i32) {
    %c0_i32 = arith.constant 0 : i32
    %c0_i32_0 = arith.constant 0 : i32
    return %c0_i32, %arg2 : i32, i32
  }
  func.func @transform_3(%arg0: i32, %arg1: i32, %arg2: i32) -> (i32, i32) {
    %c0_i32 = arith.constant 0 : i32
    %c0_i32_0 = arith.constant 0 : i32
    return %c0_i32, %arg2 : i32, i32
  }
  func.func @transform_4(%arg0: i32, %arg1: i32, %arg2: i32) -> (i32, i32, i32) {
    %c0_i32 = arith.constant 0 : i32
    return %arg0, %arg1, %arg2 : i32, i32, i32
  }
}

module attributes {stable_mosaic.version = 11 : i64} {
  func.func @kernel(%arg0: i32, %arg1: i32, %arg2: i32, %arg3: memref<1x8x32xbf16, #tpu.memory_space<vmem>>, %arg4: memref<1x32x2048xbf16, #tpu.memory_space<vmem>>, %arg5: memref<1x2048xf32, #tpu.memory_space<vmem>>, %arg6: memref<1x2048xf32, #tpu.memory_space<vmem>>, %arg7: memref<1x8x2048xbf16, #tpu.memory_space<vmem>>) attributes {dimension_semantics = [#tpu.dimension_semantics<parallel>, #tpu.dimension_semantics<parallel>, #tpu.dimension_semantics<parallel>], iteration_bounds = array<i64: 1, 1, 1>, scalar_prefetch = 0 : i64, scratch_operands = 0 : i64, tpu.core_type = #tpu.core_type<tc>, window_params = [{transform_indices = @transform_0, window_bounds = array<i64: 1, 8, 32>}, {transform_indices = @transform_1, window_bounds = array<i64: 1, 32, 2048>}, {transform_indices = @transform_2, window_bounds = array<i64: 1, 2048>}, {transform_indices = @transform_3, window_bounds = array<i64: 1, 2048>}, {transform_indices = @transform_4, window_bounds = array<i64: 1, 8, 2048>}]} {
    %c0 = arith.constant 0 : index
    %c0_0 = arith.constant 0 : index
    %c0_1 = arith.constant 0 : index
    %0 = vector.load %arg3[%c0, %c0_0, %c0_1] : memref<1x8x32xbf16, #tpu.memory_space<vmem>>, vector<1x8x32xbf16>
    %1 = vector.shape_cast %0 : vector<1x8x32xbf16> to vector<8x32xbf16>
    %c0_2 = arith.constant 0 : index
    %c0_3 = arith.constant 0 : index
    %c0_4 = arith.constant 0 : index
    %2 = vector.load %arg4[%c0_2, %c0_3, %c0_4] : memref<1x32x2048xbf16, #tpu.memory_space<vmem>>, vector<1x32x2048xbf16>
    %3 = vector.shape_cast %2 : vector<1x32x2048xbf16> to vector<32x2048xbf16>
    %cst = arith.constant dense<0.000000e+00> : vector<8x2048xf32>
    %4 = tpu.matmul %1, %3, %cst {dimension_numbers = #tpu.dot_dimension_numbers<[1], [0], [0], [1], [0, 0, 1, 1], [], []>} : vector<8x32xbf16>, vector<32x2048xbf16>, vector<8x2048xf32> -> vector<8x2048xf32>
    %c0_5 = arith.constant 0 : index
    %c0_6 = arith.constant 0 : index
    %5 = vector.load %arg5[%c0_5, %c0_6] : memref<1x2048xf32, #tpu.memory_space<vmem>>, vector<1x2048xf32>
    %6 = vector.broadcast %5 : vector<1x2048xf32> to vector<8x2048xf32>
    %7 = arith.mulf %4, %6 : vector<8x2048xf32>
    %c0_7 = arith.constant 0 : index
    %c0_8 = arith.constant 0 : index
    %8 = vector.load %arg6[%c0_7, %c0_8] : memref<1x2048xf32, #tpu.memory_space<vmem>>, vector<1x2048xf32>
    %9 = vector.broadcast %8 : vector<1x2048xf32> to vector<8x2048xf32>
    %10 = arith.addf %7, %9 : vector<8x2048xf32>
    %cst_9 = arith.constant 0.000000e+00 : f32
    %11 = vector.broadcast %cst_9 : f32 to vector<8x2048xf32>
    %12 = arith.maximumf %10, %11 : vector<8x2048xf32>
    %13 = arith.truncf %12 : vector<8x2048xf32> to vector<8x2048xbf16>
    %c0_10 = arith.constant 0 : index
    %c0_11 = arith.constant 0 : index
    %c0_12 = arith.constant 0 : index
    %14 = vector.load %arg7[%c0_10, %c0_11, %c0_12] : memref<1x8x2048xbf16, #tpu.memory_space<vmem>>, vector<1x8x2048xbf16>
    %15 = vector.shape_cast %14 : vector<1x8x2048xbf16> to vector<8x2048xbf16>
    %16 = vector.shape_cast %13 : vector<8x2048xbf16> to vector<1x8x2048xbf16>
    tpu.vector_store %arg7[%c0_10, %c0_11, %c0_12], %16 {strides = array<i32>} : memref<1x8x2048xbf16, #tpu.memory_space<vmem>>, vector<1x8x2048xbf16>,
    return
  }
  func.func @transform_0(%arg0: i32, %arg1: i32, %arg2: i32) -> (i32, i32, i32) {
    %c0_i32 = arith.constant 0 : i32
    %c0_i32_0 = arith.constant 0 : i32
    return %arg0, %arg1, %c0_i32 : i32, i32, i32
  }
  func.func @transform_1(%arg0: i32, %arg1: i32, %arg2: i32) -> (i32, i32, i32) {
    %c0_i32 = arith.constant 0 : i32
    %c0_i32_0 = arith.constant 0 : i32
    return %arg0, %c0_i32, %arg2 : i32, i32, i32
  }
  func.func @transform_2(%arg0: i32, %arg1: i32, %arg2: i32) -> (i32, i32) {
    %c0_i32 = arith.constant 0 : i32
    %c0_i32_0 = arith.constant 0 : i32
    return %c0_i32, %arg2 : i32, i32
  }
  func.func @transform_3(%arg0: i32, %arg1: i32, %arg2: i32) -> (i32, i32) {
    %c0_i32 = arith.constant 0 : i32
    %c0_i32_0 = arith.constant 0 : i32
    return %c0_i32, %arg2 : i32, i32
  }
  func.func @transform_4(%arg0: i32, %arg1: i32, %arg2: i32) -> (i32, i32, i32) {
    %c0_i32 = arith.constant 0 : i32
    return %arg0, %arg1, %arg2 : i32, i32, i32
  }
}

module attributes {stable_mosaic.version = 11 : i64} {
  func.func @kernel(%arg0: i32, %arg1: i32, %arg2: i32, %arg3: memref<1x128x256xbf16, #tpu.memory_space<vmem>>, %arg4: memref<1x256x128xbf16, #tpu.memory_space<vmem>>, %arg5: memref<1x128xf32, #tpu.memory_space<vmem>>, %arg6: memref<1x128xf32, #tpu.memory_space<vmem>>, %arg7: memref<1x128x128xbf16, #tpu.memory_space<vmem>>) attributes {dimension_semantics = [#tpu.dimension_semantics<parallel>, #tpu.dimension_semantics<parallel>, #tpu.dimension_semantics<parallel>], iteration_bounds = array<i64: 4, 1, 1>, scalar_prefetch = 0 : i64, scratch_operands = 0 : i64, tpu.core_type = #tpu.core_type<tc>, window_params = [{transform_indices = @transform_0, window_bounds = array<i64: 1, 128, 256>}, {transform_indices = @transform_1, window_bounds = array<i64: 1, 256, 128>}, {transform_indices = @transform_2, window_bounds = array<i64: 1, 128>}, {transform_indices = @transform_3, window_bounds = array<i64: 1, 128>}, {transform_indices = @transform_4, window_bounds = array<i64: 1, 128, 128>}]} {
    %c0 = arith.constant 0 : index
    %c0_0 = arith.constant 0 : index
    %c0_1 = arith.constant 0 : index
    %0 = vector.load %arg3[%c0, %c0_0, %c0_1] : memref<1x128x256xbf16, #tpu.memory_space<vmem>>, vector<1x128x256xbf16>
    %1 = vector.shape_cast %0 : vector<1x128x256xbf16> to vector<128x256xbf16>
    %c0_2 = arith.constant 0 : index
    %c0_3 = arith.constant 0 : index
    %c0_4 = arith.constant 0 : index
    %2 = vector.load %arg4[%c0_2, %c0_3, %c0_4] : memref<1x256x128xbf16, #tpu.memory_space<vmem>>, vector<1x256x128xbf16>
    %3 = vector.shape_cast %2 : vector<1x256x128xbf16> to vector<256x128xbf16>
    %cst = arith.constant dense<0.000000e+00> : vector<128x128xf32>
    %4 = tpu.matmul %1, %3, %cst {dimension_numbers = #tpu.dot_dimension_numbers<[1], [0], [0], [1], [0, 0, 1, 1], [], []>} : vector<128x256xbf16>, vector<256x128xbf16>, vector<128x128xf32> -> vector<128x128xf32>
    %c0_5 = arith.constant 0 : index
    %c0_6 = arith.constant 0 : index
    %5 = vector.load %arg5[%c0_5, %c0_6] : memref<1x128xf32, #tpu.memory_space<vmem>>, vector<1x128xf32>
    %6 = vector.broadcast %5 : vector<1x128xf32> to vector<128x128xf32>
    %7 = arith.mulf %4, %6 : vector<128x128xf32>
    %c0_7 = arith.constant 0 : index
    %c0_8 = arith.constant 0 : index
    %8 = vector.load %arg6[%c0_7, %c0_8] : memref<1x128xf32, #tpu.memory_space<vmem>>, vector<1x128xf32>
    %9 = vector.broadcast %8 : vector<1x128xf32> to vector<128x128xf32>
    %10 = arith.addf %7, %9 : vector<128x128xf32>
    %cst_9 = arith.constant 0.000000e+00 : f32
    %11 = vector.broadcast %cst_9 : f32 to vector<128x128xf32>
    %12 = arith.maximumf %10, %11 : vector<128x128xf32>
    %13 = arith.truncf %12 : vector<128x128xf32> to vector<128x128xbf16>
    %c0_10 = arith.constant 0 : index
    %c0_11 = arith.constant 0 : index
    %c0_12 = arith.constant 0 : index
    %14 = vector.load %arg7[%c0_10, %c0_11, %c0_12] : memref<1x128x128xbf16, #tpu.memory_space<vmem>>, vector<1x128x128xbf16>
    %15 = vector.shape_cast %14 : vector<1x128x128xbf16> to vector<128x128xbf16>
    %16 = vector.shape_cast %13 : vector<128x128xbf16> to vector<1x128x128xbf16>
    tpu.vector_store %arg7[%c0_10, %c0_11, %c0_12], %16 {strides = array<i32>} : memref<1x128x128xbf16, #tpu.memory_space<vmem>>, vector<1x128x128xbf16>,
    return
  }
  func.func @transform_0(%arg0: i32, %arg1: i32, %arg2: i32) -> (i32, i32, i32) {
    %c0_i32 = arith.constant 0 : i32
    %c0_i32_0 = arith.constant 0 : i32
    return %arg0, %arg1, %c0_i32 : i32, i32, i32
  }
  func.func @transform_1(%arg0: i32, %arg1: i32, %arg2: i32) -> (i32, i32, i32) {
    %c0_i32 = arith.constant 0 : i32
    %c0_i32_0 = arith.constant 0 : i32
    return %arg0, %c0_i32, %arg2 : i32, i32, i32
  }
  func.func @transform_2(%arg0: i32, %arg1: i32, %arg2: i32) -> (i32, i32) {
    %c0_i32 = arith.constant 0 : i32
    %c0_i32_0 = arith.constant 0 : i32
    return %c0_i32, %arg2 : i32, i32
  }
  func.func @transform_3(%arg0: i32, %arg1: i32, %arg2: i32) -> (i32, i32) {
    %c0_i32 = arith.constant 0 : i32
    %c0_i32_0 = arith.constant 0 : i32
    return %c0_i32, %arg2 : i32, i32
  }
  func.func @transform_4(%arg0: i32, %arg1: i32, %arg2: i32) -> (i32, i32, i32) {
    %c0_i32 = arith.constant 0 : i32
    return %arg0, %arg1, %arg2 : i32, i32, i32
  }
}

module attributes {stable_mosaic.version = 11 : i64} {
  func.func @kernel(%arg0: i32, %arg1: i32, %arg2: i32, %arg3: memref<1x512x128xbf16, #tpu.memory_space<vmem>>, %arg4: memref<1x128x128xbf16, #tpu.memory_space<vmem>>, %arg5: memref<1x128xf32, #tpu.memory_space<vmem>>, %arg6: memref<1x128xf32, #tpu.memory_space<vmem>>, %arg7: memref<1x512x128xbf16, #tpu.memory_space<vmem>>) attributes {dimension_semantics = [#tpu.dimension_semantics<parallel>, #tpu.dimension_semantics<parallel>, #tpu.dimension_semantics<parallel>], iteration_bounds = array<i64: 4, 1, 1>, scalar_prefetch = 0 : i64, scratch_operands = 0 : i64, tpu.core_type = #tpu.core_type<tc>, window_params = [{transform_indices = @transform_0, window_bounds = array<i64: 1, 512, 128>}, {transform_indices = @transform_1, window_bounds = array<i64: 1, 128, 128>}, {transform_indices = @transform_2, window_bounds = array<i64: 1, 128>}, {transform_indices = @transform_3, window_bounds = array<i64: 1, 128>}, {transform_indices = @transform_4, window_bounds = array<i64: 1, 512, 128>}]} {
    %c0 = arith.constant 0 : index
    %c0_0 = arith.constant 0 : index
    %c0_1 = arith.constant 0 : index
    %0 = vector.load %arg3[%c0, %c0_0, %c0_1] : memref<1x512x128xbf16, #tpu.memory_space<vmem>>, vector<1x512x128xbf16>
    %1 = vector.shape_cast %0 : vector<1x512x128xbf16> to vector<512x128xbf16>
    %c0_2 = arith.constant 0 : index
    %c0_3 = arith.constant 0 : index
    %c0_4 = arith.constant 0 : index
    %2 = vector.load %arg4[%c0_2, %c0_3, %c0_4] : memref<1x128x128xbf16, #tpu.memory_space<vmem>>, vector<1x128x128xbf16>
    %3 = vector.shape_cast %2 : vector<1x128x128xbf16> to vector<128x128xbf16>
    %cst = arith.constant dense<0.000000e+00> : vector<512x128xf32>
    %4 = tpu.matmul %1, %3, %cst {dimension_numbers = #tpu.dot_dimension_numbers<[1], [0], [0], [1], [0, 0, 1, 1], [], []>} : vector<512x128xbf16>, vector<128x128xbf16>, vector<512x128xf32> -> vector<512x128xf32>
    %c0_5 = arith.constant 0 : index
    %c0_6 = arith.constant 0 : index
    %5 = vector.load %arg5[%c0_5, %c0_6] : memref<1x128xf32, #tpu.memory_space<vmem>>, vector<1x128xf32>
    %6 = vector.broadcast %5 : vector<1x128xf32> to vector<512x128xf32>
    %7 = arith.mulf %4, %6 : vector<512x128xf32>
    %c0_7 = arith.constant 0 : index
    %c0_8 = arith.constant 0 : index
    %8 = vector.load %arg6[%c0_7, %c0_8] : memref<1x128xf32, #tpu.memory_space<vmem>>, vector<1x128xf32>
    %9 = vector.broadcast %8 : vector<1x128xf32> to vector<512x128xf32>
    %10 = arith.addf %7, %9 : vector<512x128xf32>
    %cst_9 = arith.constant 0.000000e+00 : f32
    %11 = vector.broadcast %cst_9 : f32 to vector<512x128xf32>
    %12 = arith.maximumf %10, %11 : vector<512x128xf32>
    %13 = arith.truncf %12 : vector<512x128xf32> to vector<512x128xbf16>
    %c0_10 = arith.constant 0 : index
    %c0_11 = arith.constant 0 : index
    %c0_12 = arith.constant 0 : index
    %14 = vector.load %arg7[%c0_10, %c0_11, %c0_12] : memref<1x512x128xbf16, #tpu.memory_space<vmem>>, vector<1x512x128xbf16>
    %15 = vector.shape_cast %14 : vector<1x512x128xbf16> to vector<512x128xbf16>
    %16 = vector.shape_cast %13 : vector<512x128xbf16> to vector<1x512x128xbf16>
    tpu.vector_store %arg7[%c0_10, %c0_11, %c0_12], %16 {strides = array<i32>} : memref<1x512x128xbf16, #tpu.memory_space<vmem>>, vector<1x512x128xbf16>,
    return
  }
  func.func @transform_0(%arg0: i32, %arg1: i32, %arg2: i32) -> (i32, i32, i32) {
    %c0_i32 = arith.constant 0 : i32
    %c0_i32_0 = arith.constant 0 : i32
    return %arg0, %arg1, %c0_i32 : i32, i32, i32
  }
  func.func @transform_1(%arg0: i32, %arg1: i32, %arg2: i32) -> (i32, i32, i32) {
    %c0_i32 = arith.constant 0 : i32
    %c0_i32_0 = arith.constant 0 : i32
    return %arg0, %c0_i32, %arg2 : i32, i32, i32
  }
  func.func @transform_2(%arg0: i32, %arg1: i32, %arg2: i32) -> (i32, i32) {
    %c0_i32 = arith.constant 0 : i32
    %c0_i32_0 = arith.constant 0 : i32
    return %c0_i32, %arg2 : i32, i32
  }
  func.func @transform_3(%arg0: i32, %arg1: i32, %arg2: i32) -> (i32, i32) {
    %c0_i32 = arith.constant 0 : i32
    %c0_i32_0 = arith.constant 0 : i32
    return %c0_i32, %arg2 : i32, i32
  }
  func.func @transform_4(%arg0: i32, %arg1: i32, %arg2: i32) -> (i32, i32, i32) {
    %c0_i32 = arith.constant 0 : i32
    return %arg0, %arg1, %arg2 : i32, i32, i32
  }
}

module attributes {stable_mosaic.version = 11 : i64} {
  func.func @kernel(%arg0: i32, %arg1: i32, %arg2: i32, %arg3: memref<1x512x64xbf16, #tpu.memory_space<vmem>>, %arg4: memref<1x64x128xbf16, #tpu.memory_space<vmem>>, %arg5: memref<1x128xf32, #tpu.memory_space<vmem>>, %arg6: memref<1x128xf32, #tpu.memory_space<vmem>>, %arg7: memref<1x512x128xbf16, #tpu.memory_space<vmem>>) attributes {dimension_semantics = [#tpu.dimension_semantics<parallel>, #tpu.dimension_semantics<parallel>, #tpu.dimension_semantics<parallel>], iteration_bounds = array<i64: 4, 4, 1>, scalar_prefetch = 0 : i64, scratch_operands = 0 : i64, tpu.core_type = #tpu.core_type<tc>, window_params = [{transform_indices = @transform_0, window_bounds = array<i64: 1, 512, 64>}, {transform_indices = @transform_1, window_bounds = array<i64: 1, 64, 128>}, {transform_indices = @transform_2, window_bounds = array<i64: 1, 128>}, {transform_indices = @transform_3, window_bounds = array<i64: 1, 128>}, {transform_indices = @transform_4, window_bounds = array<i64: 1, 512, 128>}]} {
    %c0 = arith.constant 0 : index
    %c0_0 = arith.constant 0 : index
    %c0_1 = arith.constant 0 : index
    %0 = vector.load %arg3[%c0, %c0_0, %c0_1] : memref<1x512x64xbf16, #tpu.memory_space<vmem>>, vector<1x512x64xbf16>
    %1 = vector.shape_cast %0 : vector<1x512x64xbf16> to vector<512x64xbf16>
    %c0_2 = arith.constant 0 : index
    %c0_3 = arith.constant 0 : index
    %c0_4 = arith.constant 0 : index
    %2 = vector.load %arg4[%c0_2, %c0_3, %c0_4] : memref<1x64x128xbf16, #tpu.memory_space<vmem>>, vector<1x64x128xbf16>
    %3 = vector.shape_cast %2 : vector<1x64x128xbf16> to vector<64x128xbf16>
    %cst = arith.constant dense<0.000000e+00> : vector<512x128xf32>
    %4 = tpu.matmul %1, %3, %cst {dimension_numbers = #tpu.dot_dimension_numbers<[1], [0], [0], [1], [0, 0, 1, 1], [], []>} : vector<512x64xbf16>, vector<64x128xbf16>, vector<512x128xf32> -> vector<512x128xf32>
    %c0_5 = arith.constant 0 : index
    %c0_6 = arith.constant 0 : index
    %5 = vector.load %arg5[%c0_5, %c0_6] : memref<1x128xf32, #tpu.memory_space<vmem>>, vector<1x128xf32>
    %6 = vector.broadcast %5 : vector<1x128xf32> to vector<512x128xf32>
    %7 = arith.mulf %4, %6 : vector<512x128xf32>
    %c0_7 = arith.constant 0 : index
    %c0_8 = arith.constant 0 : index
    %8 = vector.load %arg6[%c0_7, %c0_8] : memref<1x128xf32, #tpu.memory_space<vmem>>, vector<1x128xf32>
    %9 = vector.broadcast %8 : vector<1x128xf32> to vector<512x128xf32>
    %10 = arith.addf %7, %9 : vector<512x128xf32>
    %11 = math.tanh %10 : vector<512x128xf32>
    %12 = arith.truncf %11 : vector<512x128xf32> to vector<512x128xbf16>
    %c0_9 = arith.constant 0 : index
    %c0_10 = arith.constant 0 : index
    %c0_11 = arith.constant 0 : index
    %13 = vector.load %arg7[%c0_9, %c0_10, %c0_11] : memref<1x512x128xbf16, #tpu.memory_space<vmem>>, vector<1x512x128xbf16>
    %14 = vector.shape_cast %13 : vector<1x512x128xbf16> to vector<512x128xbf16>
    %15 = vector.shape_cast %12 : vector<512x128xbf16> to vector<1x512x128xbf16>
    tpu.vector_store %arg7[%c0_9, %c0_10, %c0_11], %15 {strides = array<i32>} : memref<1x512x128xbf16, #tpu.memory_space<vmem>>, vector<1x512x128xbf16>,
    return
  }
  func.func @transform_0(%arg0: i32, %arg1: i32, %arg2: i32) -> (i32, i32, i32) {
    %c0_i32 = arith.constant 0 : i32
    %c0_i32_0 = arith.constant 0 : i32
    return %arg0, %arg1, %c0_i32 : i32, i32, i32
  }
  func.func @transform_1(%arg0: i32, %arg1: i32, %arg2: i32) -> (i32, i32, i32) {
    %c0_i32 = arith.constant 0 : i32
    %c0_i32_0 = arith.constant 0 : i32
    return %arg0, %c0_i32, %arg2 : i32, i32, i32
  }
  func.func @transform_2(%arg0: i32, %arg1: i32, %arg2: i32) -> (i32, i32) {
    %c0_i32 = arith.constant 0 : i32
    %c0_i32_0 = arith.constant 0 : i32
    return %c0_i32, %arg2 : i32, i32
  }
  func.func @transform_3(%arg0: i32, %arg1: i32, %arg2: i32) -> (i32, i32) {
    %c0_i32 = arith.constant 0 : i32
    %c0_i32_0 = arith.constant 0 : i32
    return %c0_i32, %arg2 : i32, i32
  }
  func.func @transform_4(%arg0: i32, %arg1: i32, %arg2: i32) -> (i32, i32, i32) {
    %c0_i32 = arith.constant 0 : i32
    return %arg0, %arg1, %arg2 : i32, i32, i32
  }
}

</mosaic_0001>

<llo_original>
// kernel: tile.10
$region0: #{tile.10}
  #allocation2 [shape = 's32[1]{0}', space=sflag, size = 0x4, scoped, tag = 'scoped memory for tile.10']
  %s0 = inlined_call_operand.hbm [shape: f32[128], index: 0, kind: input, shape index: {}]
  %s1 = inlined_call_operand.vmem [shape: f32[16,128], index: 1, kind: output, shape index: {}]
  $region1: #{tile.10} parent=0
    #allocation0 [shape = 'u8[512]{0}', space=vmem, size = 0x400, scoped, tag = 'operand span for operand 0']
    #allocation1 [shape = 's32[1]{0}', space=sflag, size = 0x4, scoped, tag = 'scoped memory for tile.10']
    %2 = vsyncpa [#allocation1], 0
    // Predicated region
    $region2: #{tile.10} parent=1 // pred_check
      _
    $region3: #{tile.10} parent=1 // pred_check_branch
      %4 = sbr.rel (0) target = $region5
    $region4: #{tile.10} parent=1 // pred_region
      %s6 = ssub.s32 16, 16
      %7 = vsyncadd [#allocation1], %s6
      %s9 = sshll.u32 [#allocation0], 4
      %s10 = int_to_ptr.vmem [resolvable:$true] %s9
      %12 = dma.hbm_to_vmem [thread:$0]  %s0, 16, %s10, [#allocation1]
    $region5: #{tile.10} parent=1 // pred_fallthru
      _
    // Predicated region
    $region6: #{tile.10} parent=1 // pred_check
      _
    $region7: #{tile.10} parent=1 // pred_check_branch
      %14 = sbr.rel (0) target = $region9
    $region8: #{tile.10} parent=1 // pred_region
      %15 = dma.done [#allocation1], 16
    $region9: #{tile.10} parent=1 // pred_fallthru
      _
    %v16 = vld [vmem:[#allocation0] ss:$0 sm:$0xff]
    %17 = vst [vmem:[%s1] sm:$0xff] %v16
    %s18 = scalar_lea.vmem %s1, 8
    %19 = vst [vmem:[%s18] sm:$0xff] %v16
    %20 = vsyncpa [#allocation1], 1

// kernel: squeeze.1
$region0: #{squeeze.1}
  %s0 = inlined_call_operand.vmem [shape: bf16[1,2,2048], index: 0, kind: input, shape index: {}]
  %s1 = inlined_call_operand.vmem [shape: bf16[2,4,4,128], index: 1, kind: output, shape index: {}]
  $region1: #{squeeze.1} parent=0
    #allocation0 [shape = 'u8[32768]{0}', space=vmem, size = 0x8000, scoped, tag = 'scoped mem for output reshape']
    #allocation1 [shape = 'u8[65536]{0}', space=vmem, size = 0x10000, scoped, tag = 'scoped mem for input reshape']
    %s3 = smul.u32 1, 2
    %s4 = sshllo.u32 0, %s3
    %s5 = smul.addr 1, 15
    %s6 = scalar_lea.vmem %s0, %s5
    %s7 = sshrl.u32 %s4, 1
    %s8 = sor.u32 %s4, %s7
    %s9 = sand.u32 %s8, 85
    %s10 = sshrl.u32 %s9, 1
    %s11 = sor.u32 %s9, %s10
    %s12 = sand.u32 51, %s11
    %s13 = sshrl.u32 %s12, 2
    %s14 = sor.u32 %s12, %s13
    %s15 = sand.u32 15, %s14
    %v16 = vld [vmem:[%s6] sm:%s15]
    %v17 = vunpack.c.l.bf16 %v16
    %v18 = vunpack.c.h.bf16 %v16
    %s19 = scalar_lea.vmem [#allocation1], 120
    %20 = vst [vmem:[%s19] sm:%s4] %v17
    %s21 = smul.addr 1, 14
    %s22 = scalar_lea.vmem %s0, %s21
    %s23 = sshrl.u32 %s4, 1
    %s24 = sor.u32 %s4, %s23
    %s25 = sand.u32 %s24, 85
    %s26 = sshrl.u32 %s25, 1
    %s27 = sor.u32 %s25, %s26
    %s28 = sand.u32 51, %s27
    %s29 = sshrl.u32 %s28, 2
    %s30 = sor.u32 %s28, %s29
    %s31 = sand.u32 15, %s30
    %v32 = vld [vmem:[%s22] sm:%s31]
    %v33 = vunpack.c.l.bf16 %v32
    %v34 = vunpack.c.h.bf16 %v32
    %s35 = scalar_lea.vmem [#allocation1], 112
    %36 = vst [vmem:[%s35] sm:%s4] %v33
    %s37 = smul.addr 1, 13
    %s38 = scalar_lea.vmem %s0, %s37
    %s39 = sshrl.u32 %s4, 1
    %s40 = sor.u32 %s4, %s39
    %s41 = sand.u32 %s40, 85
    %s42 = sshrl.u32 %s41, 1
    %s43 = sor.u32 %s41, %s42
    %s44 = sand.u32 51, %s43
    %s45 = sshrl.u32 %s44, 2
    %s46 = sor.u32 %s44, %s45
    %s47 = sand.u32 15, %s46
    %v48 = vld [vmem:[%s38] sm:%s47]
    %v49 = vunpack.c.l.bf16 %v48
    %v50 = vunpack.c.h.bf16 %v48
    %s51 = scalar_lea.vmem [#allocation1], 104
    %52 = vst [vmem:[%s51] sm:%s4] %v49
    %s53 = smul.addr 1, 12
    %s54 = scalar_lea.vmem %s0, %s53
    %s55 = sshrl.u32 %s4, 1
    %s56 = sor.u32 %s4, %s55
    %s57 = sand.u32 %s56, 85
    %s58 = sshrl.u32 %s57, 1
    %s59 = sor.u32 %s57, %s58
    %s60 = sand.u32 51, %s59
    %s61 = sshrl.u32 %s60, 2
    %s62 = sor.u32 %s60, %s61
    %s63 = sand.u32 15, %s62
    %v64 = vld [vmem:[%s54] sm:%s63]
    %v65 = vunpack.c.l.bf16 %v64
    %v66 = vunpack.c.h.bf16 %v64
    %s67 = scalar_lea.vmem [#allocation1], 96
    %68 = vst [vmem:[%s67] sm:%s4] %v65
    %s69 = smul.addr 1, 11
    %s70 = scalar_lea.vmem %s0, %s69
    %s71 = sshrl.u32 %s4, 1
    %s72 = sor.u32 %s4, %s71
    %s73 = sand.u32 %s72, 85
    %s74 = sshrl.u32 %s73, 1
    %s75 = sor.u32 %s73, %s74
    %s76 = sand.u32 51, %s75
    %s77 = sshrl.u32 %s76, 2
    %s78 = sor.u32 %s76, %s77
    %s79 = sand.u32 15, %s78
    %v80 = vld [vmem:[%s70] sm:%s79]
    %v81 = vunpack.c.l.bf16 %v80
    %v82 = vunpack.c.h.bf16 %v80
    %s83 = scalar_lea.vmem [#allocation1], 88
    %84 = vst [vmem:[%s83] sm:%s4] %v81
    %s85 = smul.addr 1, 10
    %s86 = scalar_lea.vmem %s0, %s85
    %s87 = sshrl.u32 %s4, 1
    %s88 = sor.u32 %s4, %s87
    %s89 = sand.u32 %s88, 85
    %s90 = sshrl.u32 %s89, 1
    %s91 = sor.u32 %s89, %s90
    %s92 = sand.u32 51, %s91
    %s93 = sshrl.u32 %s92, 2
    %s94 = sor.u32 %s92, %s93
    %s95 = sand.u32 15, %s94
    %v96 = vld [vmem:[%s86] sm:%s95]
    %v97 = vunpack.c.l.bf16 %v96
    %v98 = vunpack.c.h.bf16 %v96
    %s99 = scalar_lea.vmem [#allocation1], 80
    %100 = vst [vmem:[%s99] sm:%s4] %v97
    %s101 = smul.addr 1, 9
    %s102 = scalar_lea.vmem %s0, %s101
    %s103 = sshrl.u32 %s4, 1
    %s104 = sor.u32 %s4, %s103
    %s105 = sand.u32 %s104, 85
    %s106 = sshrl.u32 %s105, 1
    %s107 = sor.u32 %s105, %s106
    %s108 = sand.u32 51, %s107
    %s109 = sshrl.u32 %s108, 2
    %s110 = sor.u32 %s108, %s109
    %s111 = sand.u32 15, %s110
    %v112 = vld [vmem:[%s102] sm:%s111]
    %v113 = vunpack.c.l.bf16 %v112
    %v114 = vunpack.c.h.bf16 %v112
    %s115 = scalar_lea.vmem [#allocation1], 72
    %116 = vst [vmem:[%s115] sm:%s4] %v113
    %s117 = smul.addr 1, 8
    %s118 = scalar_lea.vmem %s0, %s117
    %s119 = sshrl.u32 %s4, 1
    %s120 = sor.u32 %s4, %s119
    %s121 = sand.u32 %s120, 85
    %s122 = sshrl.u32 %s121, 1
    %s123 = sor.u32 %s121, %s122
    %s124 = sand.u32 51, %s123
    %s125 = sshrl.u32 %s124, 2
    %s126 = sor.u32 %s124, %s125
    %s127 = sand.u32 15, %s126
    %v128 = vld [vmem:[%s118] sm:%s127]
    %v129 = vunpack.c.l.bf16 %v128
    %v130 = vunpack.c.h.bf16 %v128
    %s131 = scalar_lea.vmem [#allocation1], 64
    %132 = vst [vmem:[%s131] sm:%s4] %v129
    %s133 = smul.addr 1, 7
    %s134 = scalar_lea.vmem %s0, %s133
    %s135 = sshrl.u32 %s4, 1
    %s136 = sor.u32 %s4, %s135
    %s137 = sand.u32 %s136, 85
    %s138 = sshrl.u32 %s137, 1
    %s139 = sor.u32 %s137, %s138
    %s140 = sand.u32 51, %s139
    %s141 = sshrl.u32 %s140, 2
    %s142 = sor.u32 %s140, %s141
    %s143 = sand.u32 15, %s142
    %v144 = vld [vmem:[%s134] sm:%s143]
    %v145 = vunpack.c.l.bf16 %v144
    %v146 = vunpack.c.h.bf16 %v144
    %s147 = scalar_lea.vmem [#allocation1], 56
    %148 = vst [vmem:[%s147] sm:%s4] %v145
    %s149 = smul.addr 1, 6
    %s150 = scalar_lea.vmem %s0, %s149
    %s151 = sshrl.u32 %s4, 1
    %s152 = sor.u32 %s4, %s151
    %s153 = sand.u32 %s152, 85
    %s154 = sshrl.u32 %s153, 1
    %s155 = sor.u32 %s153, %s154
    %s156 = sand.u32 51, %s155
    %s157 = sshrl.u32 %s156, 2
    %s158 = sor.u32 %s156, %s157
    %s159 = sand.u32 15, %s158
    %v160 = vld [vmem:[%s150] sm:%s159]
    %v161 = vunpack.c.l.bf16 %v160
    %v162 = vunpack.c.h.bf16 %v160
    %s163 = scalar_lea.vmem [#allocation1], 48
    %164 = vst [vmem:[%s163] sm:%s4] %v161
    %s165 = smul.addr 1, 5
    %s166 = scalar_lea.vmem %s0, %s165
    %s167 = sshrl.u32 %s4, 1
    %s168 = sor.u32 %s4, %s167
    %s169 = sand.u32 %s168, 85
    %s170 = sshrl.u32 %s169, 1
    %s171 = sor.u32 %s169, %s170
    %s172 = sand.u32 51, %s171
    %s173 = sshrl.u32 %s172, 2
    %s174 = sor.u32 %s172, %s173
    %s175 = sand.u32 15, %s174
    %v176 = vld [vmem:[%s166] sm:%s175]
    %v177 = vunpack.c.l.bf16 %v176
    %v178 = vunpack.c.h.bf16 %v176
    %s179 = scalar_lea.vmem [#allocation1], 40
    %180 = vst [vmem:[%s179] sm:%s4] %v177
    %s181 = smul.addr 1, 4
    %s182 = scalar_lea.vmem %s0, %s181
    %s183 = sshrl.u32 %s4, 1
    %s184 = sor.u32 %s4, %s183
    %s185 = sand.u32 %s184, 85
    %s186 = sshrl.u32 %s185, 1
    %s187 = sor.u32 %s185, %s186
    %s188 = sand.u32 51, %s187
    %s189 = sshrl.u32 %s188, 2
    %s190 = sor.u32 %s188, %s189
    %s191 = sand.u32 15, %s190
    %v192 = vld [vmem:[%s182] sm:%s191]
    %v193 = vunpack.c.l.bf16 %v192
    %v194 = vunpack.c.h.bf16 %v192
    %s195 = scalar_lea.vmem [#allocation1], 32
    %196 = vst [vmem:[%s195] sm:%s4] %v193
    %s197 = smul.addr 1, 3
    %s198 = scalar_lea.vmem %s0, %s197
    %s199 = sshrl.u32 %s4, 1
    %s200 = sor.u32 %s4, %s199
    %s201 = sand.u32 %s200, 85
    %s202 = sshrl.u32 %s201, 1
    %s203 = sor.u32 %s201, %s202
    %s204 = sand.u32 51, %s203
    %s205 = sshrl.u32 %s204, 2
    %s206 = sor.u32 %s204, %s205
    %s207 = sand.u32 15, %s206
    %v208 = vld [vmem:[%s198] sm:%s207]
    %v209 = vunpack.c.l.bf16 %v208
    %v210 = vunpack.c.h.bf16 %v208
    %s211 = scalar_lea.vmem [#allocation1], 24
    %212 = vst [vmem:[%s211] sm:%s4] %v209
    %s213 = smul.addr 1, 2
    %s214 = scalar_lea.vmem %s0, %s213
    %s215 = sshrl.u32 %s4, 1
    %s216 = sor.u32 %s4, %s215
    %s217 = sand.u32 %s216, 85
    %s218 = sshrl.u32 %s217, 1
    %s219 = sor.u32 %s217, %s218
    %s220 = sand.u32 51, %s219
    %s221 = sshrl.u32 %s220, 2
    %s222 = sor.u32 %s220, %s221
    %s223 = sand.u32 15, %s222
    %v224 = vld [vmem:[%s214] sm:%s223]
    %v225 = vunpack.c.l.bf16 %v224
    %v226 = vunpack.c.h.bf16 %v224
    %s227 = scalar_lea.vmem [#allocation1], 16
    %228 = vst [vmem:[%s227] sm:%s4] %v225
    %s229 = scalar_lea.vmem %s0, 1
    %s230 = sshrl.u32 %s4, 1
    %s231 = sor.u32 %s4, %s230
    %s232 = sand.u32 %s231, 85
    %s233 = sshrl.u32 %s232, 1
    %s234 = sor.u32 %s232, %s233
    %s235 = sand.u32 51, %s234
    %s236 = sshrl.u32 %s235, 2
    %s237 = sor.u32 %s235, %s236
    %s238 = sand.u32 15, %s237
    %v239 = vld [vmem:[%s229] sm:%s238]
    %v240 = vunpack.c.l.bf16 %v239
    %v241 = vunpack.c.h.bf16 %v239
    %s242 = scalar_lea.vmem [#allocation1], 8
    %243 = vst [vmem:[%s242] sm:%s4] %v240
    %s244 = sshrl.u32 %s4, 1
    %s245 = sor.u32 %s4, %s244
    %s246 = sand.u32 %s245, 85
    %s247 = sshrl.u32 %s246, 1
    %s248 = sor.u32 %s246, %s247
    %s249 = sand.u32 51, %s248
    %s250 = sshrl.u32 %s249, 2
    %s251 = sor.u32 %s249, %s250
    %s252 = sand.u32 15, %s251
    %v253 = vld [vmem:[%s0] sm:%s252]
    %v254 = vunpack.c.l.bf16 %v253
    %v255 = vunpack.c.h.bf16 %v253
    %256 = vst [vmem:[#allocation1] sm:%s4] %v254
    %v257 = vld [vmem:[#allocation1] sm:$0x3]
    %258 = vst [vmem:[#allocation0] sm:$0x1] %v257
    %s259 = scalar_lea.vmem [#allocation0], 31
    %260 = vst [vmem:[%s259] sm:$0x2] %v257
    %s261 = scalar_lea.vmem [#allocation1], 8
    %v262 = vld [vmem:[%s261] sm:$0x3]
    %s263 = scalar_lea.vmem [#allocation0], 1
    %264 = vst [vmem:[%s263] sm:$0x1] %v262
    %s265 = scalar_lea.vmem [#allocation0], 32
    %266 = vst [vmem:[%s265] sm:$0x2] %v262
    %s267 = scalar_lea.vmem [#allocation1], 16
    %v268 = vld [vmem:[%s267] sm:$0x3]
    %s269 = scalar_lea.vmem [#allocation0], 2
    %270 = vst [vmem:[%s269] sm:$0x1] %v268
    %s271 = scalar_lea.vmem [#allocation0], 33
    %272 = vst [vmem:[%s271] sm:$0x2] %v268
    %s273 = scalar_lea.vmem [#allocation1], 24
    %v274 = vld [vmem:[%s273] sm:$0x3]
    %s275 = scalar_lea.vmem [#allocation0], 3
    %276 = vst [vmem:[%s275] sm:$0x1] %v274
    %s277 = scalar_lea.vmem [#allocation0], 34
    %278 = vst [vmem:[%s277] sm:$0x2] %v274
    %s279 = scalar_lea.vmem [#allocation1], 32
    %v280 = vld [vmem:[%s279] sm:$0x3]
    %s281 = scalar_lea.vmem [#allocation0], 8
    %282 = vst [vmem:[%s281] sm:$0x1] %v280
    %s283 = scalar_lea.vmem [#allocation0], 39
    %284 = vst [vmem:[%s283] sm:$0x2] %v280
    %s285 = scalar_lea.vmem [#allocation1], 40
    %v286 = vld [vmem:[%s285] sm:$0x3]
    %s287 = scalar_lea.vmem [#allocation0], 9
    %288 = vst [vmem:[%s287] sm:$0x1] %v286
    %s289 = scalar_lea.vmem [#allocation0], 40
    %290 = vst [vmem:[%s289] sm:$0x2] %v286
    %s291 = scalar_lea.vmem [#allocation1], 48
    %v292 = vld [vmem:[%s291] sm:$0x3]
    %s293 = scalar_lea.vmem [#allocation0], 10
    %294 = vst [vmem:[%s293] sm:$0x1] %v292
    %s295 = scalar_lea.vmem [#allocation0], 41
    %296 = vst [vmem:[%s295] sm:$0x2] %v292
    %s297 = scalar_lea.vmem [#allocation1], 56
    %v298 = vld [vmem:[%s297] sm:$0x3]
    %s299 = scalar_lea.vmem [#allocation0], 11
    %300 = vst [vmem:[%s299] sm:$0x1] %v298
    %s301 = scalar_lea.vmem [#allocation0], 42
    %302 = vst [vmem:[%s301] sm:$0x2] %v298
    %s303 = scalar_lea.vmem [#allocation1], 64
    %v304 = vld [vmem:[%s303] sm:$0x3]
    %s305 = scalar_lea.vmem [#allocation0], 16
    %306 = vst [vmem:[%s305] sm:$0x1] %v304
    %s307 = scalar_lea.vmem [#allocation0], 47
    %308 = vst [vmem:[%s307] sm:$0x2] %v304
    %s309 = scalar_lea.vmem [#allocation1], 72
    %v310 = vld [vmem:[%s309] sm:$0x3]
    %s311 = scalar_lea.vmem [#allocation0], 17
    %312 = vst [vmem:[%s311] sm:$0x1] %v310
    %s313 = scalar_lea.vmem [#allocation0], 48
    %314 = vst [vmem:[%s313] sm:$0x2] %v310
    %s315 = scalar_lea.vmem [#allocation1], 80
    %v316 = vld [vmem:[%s315] sm:$0x3]
    %s317 = scalar_lea.vmem [#allocation0], 18
    %318 = vst [vmem:[%s317] sm:$0x1] %v316
    %s319 = scalar_lea.vmem [#allocation0], 49
    %320 = vst [vmem:[%s319] sm:$0x2] %v316
    %s321 = scalar_lea.vmem [#allocation1], 88
    %v322 = vld [vmem:[%s321] sm:$0x3]
    %s323 = scalar_lea.vmem [#allocation0], 19
    %324 = vst [vmem:[%s323] sm:$0x1] %v322
    %s325 = scalar_lea.vmem [#allocation0], 50
    %326 = vst [vmem:[%s325] sm:$0x2] %v322
    %s327 = scalar_lea.vmem [#allocation1], 96
    %v328 = vld [vmem:[%s327] sm:$0x3]
    %s329 = scalar_lea.vmem [#allocation0], 24
    %330 = vst [vmem:[%s329] sm:$0x1] %v328
    %s331 = scalar_lea.vmem [#allocation0], 55
    %332 = vst [vmem:[%s331] sm:$0x2] %v328
    %s333 = scalar_lea.vmem [#allocation1], 104
    %v334 = vld [vmem:[%s333] sm:$0x3]
    %s335 = scalar_lea.vmem [#allocation0], 25
    %336 = vst [vmem:[%s335] sm:$0x1] %v334
    %s337 = scalar_lea.vmem [#allocation0], 56
    %338 = vst [vmem:[%s337] sm:$0x2] %v334
    %s339 = scalar_lea.vmem [#allocation1], 112
    %v340 = vld [vmem:[%s339] sm:$0x3]
    %s341 = scalar_lea.vmem [#allocation0], 26
    %342 = vst [vmem:[%s341] sm:$0x1] %v340
    %s343 = scalar_lea.vmem [#allocation0], 57
    %344 = vst [vmem:[%s343] sm:$0x2] %v340
    %s345 = scalar_lea.vmem [#allocation1], 120
    %v346 = vld [vmem:[%s345] sm:$0x3]
    %s347 = scalar_lea.vmem [#allocation0], 27
    %348 = vst [vmem:[%s347] sm:$0x1] %v346
    %s349 = scalar_lea.vmem [#allocation0], 58
    %350 = vst [vmem:[%s349] sm:$0x2] %v346
    %s352 = smul.u32 2, 2
    %s353 = sshllo.u32 0, %s352
    %s354 = sshrl.u32 %s352, 1
    %v355 = vld [vmem:[#allocation0] sm:%s353]
    %v356 = vpack.c.bf16 0.0, %v355
    %s357 = sshllo.u32 0, %s354
    %358 = vst [vmem:[%s1] sm:%s357] %v356
    %s359 = scalar_lea.vmem [#allocation0], 8
    %v360 = vld [vmem:[%s359] sm:%s353]
    %v361 = vpack.c.bf16 0.0, %v360
    %s362 = sshllo.u32 0, %s354
    %s363 = scalar_lea.vmem %s1, 2
    %364 = vst [vmem:[%s363] sm:%s362] %v361
    %s365 = scalar_lea.vmem [#allocation0], 16
    %v366 = vld [vmem:[%s365] sm:%s353]
    %v367 = vpack.c.bf16 0.0, %v366
    %s368 = sshllo.u32 0, %s354
    %s369 = smul.addr 2, 2
    %s370 = scalar_lea.vmem %s1, %s369
    %371 = vst [vmem:[%s370] sm:%s368] %v367
    %s372 = scalar_lea.vmem [#allocation0], 24
    %v373 = vld [vmem:[%s372] sm:%s353]
    %v374 = vpack.c.bf16 0.0, %v373
    %s375 = sshllo.u32 0, %s354
    %s376 = smul.addr 2, 3
    %s377 = scalar_lea.vmem %s1, %s376
    %378 = vst [vmem:[%s377] sm:%s375] %v374
    %s379 = scalar_lea.vmem [#allocation0], 32
    %v380 = vld [vmem:[%s379] sm:%s353]
    %v381 = vpack.c.bf16 0.0, %v380
    %s382 = sshllo.u32 0, %s354
    %s383 = smul.addr 2, 4
    %s384 = scalar_lea.vmem %s1, %s383
    %385 = vst [vmem:[%s384] sm:%s382] %v381
    %s386 = scalar_lea.vmem [#allocation0], 40
    %v387 = vld [vmem:[%s386] sm:%s353]
    %v388 = vpack.c.bf16 0.0, %v387
    %s389 = sshllo.u32 0, %s354
    %s390 = smul.addr 2, 5
    %s391 = scalar_lea.vmem %s1, %s390
    %392 = vst [vmem:[%s391] sm:%s389] %v388
    %s393 = scalar_lea.vmem [#allocation0], 48
    %v394 = vld [vmem:[%s393] sm:%s353]
    %v395 = vpack.c.bf16 0.0, %v394
    %s396 = sshllo.u32 0, %s354
    %s397 = smul.addr 2, 6
    %s398 = scalar_lea.vmem %s1, %s397
    %399 = vst [vmem:[%s398] sm:%s396] %v395
    %s400 = scalar_lea.vmem [#allocation0], 56
    %v401 = vld [vmem:[%s400] sm:%s353]
    %v402 = vpack.c.bf16 0.0, %v401
    %s403 = sshllo.u32 0, %s354
    %s404 = smul.addr 2, 7
    %s405 = scalar_lea.vmem %s1, %s404
    %406 = vst [vmem:[%s405] sm:%s403] %v402

// kernel: _lambda_.6
$region0: #{_lambda_.6}
  #allocation0 [shape = 'u32[]', space=smem, size = 0x4, offset = 0x4, fixed_abs, tag = 'smem constant byte address 0x4 - core index']
  #allocation1 [shape = 'u32[144,128]{1,0:T(1,128)}', space=vmem, size = 0x12000, scoped, tag = 'internal scratch']
  %s0 = inlined_call_operand.vmem [shape: bf16[4,32,512], index: 0, kind: input, shape index: {}]
  %s1 = inlined_call_operand.hbm [shape: bf16[4,512,128], index: 1, kind: input, shape index: {}]
  %s2 = inlined_call_operand.hbm [shape: f32[1,128], index: 2, kind: input, shape index: {}]
  %s3 = inlined_call_operand.hbm [shape: f32[1,128], index: 3, kind: input, shape index: {}]
  %s4 = inlined_call_operand.vmem [shape: bf16[4,32,128], index: 4, kind: output, shape index: {}]
  %s5 = sld [smem:[#allocation0]]
  $region61: #{_lambda_.6} parent=0
    _
  %s7 = ssub.s32 1, %s5
  %s8 = scalar_select 0, %s7, %s5
  $region1: #{_lambda_.6} parent=0
    #allocation2 [shape = 'u8[262144]{0}', space=vmem, size = 0x40000, scoped, tag = 'input window, operand 1']
    #allocation3 [shape = 's32[2]{0}', space=sflag, size = 0x8, scoped, tag = 'scoped memory for _lambda_.6']
    #allocation4 [shape = 'u8[512]{0}', space=vmem, size = 0x400, scoped, tag = 'input window, operand 2, single buffered']
    #allocation5 [shape = 's32[1]{0}', space=sflag, size = 0x4, scoped, tag = 'scoped memory for _lambda_.6']
    #allocation6 [shape = 'u8[512]{0}', space=vmem, size = 0x400, scoped, tag = 'input window, operand 3, single buffered']
    %9 = vsyncpa [#allocation3], 0
    %s10 = scalar_lea.sflag [#allocation3], 1
    %11 = vsyncpa %s10, 0
    %12 = vsyncpa [#allocation5], 0
    loop: start=0, step=1, limit=6
    $region2: #{_lambda_.6} parent=1 // loop_pre_header
      _
    $region3: #{_lambda_.6} parent=1 // loop_header
      %s14 = sphi 0, %s18
      %p15 = scmp.ge.s32.totalorder %s14, 6
      %s21 = sphi 0, %s40
      %s22 = sphi 0, %s36
      %s23 = sphi 0, %s32
      %s24 = sphi 0, %s21
      %s25 = sphi 0, %s22
      %s26 = sphi 0, %s23
      %s27 = sphi 0, %s24
      %s28 = sphi 0, %s25
      %s29 = sphi 0, %s26
      %s45 = sphi 0, %s47
      %s48 = sphi 0, %s45
      %s49 = sphi 0, %s48
      %s65 = sphi 0, %s49
      %s73 = sphi 0, %s75
      %s76 = sphi 0, %s73
      %s77 = sphi 0, %s76
      %s93 = sphi 0, %s77
      %s99 = sphi 0, %s101
      %s102 = sphi 0, %s99
      %s103 = sphi 0, %s102
      %s119 = sphi 0, %s103
      %s125 = sphi 0, %s127
      %s128 = sphi 0, %s125
      %s129 = sphi 0, %s128
      %s145 = sphi 0, %s129
      %s155 = sphi 0, %s157
      %s158 = sphi 0, %s155
      %s159 = sphi 0, %s158
      %s175 = sphi 0, %s159
    $region4: #{_lambda_.6} parent=1 // loop_header_branch
      %17 = sbr.rel (%p15) target = $region8
    $region5: #{_lambda_.6} parent=1 // loop_body
      %s19 = ssub.s32 %s14, 1
      %s20 = ssub.s32 %s14, 2
      %s30 = sadd.s32 1, %s23
      %p31 = scmp.ge.s32.totalorder %s30, 1
      %s32 = scalar_select %p31, 0, %s30
      %s33 = sadd.s32 1, %s22
      %s34 = scalar_select %p31, %s33, %s22
      %p35 = scmp.ge.s32.totalorder %s34, 1
      %s36 = scalar_select %p35, 0, %s34
      %s37 = sadd.s32 1, %s21
      %s38 = scalar_select %p35, %s37, %s21
      %p39 = scmp.ge.s32.totalorder %s38, 4
      %s40 = scalar_select %p39, 0, %s38
      %s41 = ssub.s32 %s21, %s40
      %s42 = ssub.s32 %s22, %s36
      %s43 = sor.u32 %s41, %s42
      %p44 = scmp.eq.s32.totalorder %s43, 0
      %s46 = sadd.s32 %s45, 1
      %s47 = scalar_select %p44, %s45, %s46
      %p50 = pneg %p44
      %p51 = scmp.eq.s32.totalorder %s14, 3
      %p52 = por %p50, %p51
      %p53 = scmp.ne.s32.totalorder %s45, %s48
      %p54 = scmp.eq.s32.totalorder %s14, 0
      %p55 = por %p53, %p54
      %p56 = scmp.ne.s32.totalorder %s45, %s48
      %p57 = scmp.eq.s32.totalorder %s19, 3
      %p58 = por %p56, %p57
      %p59 = scmp.ne.s32.totalorder %s48, %s49
      %p60 = scmp.eq.s32.totalorder %s19, 0
      %p61 = por %p59, %p60
      %p62 = scmp.ne.s32.totalorder %s48, %s49
      %p63 = scmp.eq.s32.totalorder %s20, 3
      %p64 = por %p62, %p63
      %p66 = scmp.ne.s32.totalorder %s49, %s65
      %p67 = scmp.eq.s32.totalorder %s20, 0
      %p68 = por %p66, %p67
      %s69 = ssub.s32 %s21, %s40
      %s70 = ssub.s32 %s23, %s32
      %s71 = sor.u32 %s69, %s70
      %p72 = scmp.eq.s32.totalorder %s71, 0
      %s74 = sadd.s32 %s73, 1
      %s75 = scalar_select %p72, %s73, %s74
      %p78 = pneg %p72
      %p79 = scmp.eq.s32.totalorder %s14, 3
      %p80 = por %p78, %p79
      %p81 = scmp.ne.s32.totalorder %s73, %s76
      %p82 = scmp.eq.s32.totalorder %s14, 0
      %p83 = por %p81, %p82
      %p84 = scmp.ne.s32.totalorder %s73, %s76
      %p85 = scmp.eq.s32.totalorder %s19, 3
      %p86 = por %p84, %p85
      %p87 = scmp.ne.s32.totalorder %s76, %s77
      %p88 = scmp.eq.s32.totalorder %s19, 0
      %p89 = por %p87, %p88
      %p90 = scmp.ne.s32.totalorder %s76, %s77
      %p91 = scmp.eq.s32.totalorder %s20, 3
      %p92 = por %p90, %p91
      %p94 = scmp.ne.s32.totalorder %s77, %s93
      %p95 = scmp.eq.s32.totalorder %s20, 0
      %p96 = por %p94, %p95
      %s97 = ssub.s32 %s23, %s32
      %p98 = scmp.eq.s32.totalorder %s97, 0
      %s100 = sadd.s32 %s99, 1
      %s101 = scalar_select %p98, %s99, %s100
      %p104 = pneg %p98
      %p105 = scmp.eq.s32.totalorder %s14, 3
      %p106 = por %p104, %p105
      %p107 = scmp.ne.s32.totalorder %s99, %s102
      %p108 = scmp.eq.s32.totalorder %s14, 0
      %p109 = por %p107, %p108
      %p110 = scmp.ne.s32.totalorder %s99, %s102
      %p111 = scmp.eq.s32.totalorder %s19, 3
      %p112 = por %p110, %p111
      %p113 = scmp.ne.s32.totalorder %s102, %s103
      %p114 = scmp.eq.s32.totalorder %s19, 0
      %p115 = por %p113, %p114
      %p116 = scmp.ne.s32.totalorder %s102, %s103
      %p117 = scmp.eq.s32.totalorder %s20, 3
      %p118 = por %p116, %p117
      %p120 = scmp.ne.s32.totalorder %s103, %s119
      %p121 = scmp.eq.s32.totalorder %s20, 0
      %p122 = por %p120, %p121
      %s123 = ssub.s32 %s23, %s32
      %p124 = scmp.eq.s32.totalorder %s123, 0
      %s126 = sadd.s32 %s125, 1
      %s127 = scalar_select %p124, %s125, %s126
      %p130 = pneg %p124
      %p131 = scmp.eq.s32.totalorder %s14, 3
      %p132 = por %p130, %p131
      %p133 = scmp.ne.s32.totalorder %s125, %s128
      %p134 = scmp.eq.s32.totalorder %s14, 0
      %p135 = por %p133, %p134
      %p136 = scmp.ne.s32.totalorder %s125, %s128
      %p137 = scmp.eq.s32.totalorder %s19, 3
      %p138 = por %p136, %p137
      %p139 = scmp.ne.s32.totalorder %s128, %s129
      %p140 = scmp.eq.s32.totalorder %s19, 0
      %p141 = por %p139, %p140
      %p142 = scmp.ne.s32.totalorder %s128, %s129
      %p143 = scmp.eq.s32.totalorder %s20, 3
      %p144 = por %p142, %p143
      %p146 = scmp.ne.s32.totalorder %s129, %s145
      %p147 = scmp.eq.s32.totalorder %s20, 0
      %p148 = por %p146, %p147
      %s149 = ssub.s32 %s21, %s40
      %s150 = ssub.s32 %s22, %s36
      %s151 = sor.u32 %s149, %s150
      %s152 = ssub.s32 %s23, %s32
      %s153 = sor.u32 %s151, %s152
      %p154 = scmp.eq.s32.totalorder %s153, 0
      %s156 = sadd.s32 %s155, 1
      %s157 = scalar_select %p154, %s155, %s156
      %p160 = pneg %p154
      %p161 = scmp.eq.s32.totalorder %s14, 3
      %p162 = por %p160, %p161
      %p163 = scmp.ne.s32.totalorder %s155, %s158
      %p164 = scmp.eq.s32.totalorder %s14, 0
      %p165 = por %p163, %p164
      %p166 = scmp.ne.s32.totalorder %s155, %s158
      %p167 = scmp.eq.s32.totalorder %s19, 3
      %p168 = por %p166, %p167
      %p169 = scmp.ne.s32.totalorder %s158, %s159
      %p170 = scmp.eq.s32.totalorder %s19, 0
      %p171 = por %p169, %p170
      %p172 = scmp.ne.s32.totalorder %s158, %s159
      %p173 = scmp.eq.s32.totalorder %s20, 3
      %p174 = por %p172, %p173
      %p176 = scmp.ne.s32.totalorder %s159, %s175
      %p177 = scmp.eq.s32.totalorder %s20, 0
      %p178 = por %p176, %p177
      %p179 = scmp.le.s32.totalorder 1, %s14
      %p180 = scmp.lt.s32.totalorder %s14, 5
      %p181 = pnand %p179, %p180
      %p182 = pneg %p181
      // Predicated region
      $region9: #{_lambda_.6} parent=5 // pred_check
        _
      $region10: #{_lambda_.6} parent=5 // pred_check_branch
        %184 = sbr.rel (%p181) target = $region12
      $region11: #{_lambda_.6} parent=5 // pred_region
        %s185 = ssub.s32 %s14, 1
        // Predicated region
        $region13: #{_lambda_.6} parent=11 // pred_check
          %p186 = pneg %p115
        $region14: #{_lambda_.6} parent=11 // pred_check_branch
          %188 = sbr.rel (%p186) target = $region16
        $region15: #{_lambda_.6} parent=11 // pred_region
          %s190 = ssub.s32 16, 16
          %191 = vsyncadd [#allocation5], %s190
          %s192 = smul.addr %s26, 16
          %s193 = scalar_lea.hbm %s2, %s192
          %s195 = sshll.u32 [#allocation4], 4
          %s196 = int_to_ptr.vmem [resolvable:$true] %s195
          %198 = dma.hbm_to_vmem [thread:$0]  %s193, 16, %s196, [#allocation5]
        $region16: #{_lambda_.6} parent=11 // pred_fallthru
          _
        // Predicated region
        $region17: #{_lambda_.6} parent=11 // pred_check
          %p199 = pneg %p141
        $region18: #{_lambda_.6} parent=11 // pred_check_branch
          %201 = sbr.rel (%p199) target = $region20
        $region19: #{_lambda_.6} parent=11 // pred_region
          %s203 = ssub.s32 16, 16
          %204 = vsyncadd [#allocation5], %s203
          %s205 = smul.addr %s26, 16
          %s206 = scalar_lea.hbm %s3, %s205
          %s208 = sshll.u32 [#allocation6], 4
          %s209 = int_to_ptr.vmem [resolvable:$true] %s208
          %211 = dma.hbm_to_vmem [thread:$0]  %s206, 16, %s209, [#allocation5]
        $region20: #{_lambda_.6} parent=11 // pred_fallthru
          _
      $region12: #{_lambda_.6} parent=5 // pred_fallthru
        _
      %p212 = scmp.lt.s32.totalorder %s14, 4
      // Predicated region
      $region21: #{_lambda_.6} parent=5 // pred_check
        %p213 = pneg %p212
      $region22: #{_lambda_.6} parent=5 // pred_check_branch
        %215 = sbr.rel (%p213) target = $region24
      $region23: #{_lambda_.6} parent=5 // pred_region
        // Predicated region
        $region25: #{_lambda_.6} parent=23 // pred_check
          %p216 = pneg %p55
        $region26: #{_lambda_.6} parent=23 // pred_check_branch
          %218 = sbr.rel (%p216) target = $region28
        $region27: #{_lambda_.6} parent=23 // pred_region
          %s219 = smul.u32 4, %s22
          %p220 = scmp.lt.s32.totalorder %s21, 3
          %s221 = scalar_select %p220, %s21, 3
          %p222 = scmp.lt.s32.totalorder %s219, 3
          %s223 = scalar_select %p222, %s219, 3
          %s224 = smul.addr %s223, 4
          %s225 = smul.addr %s221, 16
          %s226 = sadd.s32 %s224, %s225
          %s227 = smul.addr %s226, 4
          %s228 = scalar_lea.vmem %s0, %s227
          %s229 = smul.u32 4, %s22
        $region28: #{_lambda_.6} parent=23 // pred_fallthru
          _
        // Predicated region
        $region29: #{_lambda_.6} parent=23 // pred_check
          %p230 = pneg %p83
        $region30: #{_lambda_.6} parent=23 // pred_check_branch
          %232 = sbr.rel (%p230) target = $region32
        $region31: #{_lambda_.6} parent=23 // pred_region
          %s233 = sand.u32 %s73, 1
          %s234 = scalar_lea.sflag [#allocation3], %s233
          %s235 = sand.u32 %s73, 1
          %s236 = smul.addr %s235, 256
          %s237 = scalar_lea.vmem [#allocation2], %s236
          %s239 = ssub.s32 4096, 4096
          %240 = vsyncadd %s234, %s239
          %s241 = smul.addr %s21, 64
          %s242 = sadd.s32 %s23, %s241
          %s243 = smul.addr %s242, 64
          %s244 = scalar_lea.hbm %s1, %s243
          %s245 = sshll.u32 %s237, 4
          %s246 = int_to_ptr.vmem [resolvable:$true] %s245
          %251 = dma.hbm_to_vmem [thread:$0]  %s244, 4096, %s246, %s234, 64, 64, 4
        $region32: #{_lambda_.6} parent=23 // pred_fallthru
          _
      $region24: #{_lambda_.6} parent=5 // pred_fallthru
        _
      %p252 = scmp.le.s32.totalorder 1, %s14
      %p253 = scmp.lt.s32.totalorder %s14, 5
      %p254 = pnand %p252, %p253
      %p255 = pneg %p254
      // Predicated region
      $region33: #{_lambda_.6} parent=5 // pred_check
        _
      $region34: #{_lambda_.6} parent=5 // pred_check_branch
        %257 = sbr.rel (%p254) target = $region36
      $region35: #{_lambda_.6} parent=5 // pred_region
        %s258 = ssub.s32 %s14, 1
        %s259 = sand.u32 %s76, 1
        %s260 = scalar_lea.sflag [#allocation3], %s259
        %s261 = sand.u32 %s76, 1
        %s262 = smul.addr %s261, 256
        %s263 = scalar_lea.vmem [#allocation2], %s262
        // Predicated region
        $region37: #{_lambda_.6} parent=35 // pred_check
          %p264 = pneg %p89
        $region38: #{_lambda_.6} parent=35 // pred_check_branch
          %266 = sbr.rel (%p264) target = $region40
        $region39: #{_lambda_.6} parent=35 // pred_region
          %267 = dma.done %s260, 4096
        $region40: #{_lambda_.6} parent=35 // pred_fallthru
          _
        // Predicated region
        $region41: #{_lambda_.6} parent=35 // pred_check
          %p268 = pneg %p115
        $region42: #{_lambda_.6} parent=35 // pred_check_branch
          %270 = sbr.rel (%p268) target = $region44
        $region43: #{_lambda_.6} parent=35 // pred_region
          %271 = dma.done [#allocation5], 16
        $region44: #{_lambda_.6} parent=35 // pred_fallthru
          _
        // Predicated region
        $region45: #{_lambda_.6} parent=35 // pred_check
          %p272 = pneg %p141
        $region46: #{_lambda_.6} parent=35 // pred_check_branch
          %274 = sbr.rel (%p272) target = $region48
        $region47: #{_lambda_.6} parent=35 // pred_region
          %275 = dma.done [#allocation5], 16
        $region48: #{_lambda_.6} parent=35 // pred_fallthru
          _
        %s276 = smul.u32 4, %s25
        %p277 = scmp.lt.s32.totalorder %s24, 3
        %s278 = scalar_select %p277, %s24, 3
        %p279 = scmp.lt.s32.totalorder %s276, 3
        %s280 = scalar_select %p279, %s276, 3
        %s281 = smul.addr %s280, 4
        %s282 = smul.addr %s278, 16
        %s283 = sadd.s32 %s281, %s282
        %s284 = smul.addr %s283, 4
        %s285 = scalar_lea.vmem %s0, %s284
        %p286 = pneg %p61
        %p287 = pneg %p58
        %s288 = sand.u32 %s76, 1
        %s289 = scalar_lea.sflag [#allocation3], %s288
        %s290 = sand.u32 %s76, 1
        %s291 = smul.addr %s290, 256
        %s292 = scalar_lea.vmem [#allocation2], %s291
        %p293 = pneg %p89
        %p294 = pneg %p86
        %p295 = pneg %p115
        %p296 = pneg %p112
        %p297 = pneg %p141
        %p298 = pneg %p138
        %p299 = pneg %p171
        %p300 = pneg %p168
        %s301 = smul.u32 4, %s25
        %p302 = scmp.lt.s32.totalorder %s24, 3
        %s303 = scalar_select %p302, %s24, 3
        %p304 = scmp.lt.s32.totalorder %s301, 3
        %s305 = scalar_select %p304, %s301, 3
        %p306 = scmp.lt.s32.totalorder %s26, 0
        %s307 = scalar_select %p306, %s26, 0
        %s308 = sadd.s32 %s307, %s305
        %s309 = smul.addr %s303, 4
        %s310 = sadd.s32 %s308, %s309
        %s311 = smul.addr %s310, 4
        %s312 = scalar_lea.vmem %s4, %s311
        %s313 = smul.u32 4, %s25
        %p314 = scmp.lt.s32.totalorder %s24, 3
        %s315 = scalar_select %p314, %s24, 3
        %p316 = scmp.lt.s32.totalorder %s313, 3
        %s317 = scalar_select %p316, %s313, 3
        %s318 = smul.addr %s317, 4
        %s319 = smul.addr %s315, 16
        %s320 = sadd.s32 %s318, %s319
        %s321 = smul.addr %s320, 4
        %s322 = scalar_lea.vmem %s0, %s321
        %s323 = smul.u32 4, %s25
        %s324 = smul.u32 4, %s25
        %p325 = scmp.lt.s32.totalorder %s24, 3
        %s326 = scalar_select %p325, %s24, 3
        %p327 = scmp.lt.s32.totalorder %s324, 3
        %s328 = scalar_select %p327, %s324, 3
        %p329 = scmp.lt.s32.totalorder %s26, 0
        %s330 = scalar_select %p329, %s26, 0
        %s331 = sadd.s32 %s330, %s328
        %s332 = smul.addr %s326, 4
        %s333 = sadd.s32 %s331, %s332
        %s334 = smul.addr %s333, 4
        %s335 = scalar_lea.vmem %s4, %s334
        %s336 = smul.u32 4, %s25
        %v338 = vld [vmem:[%s322] sm:$0xff]
        %v339 = vld [vmem:[%s322 + $0x8] sm:$0xff]
        %v340 = vld [vmem:[%s322 + $0x10] sm:$0xff]
        %v341 = vld [vmem:[%s322 + $0x18] sm:$0xff]
        %v342 = vld [vmem:[%s322 + $0x20] sm:$0xff]
        %v343 = vld [vmem:[%s322 + $0x28] sm:$0xff]
        %v344 = vld [vmem:[%s322 + $0x30] sm:$0xff]
        %v345 = vld [vmem:[%s322 + $0x38] sm:$0xff]
        %v346 = vld [vmem:[%s263] sm:$0xf]
        %v347 = vld [vmem:[%s263 + $0x4] sm:$0xf]
        %v348 = vld [vmem:[%s263 + $0x8] sm:$0xf]
        %v349 = vld [vmem:[%s263 + $0xc] sm:$0xf]
        %v350 = vld [vmem:[%s263 + $0x10] sm:$0xf]
        %v351 = vld [vmem:[%s263 + $0x14] sm:$0xf]
        %v352 = vld [vmem:[%s263 + $0x18] sm:$0xf]
        %v353 = vld [vmem:[%s263 + $0x1c] sm:$0xf]
        %v354 = vld [vmem:[%s263 + $0x20] sm:$0xf]
        %v355 = vld [vmem:[%s263 + $0x24] sm:$0xf]
        %v356 = vld [vmem:[%s263 + $0x28] sm:$0xf]
        %v357 = vld [vmem:[%s263 + $0x2c] sm:$0xf]
        %v358 = vld [vmem:[%s263 + $0x30] sm:$0xf]
        %v359 = vld [vmem:[%s263 + $0x34] sm:$0xf]
        %v360 = vld [vmem:[%s263 + $0x38] sm:$0xf]
        %v361 = vld [vmem:[%s263 + $0x3c] sm:$0xf]
        %v362 = vld [vmem:[%s263 + $0x40] sm:$0xf]
        %v363 = vld [vmem:[%s263 + $0x44] sm:$0xf]
        %v364 = vld [vmem:[%s263 + $0x48] sm:$0xf]
        %v365 = vld [vmem:[%s263 + $0x4c] sm:$0xf]
        %v366 = vld [vmem:[%s263 + $0x50] sm:$0xf]
        %v367 = vld [vmem:[%s263 + $0x54] sm:$0xf]
        %v368 = vld [vmem:[%s263 + $0x58] sm:$0xf]
        %v369 = vld [vmem:[%s263 + $0x5c] sm:$0xf]
        %v370 = vld [vmem:[%s263 + $0x60] sm:$0xf]
        %v371 = vld [vmem:[%s263 + $0x64] sm:$0xf]
        %v372 = vld [vmem:[%s263 + $0x68] sm:$0xf]
        %v373 = vld [vmem:[%s263 + $0x6c] sm:$0xf]
        %v374 = vld [vmem:[%s263 + $0x70] sm:$0xf]
        %v375 = vld [vmem:[%s263 + $0x74] sm:$0xf]
        %v376 = vld [vmem:[%s263 + $0x78] sm:$0xf]
        %v377 = vld [vmem:[%s263 + $0x7c] sm:$0xf]
        %v378 = vld [vmem:[%s263 + $0x80] sm:$0xf]
        %v379 = vld [vmem:[%s263 + $0x84] sm:$0xf]
        %v380 = vld [vmem:[%s263 + $0x88] sm:$0xf]
        %v381 = vld [vmem:[%s263 + $0x8c] sm:$0xf]
        %v382 = vld [vmem:[%s263 + $0x90] sm:$0xf]
        %v383 = vld [vmem:[%s263 + $0x94] sm:$0xf]
        %v384 = vld [vmem:[%s263 + $0x98] sm:$0xf]
        %v385 = vld [vmem:[%s263 + $0x9c] sm:$0xf]
        %v386 = vld [vmem:[%s263 + $0xa0] sm:$0xf]
        %v387 = vld [vmem:[%s263 + $0xa4] sm:$0xf]
        %v388 = vld [vmem:[%s263 + $0xa8] sm:$0xf]
        %v389 = vld [vmem:[%s263 + $0xac] sm:$0xf]
        %v390 = vld [vmem:[%s263 + $0xb0] sm:$0xf]
        %v391 = vld [vmem:[%s263 + $0xb4] sm:$0xf]
        %v392 = vld [vmem:[%s263 + $0xb8] sm:$0xf]
        %v393 = vld [vmem:[%s263 + $0xbc] sm:$0xf]
        %v394 = vld [vmem:[%s263 + $0xc0] sm:$0xf]
        %v395 = vld [vmem:[%s263 + $0xc4] sm:$0xf]
        %v396 = vld [vmem:[%s263 + $0xc8] sm:$0xf]
        %v397 = vld [vmem:[%s263 + $0xcc] sm:$0xf]
        %v398 = vld [vmem:[%s263 + $0xd0] sm:$0xf]
        %v399 = vld [vmem:[%s263 + $0xd4] sm:$0xf]
        %v400 = vld [vmem:[%s263 + $0xd8] sm:$0xf]
        %v401 = vld [vmem:[%s263 + $0xdc] sm:$0xf]
        %v402 = vld [vmem:[%s263 + $0xe0] sm:$0xf]
        %v403 = vld [vmem:[%s263 + $0xe4] sm:$0xf]
        %v404 = vld [vmem:[%s263 + $0xe8] sm:$0xf]
        %v405 = vld [vmem:[%s263 + $0xec] sm:$0xf]
        %v406 = vld [vmem:[%s263 + $0xf0] sm:$0xf]
        %v407 = vld [vmem:[%s263 + $0xf4] sm:$0xf]
        %v408 = vld [vmem:[%s263 + $0xf8] sm:$0xf]
        %v409 = vld [vmem:[%s263 + $0xfc] sm:$0xf]
        %v418 = vunpack.c.l.b16 %v338
        %v419 = vunpack.c.h.b16 %v338
        %v420 = vunpack.c.l.b16 %v339
        %v421 = vunpack.c.h.b16 %v339
        %v422 = vunpack.c.l.b16 %v340
        %v423 = vunpack.c.h.b16 %v340
        %v424 = vunpack.c.l.b16 %v341
        %v425 = vunpack.c.h.b16 %v341
        %v426 = vunpack.c.l.b16 %v342
        %v427 = vunpack.c.h.b16 %v342
        %v428 = vunpack.c.l.b16 %v343
        %v429 = vunpack.c.h.b16 %v343
        %v430 = vunpack.c.l.b16 %v344
        %v431 = vunpack.c.h.b16 %v344
        %v432 = vunpack.c.l.b16 %v345
        %v433 = vunpack.c.h.b16 %v345
        %v434 = vpack.c.b16 %v422, %v418
        %v435 = vpack.c.b16 %v423, %v419
        %v436 = vpack.c.b16 %v424, %v420
        %v437 = vpack.c.b16 %v425, %v421
        %v438 = vpack.c.b16 %v430, %v426
        %v439 = vpack.c.b16 %v431, %v427
        %v440 = vpack.c.b16 %v432, %v428
        %v441 = vpack.c.b16 %v433, %v429
        %v514 = vunpack.c.l.b16 %v346
        %v515 = vunpack.c.l.b16 %v347
        %v516 = vunpack.c.l.b16 %v348
        %v517 = vunpack.c.l.b16 %v349
        %v518 = vunpack.c.l.b16 %v350
        %v519 = vunpack.c.l.b16 %v351
        %v520 = vunpack.c.l.b16 %v352
        %v521 = vunpack.c.l.b16 %v353
        %v522 = vunpack.c.l.b16 %v354
        %v523 = vunpack.c.l.b16 %v355
        %v524 = vunpack.c.l.b16 %v356
        %v525 = vunpack.c.l.b16 %v357
        %v526 = vunpack.c.l.b16 %v358
        %v527 = vunpack.c.l.b16 %v359
        %v528 = vunpack.c.l.b16 %v360
        %v529 = vunpack.c.l.b16 %v361
        %v530 = vunpack.c.l.b16 %v362
        %v531 = vunpack.c.l.b16 %v363
        %v532 = vunpack.c.l.b16 %v364
        %v533 = vunpack.c.l.b16 %v365
        %v534 = vunpack.c.l.b16 %v366
        %v535 = vunpack.c.l.b16 %v367
        %v536 = vunpack.c.l.b16 %v368
        %v537 = vunpack.c.l.b16 %v369
        %v538 = vunpack.c.l.b16 %v370
        %v539 = vunpack.c.l.b16 %v371
        %v540 = vunpack.c.l.b16 %v372
        %v541 = vunpack.c.l.b16 %v373
        %v542 = vunpack.c.l.b16 %v374
        %v543 = vunpack.c.l.b16 %v375
        %v544 = vunpack.c.l.b16 %v376
        %v545 = vunpack.c.l.b16 %v377
        %v546 = vunpack.c.l.b16 %v378
        %v547 = vunpack.c.l.b16 %v379
        %v548 = vunpack.c.l.b16 %v380
        %v549 = vunpack.c.l.b16 %v381
        %v550 = vunpack.c.l.b16 %v382
        %v551 = vunpack.c.l.b16 %v383
        %v552 = vunpack.c.l.b16 %v384
        %v553 = vunpack.c.l.b16 %v385
        %v554 = vunpack.c.l.b16 %v386
        %v555 = vunpack.c.l.b16 %v387
        %v556 = vunpack.c.l.b16 %v388
        %v557 = vunpack.c.l.b16 %v389
        %v558 = vunpack.c.l.b16 %v390
        %v559 = vunpack.c.l.b16 %v391
        %v560 = vunpack.c.l.b16 %v392
        %v561 = vunpack.c.l.b16 %v393
        %v562 = vunpack.c.l.b16 %v394
        %v563 = vunpack.c.l.b16 %v395
        %v564 = vunpack.c.l.b16 %v396
        %v565 = vunpack.c.l.b16 %v397
        %v566 = vunpack.c.l.b16 %v398
        %v567 = vunpack.c.l.b16 %v399
        %v568 = vunpack.c.l.b16 %v400
        %v569 = vunpack.c.l.b16 %v401
        %v570 = vunpack.c.l.b16 %v402
        %v571 = vunpack.c.l.b16 %v403
        %v572 = vunpack.c.l.b16 %v404
        %v573 = vunpack.c.l.b16 %v405
        %v574 = vunpack.c.l.b16 %v406
        %v575 = vunpack.c.l.b16 %v407
        %v576 = vunpack.c.l.b16 %v408
        %v577 = vunpack.c.l.b16 %v409
        %v578 = vpack.c.b16 %v515, %v514
        %v579 = vpack.c.b16 %v517, %v516
        %v580 = vpack.c.b16 %v519, %v518
        %v581 = vpack.c.b16 %v521, %v520
        %v582 = vpack.c.b16 %v523, %v522
        %v583 = vpack.c.b16 %v525, %v524
        %v584 = vpack.c.b16 %v527, %v526
        %v585 = vpack.c.b16 %v529, %v528
        %v586 = vpack.c.b16 %v531, %v530
        %v587 = vpack.c.b16 %v533, %v532
        %v588 = vpack.c.b16 %v535, %v534
        %v589 = vpack.c.b16 %v537, %v536
        %v590 = vpack.c.b16 %v539, %v538
        %v591 = vpack.c.b16 %v541, %v540
        %v592 = vpack.c.b16 %v543, %v542
        %v593 = vpack.c.b16 %v545, %v544
        %v594 = vpack.c.b16 %v547, %v546
        %v595 = vpack.c.b16 %v549, %v548
        %v596 = vpack.c.b16 %v551, %v550
        %v597 = vpack.c.b16 %v553, %v552
        %v598 = vpack.c.b16 %v555, %v554
        %v599 = vpack.c.b16 %v557, %v556
        %v600 = vpack.c.b16 %v559, %v558
        %v601 = vpack.c.b16 %v561, %v560
        %v602 = vpack.c.b16 %v563, %v562
        %v603 = vpack.c.b16 %v565, %v564
        %v604 = vpack.c.b16 %v567, %v566
        %v605 = vpack.c.b16 %v569, %v568
        %v606 = vpack.c.b16 %v571, %v570
        %v607 = vpack.c.b16 %v573, %v572
        %v608 = vpack.c.b16 %v575, %v574
        %v609 = vpack.c.b16 %v577, %v576
        %642 = vmatprep.subr.bf16.mxu0 0
        %643 = vmatpush1.bf16.msra.mxu0 %v578
        %644 = vmatprep.subr.bf16.mxu0 0
        %645 = vmatpush1.bf16.msra.mxu0 %v579
        %646 = vmatprep.subr.bf16.mxu0 0
        %647 = vmatpush1.bf16.msra.mxu0 %v580
        %648 = vmatprep.subr.bf16.mxu0 0
        %649 = vmatpush1.bf16.msra.mxu0 %v581
        %650 = vmatprep.subr.bf16.mxu0 0
        %651 = vmatpush1.bf16.msra.mxu0 %v582
        %652 = vmatprep.subr.bf16.mxu0 0
        %653 = vmatpush1.bf16.msra.mxu0 %v583
        %654 = vmatprep.subr.bf16.mxu0 0
        %655 = vmatpush1.bf16.msra.mxu0 %v584
        %656 = vmatprep.subr.bf16.mxu0 0
        %657 = vmatpush1.bf16.msra.mxu0 %v585
        %658 = vmatprep.subr.bf16.mxu0 0
        %659 = vmatpush1.bf16.msra.mxu0 %v586
        %660 = vmatprep.subr.bf16.mxu0 0
        %661 = vmatpush1.bf16.msra.mxu0 %v587
        %662 = vmatprep.subr.bf16.mxu0 0
        %663 = vmatpush1.bf16.msra.mxu0 %v588
        %664 = vmatprep.subr.bf16.mxu0 0
        %665 = vmatpush1.bf16.msra.mxu0 %v589
        %666 = vmatprep.subr.bf16.mxu0 0
        %667 = vmatpush1.bf16.msra.mxu0 %v590
        %668 = vmatprep.subr.bf16.mxu0 0
        %669 = vmatpush1.bf16.msra.mxu0 %v591
        %670 = vmatprep.subr.bf16.mxu0 0
        %671 = vmatpush1.bf16.msra.mxu0 %v592
        %672 = vmatprep.subr.bf16.mxu0 0
        %673 = vmatpush1.bf16.msra.mxu0 %v593
        %674 = vmatprep.mubr.bf16.mxu0 %v435
        %675 = vmatmul.mubr.bf16.gmra.mrb[0].mxu0 %v434
        %v676 = vpop.f32.mrb[0].mxu0
        %v677 = vadd.f32 0.0, %v676
        %v678 = vpop.f32.mrb[0].mxu0
        %v679 = vpop.f32.mrb[0].mxu0
        %v680 = vadd.f32 0.0, %v679
        %v681 = vpop.f32.mrb[0].mxu0
        %682 = vmatprep.mubr.bf16.mxu0 %v439
        %683 = vmatmul.mubr.bf16.gmra.mrb[0].mxu0 %v438
        %v684 = vpop.f32.mrb[0].mxu0
        %v685 = vadd.f32 0.0, %v684
        %v686 = vpop.f32.mrb[0].mxu0
        %v687 = vpop.f32.mrb[0].mxu0
        %v688 = vadd.f32 0.0, %v687
        %v689 = vpop.f32.mrb[0].mxu0
        %690 = vdwg.mxu0
        %691 = vmatprep.subr.bf16.mxu0 0
        %692 = vmatpush1.bf16.msra.mxu0 %v594
        %693 = vmatprep.subr.bf16.mxu0 0
        %694 = vmatpush1.bf16.msra.mxu0 %v595
        %695 = vmatprep.subr.bf16.mxu0 0
        %696 = vmatpush1.bf16.msra.mxu0 %v596
        %697 = vmatprep.subr.bf16.mxu0 0
        %698 = vmatpush1.bf16.msra.mxu0 %v597
        %699 = vmatprep.subr.bf16.mxu0 0
        %700 = vmatpush1.bf16.msra.mxu0 %v598
        %701 = vmatprep.subr.bf16.mxu0 0
        %702 = vmatpush1.bf16.msra.mxu0 %v599
        %703 = vmatprep.subr.bf16.mxu0 0
        %704 = vmatpush1.bf16.msra.mxu0 %v600
        %705 = vmatprep.subr.bf16.mxu0 0
        %706 = vmatpush1.bf16.msra.mxu0 %v601
        %707 = vmatprep.subr.bf16.mxu0 0
        %708 = vmatpush1.bf16.msra.mxu0 %v602
        %709 = vmatprep.subr.bf16.mxu0 0
        %710 = vmatpush1.bf16.msra.mxu0 %v603
        %711 = vmatprep.subr.bf16.mxu0 0
        %712 = vmatpush1.bf16.msra.mxu0 %v604
        %713 = vmatprep.subr.bf16.mxu0 0
        %714 = vmatpush1.bf16.msra.mxu0 %v605
        %715 = vmatprep.subr.bf16.mxu0 0
        %716 = vmatpush1.bf16.msra.mxu0 %v606
        %717 = vmatprep.subr.bf16.mxu0 0
        %718 = vmatpush1.bf16.msra.mxu0 %v607
        %719 = vmatprep.subr.bf16.mxu0 0
        %720 = vmatpush1.bf16.msra.mxu0 %v608
        %721 = vmatprep.subr.bf16.mxu0 0
        %722 = vmatpush1.bf16.msra.mxu0 %v609
        %723 = vmatprep.mubr.bf16.mxu0 %v437
        %724 = vmatmul.mubr.bf16.gmra.mrb[0].mxu0 %v436
        %v725 = vpop.f32.mrb[0].mxu0
        %v726 = vadd.f32 %v677, %v725
        %v727 = vpop.f32.mrb[0].mxu0
        %v728 = vpop.f32.mrb[0].mxu0
        %v729 = vadd.f32 %v680, %v728
        %v730 = vpop.f32.mrb[0].mxu0
        %731 = vmatprep.mubr.bf16.mxu0 %v441
        %732 = vmatmul.mubr.bf16.gmra.mrb[0].mxu0 %v440
        %v733 = vpop.f32.mrb[0].mxu0
        %v734 = vadd.f32 %v685, %v733
        %v735 = vpop.f32.mrb[0].mxu0
        %v736 = vpop.f32.mrb[0].mxu0
        %v737 = vadd.f32 %v688, %v736
        %v738 = vpop.f32.mrb[0].mxu0
        %739 = vdwg.mxu0
        %v740 = vld [vmem:[#allocation4] sm:$0x1]
        %v742 = vlaneseq
        %v743 = vshrl.u32 %v742, 7
        %v744 = vsub.s32 0, %v743
        %v745 = vrot.slane %v740, %v744
        %v747 = vmul.f32 %v726, %v745
        %v748 = vmul.f32 %v729, %v745
        %v749 = vmul.f32 %v734, %v745
        %v750 = vmul.f32 %v737, %v745
        %v751 = vld [vmem:[#allocation6] sm:$0x1]
        %v753 = vlaneseq
        %v754 = vshrl.u32 %v753, 7
        %v755 = vsub.s32 0, %v754
        %v756 = vrot.slane %v751, %v755
        %v758 = vadd.f32 %v747, %v756
        %v759 = vadd.f32 %v748, %v756
        %v760 = vadd.f32 %v749, %v756
        %v761 = vadd.f32 %v750, %v756
        %v762 = vmax.f32 %v758, 0.0
        %v763 = vmax.f32 %v759, 0.0
        %v764 = vmax.f32 %v760, 0.0
        %v765 = vmax.f32 %v761, 0.0
        %v766 = vpack.c.bf16 %v763, %v762
        %v767 = vpack.c.bf16 %v765, %v764
        %v770 = vunpack.c.l.b16 %v766
        %v771 = vunpack.c.h.b16 %v766
        %v772 = vunpack.c.l.b16 %v767
        %v773 = vunpack.c.h.b16 %v767
        %v774 = vpack.c.b16 %v770, %v770
        %v775 = vpack.c.b16 %v771, %v771
        %v776 = vpack.c.b16 %v772, %v772
        %v777 = vpack.c.b16 %v773, %v773
        %782 = vst [vmem:[%s335] sm:$0xf] %v774
        %783 = vst [vmem:[%s335 + $0x4] sm:$0xf] %v775
        %784 = vst [vmem:[%s335 + $0x8] sm:$0xf] %v776
        %785 = vst [vmem:[%s335 + $0xc] sm:$0xf] %v777
        %s786 = smul.u32 4, %s25
        %p787 = scmp.lt.s32.totalorder %s24, 3
        %s788 = scalar_select %p787, %s24, 3
        %p789 = scmp.lt.s32.totalorder %s786, 3
        %s790 = scalar_select %p789, %s786, 3
        %p791 = scmp.lt.s32.totalorder %s26, 0
        %s792 = scalar_select %p791, %s26, 0
        %s793 = sadd.s32 %s792, %s790
        %s794 = smul.addr %s788, 4
        %s795 = sadd.s32 %s793, %s794
        %s796 = smul.addr %s795, 4
        %s797 = scalar_lea.vmem %s4, %s796
        // Predicated region
        $region49: #{_lambda_.6} parent=35 // pred_check
          %p798 = pneg %p168
        $region50: #{_lambda_.6} parent=35 // pred_check_branch
          %800 = sbr.rel (%p798) target = $region52
        $region51: #{_lambda_.6} parent=35 // pred_region
          %s801 = smul.u32 4, %s25
        $region52: #{_lambda_.6} parent=35 // pred_fallthru
          _
      $region36: #{_lambda_.6} parent=5 // pred_fallthru
        _
      %p802 = scmp.le.s32.totalorder 2, %s14
      // Predicated region
      $region53: #{_lambda_.6} parent=5 // pred_check
        %p803 = pneg %p802
      $region54: #{_lambda_.6} parent=5 // pred_check_branch
        %805 = sbr.rel (%p803) target = $region56
      $region55: #{_lambda_.6} parent=5 // pred_region
        %s806 = ssub.s32 %s14, 2
        // Predicated region
        $region57: #{_lambda_.6} parent=55 // pred_check
          %p807 = pneg %p174
        $region58: #{_lambda_.6} parent=55 // pred_check_branch
          %809 = sbr.rel (%p807) target = $region60
        $region59: #{_lambda_.6} parent=55 // pred_region
          %s810 = smul.u32 4, %s28
          %p811 = scmp.lt.s32.totalorder %s27, 3
          %s812 = scalar_select %p811, %s27, 3
          %p813 = scmp.lt.s32.totalorder %s810, 3
          %s814 = scalar_select %p813, %s810, 3
          %p815 = scmp.lt.s32.totalorder %s29, 0
          %s816 = scalar_select %p815, %s29, 0
          %s817 = sadd.s32 %s816, %s814
          %s818 = smul.addr %s812, 4
          %s819 = sadd.s32 %s817, %s818
          %s820 = smul.addr %s819, 4
          %s821 = scalar_lea.vmem %s4, %s820
        $region60: #{_lambda_.6} parent=55 // pred_fallthru
          _
      $region56: #{_lambda_.6} parent=5 // pred_fallthru
        _
    $region6: #{_lambda_.6} parent=1 // loop_footer
      %s18 = sadd.s32 1, %s14
    $region7: #{_lambda_.6} parent=1 // loop_footer_branch
      %13 = sbr.rel target = $region3
    $region8: #{_lambda_.6} parent=1 // loop_exit
      _
    %822 = vsyncpa [#allocation3], 1
    %s823 = scalar_lea.sflag [#allocation3], 1
    %824 = vsyncpa %s823, 1
    %825 = vsyncpa [#allocation5], 1

// kernel: _lambda_.5
$region0: #{_lambda_.5}
  #allocation0 [shape = 'u32[]', space=smem, size = 0x4, offset = 0x4, fixed_abs, tag = 'smem constant byte address 0x4 - core index']
  #allocation1 [shape = 'u32[144,128]{1,0:T(1,128)}', space=vmem, size = 0x12000, scoped, tag = 'internal scratch']
  %s0 = inlined_call_operand.vmem [shape: bf16[1,8,32], index: 0, kind: input, shape index: {}]
  %s1 = inlined_call_operand.vmem [shape: bf16[1,32,2048], index: 1, kind: input, shape index: {}]
  %s2 = inlined_call_operand.vmem [shape: f32[1,2048], index: 2, kind: input, shape index: {}]
  %s3 = inlined_call_operand.vmem [shape: f32[1,2048], index: 3, kind: input, shape index: {}]
  %s4 = inlined_call_operand.vmem [shape: bf16[1,8,2048], index: 4, kind: output, shape index: {}]
  %s5 = sld [smem:[#allocation0]]
  $region26: #{_lambda_.5} parent=0
    _
  %s7 = ssub.s32 1, %s5
  %s8 = scalar_select 0, %s7, %s5
  // Predicated region
  $region2: #{_lambda_.5} parent=0 // pred_check
    _
  $region3: #{_lambda_.5} parent=0 // pred_check_branch
    %10 = sbr.rel (0) target = $region5
  $region4: #{_lambda_.5} parent=0 // pred_region
    _
  $region5: #{_lambda_.5} parent=0 // pred_fallthru
    _
  // Predicated region
  $region6: #{_lambda_.5} parent=0 // pred_check
    _
  $region7: #{_lambda_.5} parent=0 // pred_check_branch
    %12 = sbr.rel (0) target = $region9
  $region8: #{_lambda_.5} parent=0 // pred_region
    _
  $region9: #{_lambda_.5} parent=0 // pred_fallthru
    _
  // Predicated region
  $region10: #{_lambda_.5} parent=0 // pred_check
    _
  $region11: #{_lambda_.5} parent=0 // pred_check_branch
    %14 = sbr.rel (0) target = $region13
  $region12: #{_lambda_.5} parent=0 // pred_region
    _
  $region13: #{_lambda_.5} parent=0 // pred_fallthru
    _
  // Predicated region
  $region14: #{_lambda_.5} parent=0 // pred_check
    _
  $region15: #{_lambda_.5} parent=0 // pred_check_branch
    %16 = sbr.rel (0) target = $region17
  $region16: #{_lambda_.5} parent=0 // pred_region
    _
  $region17: #{_lambda_.5} parent=0 // pred_fallthru
    _
  %v18 = vld [vmem:[%s0] sm:$0xf]
  %v19 = vld [vmem:[%s1] sm:$0xff]
  %v20 = vld [vmem:[%s1 + $0x8] sm:$0xff]
  %v21 = vld [vmem:[%s1 + $0x10] sm:$0xff]
  %v22 = vld [vmem:[%s1 + $0x18] sm:$0xff]
  %v23 = vld [vmem:[%s1 + $0x20] sm:$0xff]
  %v24 = vld [vmem:[%s1 + $0x28] sm:$0xff]
  %v25 = vld [vmem:[%s1 + $0x30] sm:$0xff]
  %v26 = vld [vmem:[%s1 + $0x38] sm:$0xff]
  %v27 = vld [vmem:[%s1 + $0x40] sm:$0xff]
  %v28 = vld [vmem:[%s1 + $0x48] sm:$0xff]
  %v29 = vld [vmem:[%s1 + $0x50] sm:$0xff]
  %v30 = vld [vmem:[%s1 + $0x58] sm:$0xff]
  %v31 = vld [vmem:[%s1 + $0x60] sm:$0xff]
  %v32 = vld [vmem:[%s1 + $0x68] sm:$0xff]
  %v33 = vld [vmem:[%s1 + $0x70] sm:$0xff]
  %v34 = vld [vmem:[%s1 + $0x78] sm:$0xff]
  %v35 = vld [vmem:[%s1 + $0x80] sm:$0xff]
  %v36 = vld [vmem:[%s1 + $0x88] sm:$0xff]
  %v37 = vld [vmem:[%s1 + $0x90] sm:$0xff]
  %v38 = vld [vmem:[%s1 + $0x98] sm:$0xff]
  %v39 = vld [vmem:[%s1 + $0xa0] sm:$0xff]
  %v40 = vld [vmem:[%s1 + $0xa8] sm:$0xff]
  %v41 = vld [vmem:[%s1 + $0xb0] sm:$0xff]
  %v42 = vld [vmem:[%s1 + $0xb8] sm:$0xff]
  %v43 = vld [vmem:[%s1 + $0xc0] sm:$0xff]
  %v44 = vld [vmem:[%s1 + $0xc8] sm:$0xff]
  %v45 = vld [vmem:[%s1 + $0xd0] sm:$0xff]
  %v46 = vld [vmem:[%s1 + $0xd8] sm:$0xff]
  %v47 = vld [vmem:[%s1 + $0xe0] sm:$0xff]
  %v48 = vld [vmem:[%s1 + $0xe8] sm:$0xff]
  %v49 = vld [vmem:[%s1 + $0xf0] sm:$0xff]
  %v50 = vld [vmem:[%s1 + $0xf8] sm:$0xff]
  %v83 = vunpack.c.l.b16 %v19
  %v84 = vunpack.c.h.b16 %v19
  %v85 = vunpack.c.l.b16 %v20
  %v86 = vunpack.c.h.b16 %v20
  %v87 = vunpack.c.l.b16 %v21
  %v88 = vunpack.c.h.b16 %v21
  %v89 = vunpack.c.l.b16 %v22
  %v90 = vunpack.c.h.b16 %v22
  %v91 = vunpack.c.l.b16 %v23
  %v92 = vunpack.c.h.b16 %v23
  %v93 = vunpack.c.l.b16 %v24
  %v94 = vunpack.c.h.b16 %v24
  %v95 = vunpack.c.l.b16 %v25
  %v96 = vunpack.c.h.b16 %v25
  %v97 = vunpack.c.l.b16 %v26
  %v98 = vunpack.c.h.b16 %v26
  %v99 = vunpack.c.l.b16 %v27
  %v100 = vunpack.c.h.b16 %v27
  %v101 = vunpack.c.l.b16 %v28
  %v102 = vunpack.c.h.b16 %v28
  %v103 = vunpack.c.l.b16 %v29
  %v104 = vunpack.c.h.b16 %v29
  %v105 = vunpack.c.l.b16 %v30
  %v106 = vunpack.c.h.b16 %v30
  %v107 = vunpack.c.l.b16 %v31
  %v108 = vunpack.c.h.b16 %v31
  %v109 = vunpack.c.l.b16 %v32
  %v110 = vunpack.c.h.b16 %v32
  %v111 = vunpack.c.l.b16 %v33
  %v112 = vunpack.c.h.b16 %v33
  %v113 = vunpack.c.l.b16 %v34
  %v114 = vunpack.c.h.b16 %v34
  %v115 = vunpack.c.l.b16 %v35
  %v116 = vunpack.c.h.b16 %v35
  %v117 = vunpack.c.l.b16 %v36
  %v118 = vunpack.c.h.b16 %v36
  %v119 = vunpack.c.l.b16 %v37
  %v120 = vunpack.c.h.b16 %v37
  %v121 = vunpack.c.l.b16 %v38
  %v122 = vunpack.c.h.b16 %v38
  %v123 = vunpack.c.l.b16 %v39
  %v124 = vunpack.c.h.b16 %v39
  %v125 = vunpack.c.l.b16 %v40
  %v126 = vunpack.c.h.b16 %v40
  %v127 = vunpack.c.l.b16 %v41
  %v128 = vunpack.c.h.b16 %v41
  %v129 = vunpack.c.l.b16 %v42
  %v130 = vunpack.c.h.b16 %v42
  %v131 = vunpack.c.l.b16 %v43
  %v132 = vunpack.c.h.b16 %v43
  %v133 = vunpack.c.l.b16 %v44
  %v134 = vunpack.c.h.b16 %v44
  %v135 = vunpack.c.l.b16 %v45
  %v136 = vunpack.c.h.b16 %v45
  %v137 = vunpack.c.l.b16 %v46
  %v138 = vunpack.c.h.b16 %v46
  %v139 = vunpack.c.l.b16 %v47
  %v140 = vunpack.c.h.b16 %v47
  %v141 = vunpack.c.l.b16 %v48
  %v142 = vunpack.c.h.b16 %v48
  %v143 = vunpack.c.l.b16 %v49
  %v144 = vunpack.c.h.b16 %v49
  %v145 = vunpack.c.l.b16 %v50
  %v146 = vunpack.c.h.b16 %v50
  %v147 = vpack.c.b16 %v99, %v83
  %v148 = vpack.c.b16 %v100, %v84
  %v149 = vpack.c.b16 %v101, %v85
  %v150 = vpack.c.b16 %v102, %v86
  %v151 = vpack.c.b16 %v103, %v87
  %v152 = vpack.c.b16 %v104, %v88
  %v153 = vpack.c.b16 %v105, %v89
  %v154 = vpack.c.b16 %v106, %v90
  %v155 = vpack.c.b16 %v107, %v91
  %v156 = vpack.c.b16 %v108, %v92
  %v157 = vpack.c.b16 %v109, %v93
  %v158 = vpack.c.b16 %v110, %v94
  %v159 = vpack.c.b16 %v111, %v95
  %v160 = vpack.c.b16 %v112, %v96
  %v161 = vpack.c.b16 %v113, %v97
  %v162 = vpack.c.b16 %v114, %v98
  %v163 = vpack.c.b16 %v131, %v115
  %v164 = vpack.c.b16 %v132, %v116
  %v165 = vpack.c.b16 %v133, %v117
  %v166 = vpack.c.b16 %v134, %v118
  %v167 = vpack.c.b16 %v135, %v119
  %v168 = vpack.c.b16 %v136, %v120
  %v169 = vpack.c.b16 %v137, %v121
  %v170 = vpack.c.b16 %v138, %v122
  %v171 = vpack.c.b16 %v139, %v123
  %v172 = vpack.c.b16 %v140, %v124
  %v173 = vpack.c.b16 %v141, %v125
  %v174 = vpack.c.b16 %v142, %v126
  %v175 = vpack.c.b16 %v143, %v127
  %v176 = vpack.c.b16 %v144, %v128
  %v177 = vpack.c.b16 %v145, %v129
  %v178 = vpack.c.b16 %v146, %v130
  %vm211 = vcmask 261120
  %v213 = vsel %vm211, %v18, 0
  %215 = vmatprep.subr.bf16.mxu0 %v148
  %216 = vmatpush1.bf16.msra.mxu0 %v147
  %217 = vmatprep.subr.bf16.mxu0 %v164
  %218 = vmatpush1.bf16.msra.mxu0 %v163
  %219 = vmatprep.subr.bf16.mxu0 0
  %220 = vmatpush1.bf16.msra.mxu0 0
  %221 = vmatprep.subr.bf16.mxu0 0
  %222 = vmatpush1.bf16.msra.mxu0 0
  %223 = vmatprep.subr.bf16.mxu0 0
  %224 = vmatpush1.bf16.msra.mxu0 0
  %225 = vmatprep.subr.bf16.mxu0 0
  %226 = vmatpush1.bf16.msra.mxu0 0
  %227 = vmatprep.subr.bf16.mxu0 0
  %228 = vmatpush1.bf16.msra.mxu0 0
  %229 = vmatprep.subr.bf16.mxu0 0
  %230 = vmatpush1.bf16.msra.mxu0 0
  %231 = vmatprep.subr.bf16.mxu0 0
  %232 = vmatpush1.bf16.msra.mxu0 0
  %233 = vmatprep.subr.bf16.mxu0 0
  %234 = vmatpush1.bf16.msra.mxu0 0
  %235 = vmatprep.subr.bf16.mxu0 0
  %236 = vmatpush1.bf16.msra.mxu0 0
  %237 = vmatprep.subr.bf16.mxu0 0
  %238 = vmatpush1.bf16.msra.mxu0 0
  %239 = vmatprep.subr.bf16.mxu0 0
  %240 = vmatpush1.bf16.msra.mxu0 0
  %241 = vmatprep.subr.bf16.mxu0 0
  %242 = vmatpush1.bf16.msra.mxu0 0
  %243 = vmatprep.subr.bf16.mxu0 0
  %244 = vmatpush1.bf16.msra.mxu0 0
  %245 = vmatprep.subr.bf16.mxu0 0
  %246 = vmatpush1.bf16.msra.mxu0 0
  %247 = vmatprep.mubr.bf16.mxu0 0
  %248 = vmatmul.mubr.bf16.gmra.mrb[0].mxu0 %v213
  %v249 = vpop.f32.mrb[0].mxu0
  %v250 = vadd.f32 0.0, %v249
  %v251 = vpop.f32.mrb[0].mxu0
  %v252 = vadd.f32 0.0, %v251
  %v253 = vpop.f32.mrb[0].mxu0
  %v254 = vpop.f32.mrb[0].mxu0
  %255 = vdwg.mxu0
  %256 = vmatprep.subr.bf16.mxu0 %v150
  %257 = vmatpush1.bf16.msra.mxu0 %v149
  %258 = vmatprep.subr.bf16.mxu0 %v166
  %259 = vmatpush1.bf16.msra.mxu0 %v165
  %260 = vmatprep.subr.bf16.mxu0 0
  %261 = vmatpush1.bf16.msra.mxu0 0
  %262 = vmatprep.subr.bf16.mxu0 0
  %263 = vmatpush1.bf16.msra.mxu0 0
  %264 = vmatprep.subr.bf16.mxu0 0
  %265 = vmatpush1.bf16.msra.mxu0 0
  %266 = vmatprep.subr.bf16.mxu0 0
  %267 = vmatpush1.bf16.msra.mxu0 0
  %268 = vmatprep.subr.bf16.mxu0 0
  %269 = vmatpush1.bf16.msra.mxu0 0
  %270 = vmatprep.subr.bf16.mxu0 0
  %271 = vmatpush1.bf16.msra.mxu0 0
  %272 = vmatprep.subr.bf16.mxu0 0
  %273 = vmatpush1.bf16.msra.mxu0 0
  %274 = vmatprep.subr.bf16.mxu0 0
  %275 = vmatpush1.bf16.msra.mxu0 0
  %276 = vmatprep.subr.bf16.mxu0 0
  %277 = vmatpush1.bf16.msra.mxu0 0
  %278 = vmatprep.subr.bf16.mxu0 0
  %279 = vmatpush1.bf16.msra.mxu0 0
  %280 = vmatprep.subr.bf16.mxu0 0
  %281 = vmatpush1.bf16.msra.mxu0 0
  %282 = vmatprep.subr.bf16.mxu0 0
  %283 = vmatpush1.bf16.msra.mxu0 0
  %284 = vmatprep.subr.bf16.mxu0 0
  %285 = vmatpush1.bf16.msra.mxu0 0
  %286 = vmatprep.subr.bf16.mxu0 0
  %287 = vmatpush1.bf16.msra.mxu0 0
  %288 = vmatprep.mubr.bf16.mxu0 0
  %289 = vmatmul.mubr.bf16.gmra.mrb[0].mxu0 %v213
  %v290 = vpop.f32.mrb[0].mxu0
  %v291 = vadd.f32 0.0, %v290
  %v292 = vpop.f32.mrb[0].mxu0
  %v293 = vadd.f32 0.0, %v292
  %v294 = vpop.f32.mrb[0].mxu0
  %v295 = vpop.f32.mrb[0].mxu0
  %296 = vdwg.mxu0
  %297 = vmatprep.subr.bf16.mxu0 %v152
  %298 = vmatpush1.bf16.msra.mxu0 %v151
  %299 = vmatprep.subr.bf16.mxu0 %v168
  %300 = vmatpush1.bf16.msra.mxu0 %v167
  %301 = vmatprep.subr.bf16.mxu0 0
  %302 = vmatpush1.bf16.msra.mxu0 0
  %303 = vmatprep.subr.bf16.mxu0 0
  %304 = vmatpush1.bf16.msra.mxu0 0
  %305 = vmatprep.subr.bf16.mxu0 0
  %306 = vmatpush1.bf16.msra.mxu0 0
  %307 = vmatprep.subr.bf16.mxu0 0
  %308 = vmatpush1.bf16.msra.mxu0 0
  %309 = vmatprep.subr.bf16.mxu0 0
  %310 = vmatpush1.bf16.msra.mxu0 0
  %311 = vmatprep.subr.bf16.mxu0 0
  %312 = vmatpush1.bf16.msra.mxu0 0
  %313 = vmatprep.subr.bf16.mxu0 0
  %314 = vmatpush1.bf16.msra.mxu0 0
  %315 = vmatprep.subr.bf16.mxu0 0
  %316 = vmatpush1.bf16.msra.mxu0 0
  %317 = vmatprep.subr.bf16.mxu0 0
  %318 = vmatpush1.bf16.msra.mxu0 0
  %319 = vmatprep.subr.bf16.mxu0 0
  %320 = vmatpush1.bf16.msra.mxu0 0
  %321 = vmatprep.subr.bf16.mxu0 0
  %322 = vmatpush1.bf16.msra.mxu0 0
  %323 = vmatprep.subr.bf16.mxu0 0
  %324 = vmatpush1.bf16.msra.mxu0 0
  %325 = vmatprep.subr.bf16.mxu0 0
  %326 = vmatpush1.bf16.msra.mxu0 0
  %327 = vmatprep.subr.bf16.mxu0 0
  %328 = vmatpush1.bf16.msra.mxu0 0
  %329 = vmatprep.mubr.bf16.mxu0 0
  %330 = vmatmul.mubr.bf16.gmra.mrb[0].mxu0 %v213
  %v331 = vpop.f32.mrb[0].mxu0
  %v332 = vadd.f32 0.0, %v331
  %v333 = vpop.f32.mrb[0].mxu0
  %v334 = vadd.f32 0.0, %v333
  %v335 = vpop.f32.mrb[0].mxu0
  %v336 = vpop.f32.mrb[0].mxu0
  %337 = vdwg.mxu0
  %338 = vmatprep.subr.bf16.mxu0 %v154
  %339 = vmatpush1.bf16.msra.mxu0 %v153
  %340 = vmatprep.subr.bf16.mxu0 %v170
  %341 = vmatpush1.bf16.msra.mxu0 %v169
  %342 = vmatprep.subr.bf16.mxu0 0
  %343 = vmatpush1.bf16.msra.mxu0 0
  %344 = vmatprep.subr.bf16.mxu0 0
  %345 = vmatpush1.bf16.msra.mxu0 0
  %346 = vmatprep.subr.bf16.mxu0 0
  %347 = vmatpush1.bf16.msra.mxu0 0
  %348 = vmatprep.subr.bf16.mxu0 0
  %349 = vmatpush1.bf16.msra.mxu0 0
  %350 = vmatprep.subr.bf16.mxu0 0
  %351 = vmatpush1.bf16.msra.mxu0 0
  %352 = vmatprep.subr.bf16.mxu0 0
  %353 = vmatpush1.bf16.msra.mxu0 0
  %354 = vmatprep.subr.bf16.mxu0 0
  %355 = vmatpush1.bf16.msra.mxu0 0
  %356 = vmatprep.subr.bf16.mxu0 0
  %357 = vmatpush1.bf16.msra.mxu0 0
  %358 = vmatprep.subr.bf16.mxu0 0
  %359 = vmatpush1.bf16.msra.mxu0 0
  %360 = vmatprep.subr.bf16.mxu0 0
  %361 = vmatpush1.bf16.msra.mxu0 0
  %362 = vmatprep.subr.bf16.mxu0 0
  %363 = vmatpush1.bf16.msra.mxu0 0
  %364 = vmatprep.subr.bf16.mxu0 0
  %365 = vmatpush1.bf16.msra.mxu0 0
  %366 = vmatprep.subr.bf16.mxu0 0
  %367 = vmatpush1.bf16.msra.mxu0 0
  %368 = vmatprep.subr.bf16.mxu0 0
  %369 = vmatpush1.bf16.msra.mxu0 0
  %370 = vmatprep.mubr.bf16.mxu0 0
  %371 = vmatmul.mubr.bf16.gmra.mrb[0].mxu0 %v213
  %v372 = vpop.f32.mrb[0].mxu0
  %v373 = vadd.f32 0.0, %v372
  %v374 = vpop.f32.mrb[0].mxu0
  %v375 = vadd.f32 0.0, %v374
  %v376 = vpop.f32.mrb[0].mxu0
  %v377 = vpop.f32.mrb[0].mxu0
  %378 = vdwg.mxu0
  %379 = vmatprep.subr.bf16.mxu0 %v156
  %380 = vmatpush1.bf16.msra.mxu0 %v155
  %381 = vmatprep.subr.bf16.mxu0 %v172
  %382 = vmatpush1.bf16.msra.mxu0 %v171
  %383 = vmatprep.subr.bf16.mxu0 0
  %384 = vmatpush1.bf16.msra.mxu0 0
  %385 = vmatprep.subr.bf16.mxu0 0
  %386 = vmatpush1.bf16.msra.mxu0 0
  %387 = vmatprep.subr.bf16.mxu0 0
  %388 = vmatpush1.bf16.msra.mxu0 0
  %389 = vmatprep.subr.bf16.mxu0 0
  %390 = vmatpush1.bf16.msra.mxu0 0
  %391 = vmatprep.subr.bf16.mxu0 0
  %392 = vmatpush1.bf16.msra.mxu0 0
  %393 = vmatprep.subr.bf16.mxu0 0
  %394 = vmatpush1.bf16.msra.mxu0 0
  %395 = vmatprep.subr.bf16.mxu0 0
  %396 = vmatpush1.bf16.msra.mxu0 0
  %397 = vmatprep.subr.bf16.mxu0 0
  %398 = vmatpush1.bf16.msra.mxu0 0
  %399 = vmatprep.subr.bf16.mxu0 0
  %400 = vmatpush1.bf16.msra.mxu0 0
  %401 = vmatprep.subr.bf16.mxu0 0
  %402 = vmatpush1.bf16.msra.mxu0 0
  %403 = vmatprep.subr.bf16.mxu0 0
  %404 = vmatpush1.bf16.msra.mxu0 0
  %405 = vmatprep.subr.bf16.mxu0 0
  %406 = vmatpush1.bf16.msra.mxu0 0
  %407 = vmatprep.subr.bf16.mxu0 0
  %408 = vmatpush1.bf16.msra.mxu0 0
  %409 = vmatprep.subr.bf16.mxu0 0
  %410 = vmatpush1.bf16.msra.mxu0 0
  %411 = vmatprep.mubr.bf16.mxu0 0
  %412 = vmatmul.mubr.bf16.gmra.mrb[0].mxu0 %v213
  %v413 = vpop.f32.mrb[0].mxu0
  %v414 = vadd.f32 0.0, %v413
  %v415 = vpop.f32.mrb[0].mxu0
  %v416 = vadd.f32 0.0, %v415
  %v417 = vpop.f32.mrb[0].mxu0
  %v418 = vpop.f32.mrb[0].mxu0
  %419 = vdwg.mxu0
  %420 = vmatprep.subr.bf16.mxu0 %v158
  %421 = vmatpush1.bf16.msra.mxu0 %v157
  %422 = vmatprep.subr.bf16.mxu0 %v174
  %423 = vmatpush1.bf16.msra.mxu0 %v173
  %424 = vmatprep.subr.bf16.mxu0 0
  %425 = vmatpush1.bf16.msra.mxu0 0
  %426 = vmatprep.subr.bf16.mxu0 0
  %427 = vmatpush1.bf16.msra.mxu0 0
  %428 = vmatprep.subr.bf16.mxu0 0
  %429 = vmatpush1.bf16.msra.mxu0 0
  %430 = vmatprep.subr.bf16.mxu0 0
  %431 = vmatpush1.bf16.msra.mxu0 0
  %432 = vmatprep.subr.bf16.mxu0 0
  %433 = vmatpush1.bf16.msra.mxu0 0
  %434 = vmatprep.subr.bf16.mxu0 0
  %435 = vmatpush1.bf16.msra.mxu0 0
  %436 = vmatprep.subr.bf16.mxu0 0
  %437 = vmatpush1.bf16.msra.mxu0 0
  %438 = vmatprep.subr.bf16.mxu0 0
  %439 = vmatpush1.bf16.msra.mxu0 0
  %440 = vmatprep.subr.bf16.mxu0 0
  %441 = vmatpush1.bf16.msra.mxu0 0
  %442 = vmatprep.subr.bf16.mxu0 0
  %443 = vmatpush1.bf16.msra.mxu0 0
  %444 = vmatprep.subr.bf16.mxu0 0
  %445 = vmatpush1.bf16.msra.mxu0 0
  %446 = vmatprep.subr.bf16.mxu0 0
  %447 = vmatpush1.bf16.msra.mxu0 0
  %448 = vmatprep.subr.bf16.mxu0 0
  %449 = vmatpush1.bf16.msra.mxu0 0
  %450 = vmatprep.subr.bf16.mxu0 0
  %451 = vmatpush1.bf16.msra.mxu0 0
  %452 = vmatprep.mubr.bf16.mxu0 0
  %453 = vmatmul.mubr.bf16.gmra.mrb[0].mxu0 %v213
  %v454 = vpop.f32.mrb[0].mxu0
  %v455 = vadd.f32 0.0, %v454
  %v456 = vpop.f32.mrb[0].mxu0
  %v457 = vadd.f32 0.0, %v456
  %v458 = vpop.f32.mrb[0].mxu0
  %v459 = vpop.f32.mrb[0].mxu0
  %460 = vdwg.mxu0
  %461 = vmatprep.subr.bf16.mxu0 %v160
  %462 = vmatpush1.bf16.msra.mxu0 %v159
  %463 = vmatprep.subr.bf16.mxu0 %v176
  %464 = vmatpush1.bf16.msra.mxu0 %v175
  %465 = vmatprep.subr.bf16.mxu0 0
  %466 = vmatpush1.bf16.msra.mxu0 0
  %467 = vmatprep.subr.bf16.mxu0 0
  %468 = vmatpush1.bf16.msra.mxu0 0
  %469 = vmatprep.subr.bf16.mxu0 0
  %470 = vmatpush1.bf16.msra.mxu0 0
  %471 = vmatprep.subr.bf16.mxu0 0
  %472 = vmatpush1.bf16.msra.mxu0 0
  %473 = vmatprep.subr.bf16.mxu0 0
  %474 = vmatpush1.bf16.msra.mxu0 0
  %475 = vmatprep.subr.bf16.mxu0 0
  %476 = vmatpush1.bf16.msra.mxu0 0
  %477 = vmatprep.subr.bf16.mxu0 0
  %478 = vmatpush1.bf16.msra.mxu0 0
  %479 = vmatprep.subr.bf16.mxu0 0
  %480 = vmatpush1.bf16.msra.mxu0 0
  %481 = vmatprep.subr.bf16.mxu0 0
  %482 = vmatpush1.bf16.msra.mxu0 0
  %483 = vmatprep.subr.bf16.mxu0 0
  %484 = vmatpush1.bf16.msra.mxu0 0
  %485 = vmatprep.subr.bf16.mxu0 0
  %486 = vmatpush1.bf16.msra.mxu0 0
  %487 = vmatprep.subr.bf16.mxu0 0
  %488 = vmatpush1.bf16.msra.mxu0 0
  %489 = vmatprep.subr.bf16.mxu0 0
  %490 = vmatpush1.bf16.msra.mxu0 0
  %491 = vmatprep.subr.bf16.mxu0 0
  %492 = vmatpush1.bf16.msra.mxu0 0
  %493 = vmatprep.mubr.bf16.mxu0 0
  %494 = vmatmul.mubr.bf16.gmra.mrb[0].mxu0 %v213
  %v495 = vpop.f32.mrb[0].mxu0
  %v496 = vadd.f32 0.0, %v495
  %v497 = vpop.f32.mrb[0].mxu0
  %v498 = vadd.f32 0.0, %v497
  %v499 = vpop.f32.mrb[0].mxu0
  %v500 = vpop.f32.mrb[0].mxu0
  %501 = vdwg.mxu0
  %502 = vmatprep.subr.bf16.mxu0 %v162
  %503 = vmatpush1.bf16.msra.mxu0 %v161
  %504 = vmatprep.subr.bf16.mxu0 %v178
  %505 = vmatpush1.bf16.msra.mxu0 %v177
  %506 = vmatprep.subr.bf16.mxu0 0
  %507 = vmatpush1.bf16.msra.mxu0 0
  %508 = vmatprep.subr.bf16.mxu0 0
  %509 = vmatpush1.bf16.msra.mxu0 0
  %510 = vmatprep.subr.bf16.mxu0 0
  %511 = vmatpush1.bf16.msra.mxu0 0
  %512 = vmatprep.subr.bf16.mxu0 0
  %513 = vmatpush1.bf16.msra.mxu0 0
  %514 = vmatprep.subr.bf16.mxu0 0
  %515 = vmatpush1.bf16.msra.mxu0 0
  %516 = vmatprep.subr.bf16.mxu0 0
  %517 = vmatpush1.bf16.msra.mxu0 0
  %518 = vmatprep.subr.bf16.mxu0 0
  %519 = vmatpush1.bf16.msra.mxu0 0
  %520 = vmatprep.subr.bf16.mxu0 0
  %521 = vmatpush1.bf16.msra.mxu0 0
  %522 = vmatprep.subr.bf16.mxu0 0
  %523 = vmatpush1.bf16.msra.mxu0 0
  %524 = vmatprep.subr.bf16.mxu0 0
  %525 = vmatpush1.bf16.msra.mxu0 0
  %526 = vmatprep.subr.bf16.mxu0 0
  %527 = vmatpush1.bf16.msra.mxu0 0
  %528 = vmatprep.subr.bf16.mxu0 0
  %529 = vmatpush1.bf16.msra.mxu0 0
  %530 = vmatprep.subr.bf16.mxu0 0
  %531 = vmatpush1.bf16.msra.mxu0 0
  %532 = vmatprep.subr.bf16.mxu0 0
  %533 = vmatpush1.bf16.msra.mxu0 0
  %534 = vmatprep.mubr.bf16.mxu0 0
  %535 = vmatmul.mubr.bf16.gmra.mrb[0].mxu0 %v213
  %v536 = vpop.f32.mrb[0].mxu0
  %v537 = vadd.f32 0.0, %v536
  %v538 = vpop.f32.mrb[0].mxu0
  %v539 = vadd.f32 0.0, %v538
  %v540 = vpop.f32.mrb[0].mxu0
  %v541 = vpop.f32.mrb[0].mxu0
  %542 = vdwg.mxu0
  %v543 = vld [vmem:[%s2] sm:$0xff]
  %v544 = vld [vmem:[%s2 + $0x8] sm:$0xff]
  %v547 = vlaneseq
  %v548 = vshrl.u32 %v547, 7
  %v549 = vsub.s32 0, %v548
  %v550 = vrot.slane %v543, %v549
  %v551 = vlaneseq
  %v552 = vshrl.u32 %v551, 7
  %v553 = vsub.s32 1, %v552
  %v554 = vrot.slane %v543, %v553
  %v555 = vlaneseq
  %v556 = vshrl.u32 %v555, 7
  %v557 = vsub.s32 2, %v556
  %v558 = vrot.slane %v543, %v557
  %v559 = vlaneseq
  %v560 = vshrl.u32 %v559, 7
  %v561 = vsub.s32 3, %v560
  %v562 = vrot.slane %v543, %v561
  %v563 = vlaneseq
  %v564 = vshrl.u32 %v563, 7
  %v565 = vsub.s32 4, %v564
  %v566 = vrot.slane %v543, %v565
  %v567 = vlaneseq
  %v568 = vshrl.u32 %v567, 7
  %v569 = vsub.s32 5, %v568
  %v570 = vrot.slane %v543, %v569
  %v571 = vlaneseq
  %v572 = vshrl.u32 %v571, 7
  %v573 = vsub.s32 6, %v572
  %v574 = vrot.slane %v543, %v573
  %v575 = vlaneseq
  %v576 = vshrl.u32 %v575, 7
  %v577 = vsub.s32 7, %v576
  %v578 = vrot.slane %v543, %v577
  %v579 = vlaneseq
  %v580 = vshrl.u32 %v579, 7
  %v581 = vsub.s32 0, %v580
  %v582 = vrot.slane %v544, %v581
  %v583 = vlaneseq
  %v584 = vshrl.u32 %v583, 7
  %v585 = vsub.s32 1, %v584
  %v586 = vrot.slane %v544, %v585
  %v587 = vlaneseq
  %v588 = vshrl.u32 %v587, 7
  %v589 = vsub.s32 2, %v588
  %v590 = vrot.slane %v544, %v589
  %v591 = vlaneseq
  %v592 = vshrl.u32 %v591, 7
  %v593 = vsub.s32 3, %v592
  %v594 = vrot.slane %v544, %v593
  %v595 = vlaneseq
  %v596 = vshrl.u32 %v595, 7
  %v597 = vsub.s32 4, %v596
  %v598 = vrot.slane %v544, %v597
  %v599 = vlaneseq
  %v600 = vshrl.u32 %v599, 7
  %v601 = vsub.s32 5, %v600
  %v602 = vrot.slane %v544, %v601
  %v603 = vlaneseq
  %v604 = vshrl.u32 %v603, 7
  %v605 = vsub.s32 6, %v604
  %v606 = vrot.slane %v544, %v605
  %v607 = vlaneseq
  %v608 = vshrl.u32 %v607, 7
  %v609 = vsub.s32 7, %v608
  %v610 = vrot.slane %v544, %v609
  %v627 = vmul.f32 %v250, %v550
  %v628 = vmul.f32 %v252, %v554
  %v629 = vmul.f32 %v291, %v558
  %v630 = vmul.f32 %v293, %v562
  %v631 = vmul.f32 %v332, %v566
  %v632 = vmul.f32 %v334, %v570
  %v633 = vmul.f32 %v373, %v574
  %v634 = vmul.f32 %v375, %v578
  %v635 = vmul.f32 %v414, %v582
  %v636 = vmul.f32 %v416, %v586
  %v637 = vmul.f32 %v455, %v590
  %v638 = vmul.f32 %v457, %v594
  %v639 = vmul.f32 %v496, %v598
  %v640 = vmul.f32 %v498, %v602
  %v641 = vmul.f32 %v537, %v606
  %v642 = vmul.f32 %v539, %v610
  %v643 = vld [vmem:[%s3] sm:$0xff]
  %v644 = vld [vmem:[%s3 + $0x8] sm:$0xff]
  %v647 = vlaneseq
  %v648 = vshrl.u32 %v647, 7
  %v649 = vsub.s32 0, %v648
  %v650 = vrot.slane %v643, %v649
  %v651 = vlaneseq
  %v652 = vshrl.u32 %v651, 7
  %v653 = vsub.s32 1, %v652
  %v654 = vrot.slane %v643, %v653
  %v655 = vlaneseq
  %v656 = vshrl.u32 %v655, 7
  %v657 = vsub.s32 2, %v656
  %v658 = vrot.slane %v643, %v657
  %v659 = vlaneseq
  %v660 = vshrl.u32 %v659, 7
  %v661 = vsub.s32 3, %v660
  %v662 = vrot.slane %v643, %v661
  %v663 = vlaneseq
  %v664 = vshrl.u32 %v663, 7
  %v665 = vsub.s32 4, %v664
  %v666 = vrot.slane %v643, %v665
  %v667 = vlaneseq
  %v668 = vshrl.u32 %v667, 7
  %v669 = vsub.s32 5, %v668
  %v670 = vrot.slane %v643, %v669
  %v671 = vlaneseq
  %v672 = vshrl.u32 %v671, 7
  %v673 = vsub.s32 6, %v672
  %v674 = vrot.slane %v643, %v673
  %v675 = vlaneseq
  %v676 = vshrl.u32 %v675, 7
  %v677 = vsub.s32 7, %v676
  %v678 = vrot.slane %v643, %v677
  %v679 = vlaneseq
  %v680 = vshrl.u32 %v679, 7
  %v681 = vsub.s32 0, %v680
  %v682 = vrot.slane %v644, %v681
  %v683 = vlaneseq
  %v684 = vshrl.u32 %v683, 7
  %v685 = vsub.s32 1, %v684
  %v686 = vrot.slane %v644, %v685
  %v687 = vlaneseq
  %v688 = vshrl.u32 %v687, 7
  %v689 = vsub.s32 2, %v688
  %v690 = vrot.slane %v644, %v689
  %v691 = vlaneseq
  %v692 = vshrl.u32 %v691, 7
  %v693 = vsub.s32 3, %v692
  %v694 = vrot.slane %v644, %v693
  %v695 = vlaneseq
  %v696 = vshrl.u32 %v695, 7
  %v697 = vsub.s32 4, %v696
  %v698 = vrot.slane %v644, %v697
  %v699 = vlaneseq
  %v700 = vshrl.u32 %v699, 7
  %v701 = vsub.s32 5, %v700
  %v702 = vrot.slane %v644, %v701
  %v703 = vlaneseq
  %v704 = vshrl.u32 %v703, 7
  %v705 = vsub.s32 6, %v704
  %v706 = vrot.slane %v644, %v705
  %v707 = vlaneseq
  %v708 = vshrl.u32 %v707, 7
  %v709 = vsub.s32 7, %v708
  %v710 = vrot.slane %v644, %v709
  %v727 = vadd.f32 %v627, %v650
  %v728 = vadd.f32 %v628, %v654
  %v729 = vadd.f32 %v629, %v658
  %v730 = vadd.f32 %v630, %v662
  %v731 = vadd.f32 %v631, %v666
  %v732 = vadd.f32 %v632, %v670
  %v733 = vadd.f32 %v633, %v674
  %v734 = vadd.f32 %v634, %v678
  %v735 = vadd.f32 %v635, %v682
  %v736 = vadd.f32 %v636, %v686
  %v737 = vadd.f32 %v637, %v690
  %v738 = vadd.f32 %v638, %v694
  %v739 = vadd.f32 %v639, %v698
  %v740 = vadd.f32 %v640, %v702
  %v741 = vadd.f32 %v641, %v706
  %v742 = vadd.f32 %v642, %v710
  %v743 = vmax.f32 %v727, 0.0
  %v744 = vmax.f32 %v728, 0.0
  %v745 = vmax.f32 %v729, 0.0
  %v746 = vmax.f32 %v730, 0.0
  %v747 = vmax.f32 %v731, 0.0
  %v748 = vmax.f32 %v732, 0.0
  %v749 = vmax.f32 %v733, 0.0
  %v750 = vmax.f32 %v734, 0.0
  %v751 = vmax.f32 %v735, 0.0
  %v752 = vmax.f32 %v736, 0.0
  %v753 = vmax.f32 %v737, 0.0
  %v754 = vmax.f32 %v738, 0.0
  %v755 = vmax.f32 %v739, 0.0
  %v756 = vmax.f32 %v740, 0.0
  %v757 = vmax.f32 %v741, 0.0
  %v758 = vmax.f32 %v742, 0.0
  %v759 = vpack.c.bf16 %v743, %v743
  %v760 = vpack.c.bf16 %v744, %v744
  %v761 = vpack.c.bf16 %v745, %v745
  %v762 = vpack.c.bf16 %v746, %v746
  %v763 = vpack.c.bf16 %v747, %v747
  %v764 = vpack.c.bf16 %v748, %v748
  %v765 = vpack.c.bf16 %v749, %v749
  %v766 = vpack.c.bf16 %v750, %v750
  %v767 = vpack.c.bf16 %v751, %v751
  %v768 = vpack.c.bf16 %v752, %v752
  %v769 = vpack.c.bf16 %v753, %v753
  %v770 = vpack.c.bf16 %v754, %v754
  %v771 = vpack.c.bf16 %v755, %v755
  %v772 = vpack.c.bf16 %v756, %v756
  %v773 = vpack.c.bf16 %v757, %v757
  %v774 = vpack.c.bf16 %v758, %v758
  %v791 = vunpack.c.l.b16 %v759
  %v792 = vunpack.c.l.b16 %v760
  %v793 = vunpack.c.l.b16 %v761
  %v794 = vunpack.c.l.b16 %v762
  %v795 = vunpack.c.l.b16 %v763
  %v796 = vunpack.c.l.b16 %v764
  %v797 = vunpack.c.l.b16 %v765
  %v798 = vunpack.c.l.b16 %v766
  %v799 = vunpack.c.l.b16 %v767
  %v800 = vunpack.c.l.b16 %v768
  %v801 = vunpack.c.l.b16 %v769
  %v802 = vunpack.c.l.b16 %v770
  %v803 = vunpack.c.l.b16 %v771
  %v804 = vunpack.c.l.b16 %v772
  %v805 = vunpack.c.l.b16 %v773
  %v806 = vunpack.c.l.b16 %v774
  %v807 = vpack.c.b16 %v792, %v791
  %v808 = vpack.c.b16 %v794, %v793
  %v809 = vpack.c.b16 %v796, %v795
  %v810 = vpack.c.b16 %v798, %v797
  %v811 = vpack.c.b16 %v800, %v799
  %v812 = vpack.c.b16 %v802, %v801
  %v813 = vpack.c.b16 %v804, %v803
  %v814 = vpack.c.b16 %v806, %v805
  %823 = vst [vmem:[%s4] sm:$0xff] %v807
  %824 = vst [vmem:[%s4 + $0x8] sm:$0xff] %v808
  %825 = vst [vmem:[%s4 + $0x10] sm:$0xff] %v809
  %826 = vst [vmem:[%s4 + $0x18] sm:$0xff] %v810
  %827 = vst [vmem:[%s4 + $0x20] sm:$0xff] %v811
  %828 = vst [vmem:[%s4 + $0x28] sm:$0xff] %v812
  %829 = vst [vmem:[%s4 + $0x30] sm:$0xff] %v813
  %830 = vst [vmem:[%s4 + $0x38] sm:$0xff] %v814
  // Predicated region
  $region18: #{_lambda_.5} parent=0 // pred_check
    _
  $region19: #{_lambda_.5} parent=0 // pred_check_branch
    %832 = sbr.rel (0) target = $region21
  $region20: #{_lambda_.5} parent=0 // pred_region
    _
  $region21: #{_lambda_.5} parent=0 // pred_fallthru
    _
  // Predicated region
  $region22: #{_lambda_.5} parent=0 // pred_check
    _
  $region23: #{_lambda_.5} parent=0 // pred_check_branch
    %834 = sbr.rel (0) target = $region25
  $region24: #{_lambda_.5} parent=0 // pred_region
    _
  $region25: #{_lambda_.5} parent=0 // pred_fallthru
    _

// kernel: _lambda_.7
$region0: #{_lambda_.7}
  #allocation0 [shape = 'u32[]', space=smem, size = 0x4, offset = 0x4, fixed_abs, tag = 'smem constant byte address 0x4 - core index']
  #allocation1 [shape = 'u32[144,128]{1,0:T(1,128)}', space=vmem, size = 0x12000, scoped, tag = 'internal scratch']
  %s0 = inlined_call_operand.vmem [shape: bf16[4,128,256], index: 0, kind: input, shape index: {}]
  %s1 = inlined_call_operand.vmem [shape: bf16[4,256,128], index: 1, kind: input, shape index: {}]
  %s2 = inlined_call_operand.vmem [shape: f32[1,128], index: 2, kind: input, shape index: {}]
  %s3 = inlined_call_operand.vmem [shape: f32[1,128], index: 3, kind: input, shape index: {}]
  %s4 = inlined_call_operand.vmem [shape: bf16[4,128,128], index: 4, kind: output, shape index: {}]
  %s5 = sld [smem:[#allocation0]]
  $region49: #{_lambda_.7} parent=0
    _
  %s7 = ssub.s32 1, %s5
  %s8 = scalar_select 0, %s7, %s5
  loop: start=0, step=1, limit=6
  $region2: #{_lambda_.7} parent=0 // loop_pre_header
    _
  $region3: #{_lambda_.7} parent=0 // loop_header
    %s10 = sphi 0, %s14
    %p11 = scmp.ge.s32.totalorder %s10, 6
    %s17 = sphi 0, %s36
    %s18 = sphi 0, %s32
    %s19 = sphi 0, %s28
    %s20 = sphi 0, %s17
    %s21 = sphi 0, %s18
    %s22 = sphi 0, %s19
    %s23 = sphi 0, %s20
    %s24 = sphi 0, %s21
    %s25 = sphi 0, %s22
    %s41 = sphi 0, %s43
    %s44 = sphi 0, %s41
    %s45 = sphi 0, %s44
    %s61 = sphi 0, %s45
    %s69 = sphi 0, %s71
    %s72 = sphi 0, %s69
    %s73 = sphi 0, %s72
    %s89 = sphi 0, %s73
    %s95 = sphi 0, %s97
    %s98 = sphi 0, %s95
    %s99 = sphi 0, %s98
    %s115 = sphi 0, %s99
    %s121 = sphi 0, %s123
    %s124 = sphi 0, %s121
    %s125 = sphi 0, %s124
    %s141 = sphi 0, %s125
    %s151 = sphi 0, %s153
    %s154 = sphi 0, %s151
    %s155 = sphi 0, %s154
    %s171 = sphi 0, %s155
  $region4: #{_lambda_.7} parent=0 // loop_header_branch
    %13 = sbr.rel (%p11) target = $region8
  $region5: #{_lambda_.7} parent=0 // loop_body
    %s15 = ssub.s32 %s10, 1
    %s16 = ssub.s32 %s10, 2
    %s26 = sadd.s32 1, %s19
    %p27 = scmp.ge.s32.totalorder %s26, 1
    %s28 = scalar_select %p27, 0, %s26
    %s29 = sadd.s32 1, %s18
    %s30 = scalar_select %p27, %s29, %s18
    %p31 = scmp.ge.s32.totalorder %s30, 1
    %s32 = scalar_select %p31, 0, %s30
    %s33 = sadd.s32 1, %s17
    %s34 = scalar_select %p31, %s33, %s17
    %p35 = scmp.ge.s32.totalorder %s34, 4
    %s36 = scalar_select %p35, 0, %s34
    %s37 = ssub.s32 %s17, %s36
    %s38 = ssub.s32 %s18, %s32
    %s39 = sor.u32 %s37, %s38
    %p40 = scmp.eq.s32.totalorder %s39, 0
    %s42 = sadd.s32 %s41, 1
    %s43 = scalar_select %p40, %s41, %s42
    %p46 = pneg %p40
    %p47 = scmp.eq.s32.totalorder %s10, 3
    %p48 = por %p46, %p47
    %p49 = scmp.ne.s32.totalorder %s41, %s44
    %p50 = scmp.eq.s32.totalorder %s10, 0
    %p51 = por %p49, %p50
    %p52 = scmp.ne.s32.totalorder %s41, %s44
    %p53 = scmp.eq.s32.totalorder %s15, 3
    %p54 = por %p52, %p53
    %p55 = scmp.ne.s32.totalorder %s44, %s45
    %p56 = scmp.eq.s32.totalorder %s15, 0
    %p57 = por %p55, %p56
    %p58 = scmp.ne.s32.totalorder %s44, %s45
    %p59 = scmp.eq.s32.totalorder %s16, 3
    %p60 = por %p58, %p59
    %p62 = scmp.ne.s32.totalorder %s45, %s61
    %p63 = scmp.eq.s32.totalorder %s16, 0
    %p64 = por %p62, %p63
    %s65 = ssub.s32 %s17, %s36
    %s66 = ssub.s32 %s19, %s28
    %s67 = sor.u32 %s65, %s66
    %p68 = scmp.eq.s32.totalorder %s67, 0
    %s70 = sadd.s32 %s69, 1
    %s71 = scalar_select %p68, %s69, %s70
    %p74 = pneg %p68
    %p75 = scmp.eq.s32.totalorder %s10, 3
    %p76 = por %p74, %p75
    %p77 = scmp.ne.s32.totalorder %s69, %s72
    %p78 = scmp.eq.s32.totalorder %s10, 0
    %p79 = por %p77, %p78
    %p80 = scmp.ne.s32.totalorder %s69, %s72
    %p81 = scmp.eq.s32.totalorder %s15, 3
    %p82 = por %p80, %p81
    %p83 = scmp.ne.s32.totalorder %s72, %s73
    %p84 = scmp.eq.s32.totalorder %s15, 0
    %p85 = por %p83, %p84
    %p86 = scmp.ne.s32.totalorder %s72, %s73
    %p87 = scmp.eq.s32.totalorder %s16, 3
    %p88 = por %p86, %p87
    %p90 = scmp.ne.s32.totalorder %s73, %s89
    %p91 = scmp.eq.s32.totalorder %s16, 0
    %p92 = por %p90, %p91
    %s93 = ssub.s32 %s19, %s28
    %p94 = scmp.eq.s32.totalorder %s93, 0
    %s96 = sadd.s32 %s95, 1
    %s97 = scalar_select %p94, %s95, %s96
    %p100 = pneg %p94
    %p101 = scmp.eq.s32.totalorder %s10, 3
    %p102 = por %p100, %p101
    %p103 = scmp.ne.s32.totalorder %s95, %s98
    %p104 = scmp.eq.s32.totalorder %s10, 0
    %p105 = por %p103, %p104
    %p106 = scmp.ne.s32.totalorder %s95, %s98
    %p107 = scmp.eq.s32.totalorder %s15, 3
    %p108 = por %p106, %p107
    %p109 = scmp.ne.s32.totalorder %s98, %s99
    %p110 = scmp.eq.s32.totalorder %s15, 0
    %p111 = por %p109, %p110
    %p112 = scmp.ne.s32.totalorder %s98, %s99
    %p113 = scmp.eq.s32.totalorder %s16, 3
    %p114 = por %p112, %p113
    %p116 = scmp.ne.s32.totalorder %s99, %s115
    %p117 = scmp.eq.s32.totalorder %s16, 0
    %p118 = por %p116, %p117
    %s119 = ssub.s32 %s19, %s28
    %p120 = scmp.eq.s32.totalorder %s119, 0
    %s122 = sadd.s32 %s121, 1
    %s123 = scalar_select %p120, %s121, %s122
    %p126 = pneg %p120
    %p127 = scmp.eq.s32.totalorder %s10, 3
    %p128 = por %p126, %p127
    %p129 = scmp.ne.s32.totalorder %s121, %s124
    %p130 = scmp.eq.s32.totalorder %s10, 0
    %p131 = por %p129, %p130
    %p132 = scmp.ne.s32.totalorder %s121, %s124
    %p133 = scmp.eq.s32.totalorder %s15, 3
    %p134 = por %p132, %p133
    %p135 = scmp.ne.s32.totalorder %s124, %s125
    %p136 = scmp.eq.s32.totalorder %s15, 0
    %p137 = por %p135, %p136
    %p138 = scmp.ne.s32.totalorder %s124, %s125
    %p139 = scmp.eq.s32.totalorder %s16, 3
    %p140 = por %p138, %p139
    %p142 = scmp.ne.s32.totalorder %s125, %s141
    %p143 = scmp.eq.s32.totalorder %s16, 0
    %p144 = por %p142, %p143
    %s145 = ssub.s32 %s17, %s36
    %s146 = ssub.s32 %s18, %s32
    %s147 = sor.u32 %s145, %s146
    %s148 = ssub.s32 %s19, %s28
    %s149 = sor.u32 %s147, %s148
    %p150 = scmp.eq.s32.totalorder %s149, 0
    %s152 = sadd.s32 %s151, 1
    %s153 = scalar_select %p150, %s151, %s152
    %p156 = pneg %p150
    %p157 = scmp.eq.s32.totalorder %s10, 3
    %p158 = por %p156, %p157
    %p159 = scmp.ne.s32.totalorder %s151, %s154
    %p160 = scmp.eq.s32.totalorder %s10, 0
    %p161 = por %p159, %p160
    %p162 = scmp.ne.s32.totalorder %s151, %s154
    %p163 = scmp.eq.s32.totalorder %s15, 3
    %p164 = por %p162, %p163
    %p165 = scmp.ne.s32.totalorder %s154, %s155
    %p166 = scmp.eq.s32.totalorder %s15, 0
    %p167 = por %p165, %p166
    %p168 = scmp.ne.s32.totalorder %s154, %s155
    %p169 = scmp.eq.s32.totalorder %s16, 3
    %p170 = por %p168, %p169
    %p172 = scmp.ne.s32.totalorder %s155, %s171
    %p173 = scmp.eq.s32.totalorder %s16, 0
    %p174 = por %p172, %p173
    %p175 = scmp.le.s32.totalorder 1, %s10
    %p176 = scmp.lt.s32.totalorder %s10, 5
    %p177 = pnand %p175, %p176
    %p178 = pneg %p177
    // Predicated region
    $region9: #{_lambda_.7} parent=5 // pred_check
      _
    $region10: #{_lambda_.7} parent=5 // pred_check_branch
      %180 = sbr.rel (%p177) target = $region12
    $region11: #{_lambda_.7} parent=5 // pred_region
      %s181 = ssub.s32 %s10, 1
      // Predicated region
      $region13: #{_lambda_.7} parent=11 // pred_check
        %p182 = pneg %p111
      $region14: #{_lambda_.7} parent=11 // pred_check_branch
        %184 = sbr.rel (%p182) target = $region16
      $region15: #{_lambda_.7} parent=11 // pred_region
        %p185 = scmp.lt.s32.totalorder %s22, 0
        %s186 = scalar_select %p185, %s22, 0
        %s187 = scalar_lea.vmem %s2, %s186
      $region16: #{_lambda_.7} parent=11 // pred_fallthru
        _
      // Predicated region
      $region17: #{_lambda_.7} parent=11 // pred_check
        %p188 = pneg %p137
      $region18: #{_lambda_.7} parent=11 // pred_check_branch
        %190 = sbr.rel (%p188) target = $region20
      $region19: #{_lambda_.7} parent=11 // pred_region
        %p191 = scmp.lt.s32.totalorder %s22, 0
        %s192 = scalar_select %p191, %s22, 0
        %s193 = scalar_lea.vmem %s3, %s192
      $region20: #{_lambda_.7} parent=11 // pred_fallthru
        _
    $region12: #{_lambda_.7} parent=5 // pred_fallthru
      _
    %p194 = scmp.lt.s32.totalorder %s10, 4
    // Predicated region
    $region21: #{_lambda_.7} parent=5 // pred_check
      %p195 = pneg %p194
    $region22: #{_lambda_.7} parent=5 // pred_check_branch
      %197 = sbr.rel (%p195) target = $region24
    $region23: #{_lambda_.7} parent=5 // pred_region
      // Predicated region
      $region25: #{_lambda_.7} parent=23 // pred_check
        %p198 = pneg %p51
      $region26: #{_lambda_.7} parent=23 // pred_check_branch
        %200 = sbr.rel (%p198) target = $region28
      $region27: #{_lambda_.7} parent=23 // pred_region
        %s201 = smul.u32 16, %s18
        %p202 = scmp.lt.s32.totalorder %s17, 3
        %s203 = scalar_select %p202, %s17, 3
        %p204 = scmp.lt.s32.totalorder %s201, 15
        %s205 = scalar_select %p204, %s201, 15
        %s206 = smul.addr %s205, 2
        %s207 = smul.addr %s203, 32
        %s208 = sadd.s32 %s206, %s207
        %s209 = smul.addr %s208, 4
        %s210 = scalar_lea.vmem %s0, %s209
        %s211 = smul.u32 16, %s18
      $region28: #{_lambda_.7} parent=23 // pred_fallthru
        _
      // Predicated region
      $region29: #{_lambda_.7} parent=23 // pred_check
        %p212 = pneg %p79
      $region30: #{_lambda_.7} parent=23 // pred_check_branch
        %214 = sbr.rel (%p212) target = $region32
      $region31: #{_lambda_.7} parent=23 // pred_region
        %p215 = scmp.lt.s32.totalorder %s17, 3
        %s216 = scalar_select %p215, %s17, 3
        %p217 = scmp.lt.s32.totalorder %s19, 0
        %s218 = scalar_select %p217, %s19, 0
        %s219 = smul.addr %s216, 32
        %s220 = sadd.s32 %s218, %s219
        %s221 = smul.addr %s220, 4
        %s222 = scalar_lea.vmem %s1, %s221
      $region32: #{_lambda_.7} parent=23 // pred_fallthru
        _
    $region24: #{_lambda_.7} parent=5 // pred_fallthru
      _
    %p223 = scmp.le.s32.totalorder 1, %s10
    %p224 = scmp.lt.s32.totalorder %s10, 5
    %p225 = pnand %p223, %p224
    %p226 = pneg %p225
    // Predicated region
    $region33: #{_lambda_.7} parent=5 // pred_check
      _
    $region34: #{_lambda_.7} parent=5 // pred_check_branch
      %228 = sbr.rel (%p225) target = $region36
    $region35: #{_lambda_.7} parent=5 // pred_region
      %s229 = ssub.s32 %s10, 1
      %s230 = smul.u32 16, %s21
      %p231 = scmp.lt.s32.totalorder %s20, 3
      %s232 = scalar_select %p231, %s20, 3
      %p233 = scmp.lt.s32.totalorder %s230, 15
      %s234 = scalar_select %p233, %s230, 15
      %s235 = smul.addr %s234, 2
      %s236 = smul.addr %s232, 32
      %s237 = sadd.s32 %s235, %s236
      %s238 = smul.addr %s237, 4
      %s239 = scalar_lea.vmem %s0, %s238
      %p240 = pneg %p57
      %p241 = pneg %p54
      %p242 = scmp.lt.s32.totalorder %s20, 3
      %s243 = scalar_select %p242, %s20, 3
      %p244 = scmp.lt.s32.totalorder %s22, 0
      %s245 = scalar_select %p244, %s22, 0
      %s246 = smul.addr %s243, 32
      %s247 = sadd.s32 %s245, %s246
      %s248 = smul.addr %s247, 4
      %s249 = scalar_lea.vmem %s1, %s248
      %p250 = pneg %p85
      %p251 = pneg %p82
      %p252 = scmp.lt.s32.totalorder %s22, 0
      %s253 = scalar_select %p252, %s22, 0
      %s254 = scalar_lea.vmem %s2, %s253
      %p255 = pneg %p111
      %p256 = pneg %p108
      %p257 = scmp.lt.s32.totalorder %s22, 0
      %s258 = scalar_select %p257, %s22, 0
      %s259 = scalar_lea.vmem %s3, %s258
      %p260 = pneg %p137
      %p261 = pneg %p134
      %p262 = pneg %p167
      %p263 = pneg %p164
      %s264 = smul.u32 16, %s21
      %p265 = scmp.lt.s32.totalorder %s20, 3
      %s266 = scalar_select %p265, %s20, 3
      %p267 = scmp.lt.s32.totalorder %s264, 15
      %s268 = scalar_select %p267, %s264, 15
      %p269 = scmp.lt.s32.totalorder %s22, 0
      %s270 = scalar_select %p269, %s22, 0
      %s271 = sadd.s32 %s270, %s268
      %s272 = smul.addr %s266, 16
      %s273 = sadd.s32 %s271, %s272
      %s274 = smul.addr %s273, 4
      %s275 = scalar_lea.vmem %s4, %s274
      %s276 = smul.u32 16, %s21
      %p277 = scmp.lt.s32.totalorder %s20, 3
      %s278 = scalar_select %p277, %s20, 3
      %p279 = scmp.lt.s32.totalorder %s276, 15
      %s280 = scalar_select %p279, %s276, 15
      %s281 = smul.addr %s280, 2
      %s282 = smul.addr %s278, 32
      %s283 = sadd.s32 %s281, %s282
      %s284 = smul.addr %s283, 4
      %s285 = scalar_lea.vmem %s0, %s284
      %s286 = smul.u32 16, %s21
      %p287 = scmp.lt.s32.totalorder %s20, 3
      %s288 = scalar_select %p287, %s20, 3
      %p289 = scmp.lt.s32.totalorder %s22, 0
      %s290 = scalar_select %p289, %s22, 0
      %s291 = smul.addr %s288, 32
      %s292 = sadd.s32 %s290, %s291
      %s293 = smul.addr %s292, 4
      %s294 = scalar_lea.vmem %s1, %s293
      %p295 = scmp.lt.s32.totalorder %s22, 0
      %s296 = scalar_select %p295, %s22, 0
      %s297 = scalar_lea.vmem %s2, %s296
      %p298 = scmp.lt.s32.totalorder %s22, 0
      %s299 = scalar_select %p298, %s22, 0
      %s300 = scalar_lea.vmem %s3, %s299
      %s301 = smul.u32 16, %s21
      %p302 = scmp.lt.s32.totalorder %s20, 3
      %s303 = scalar_select %p302, %s20, 3
      %p304 = scmp.lt.s32.totalorder %s301, 15
      %s305 = scalar_select %p304, %s301, 15
      %p306 = scmp.lt.s32.totalorder %s22, 0
      %s307 = scalar_select %p306, %s22, 0
      %s308 = sadd.s32 %s307, %s305
      %s309 = smul.addr %s303, 16
      %s310 = sadd.s32 %s308, %s309
      %s311 = smul.addr %s310, 4
      %s312 = scalar_lea.vmem %s4, %s311
      %s313 = smul.u32 16, %s21
      %v315 = vld [vmem:[%s285] sm:$0xff]
      %v316 = vld [vmem:[%s285 + $0x8] sm:$0xff]
      %v317 = vld [vmem:[%s285 + $0x10] sm:$0xff]
      %v318 = vld [vmem:[%s285 + $0x18] sm:$0xff]
      %v319 = vld [vmem:[%s285 + $0x20] sm:$0xff]
      %v320 = vld [vmem:[%s285 + $0x28] sm:$0xff]
      %v321 = vld [vmem:[%s285 + $0x30] sm:$0xff]
      %v322 = vld [vmem:[%s285 + $0x38] sm:$0xff]
      %v323 = vld [vmem:[%s285 + $0x40] sm:$0xff]
      %v324 = vld [vmem:[%s285 + $0x48] sm:$0xff]
      %v325 = vld [vmem:[%s285 + $0x50] sm:$0xff]
      %v326 = vld [vmem:[%s285 + $0x58] sm:$0xff]
      %v327 = vld [vmem:[%s285 + $0x60] sm:$0xff]
      %v328 = vld [vmem:[%s285 + $0x68] sm:$0xff]
      %v329 = vld [vmem:[%s285 + $0x70] sm:$0xff]
      %v330 = vld [vmem:[%s285 + $0x78] sm:$0xff]
      %v331 = vld [vmem:[%s294] sm:$0xf]
      %v332 = vld [vmem:[%s294 + $0x4] sm:$0xf]
      %v333 = vld [vmem:[%s294 + $0x8] sm:$0xf]
      %v334 = vld [vmem:[%s294 + $0xc] sm:$0xf]
      %v335 = vld [vmem:[%s294 + $0x10] sm:$0xf]
      %v336 = vld [vmem:[%s294 + $0x14] sm:$0xf]
      %v337 = vld [vmem:[%s294 + $0x18] sm:$0xf]
      %v338 = vld [vmem:[%s294 + $0x1c] sm:$0xf]
      %v339 = vld [vmem:[%s294 + $0x20] sm:$0xf]
      %v340 = vld [vmem:[%s294 + $0x24] sm:$0xf]
      %v341 = vld [vmem:[%s294 + $0x28] sm:$0xf]
      %v342 = vld [vmem:[%s294 + $0x2c] sm:$0xf]
      %v343 = vld [vmem:[%s294 + $0x30] sm:$0xf]
      %v344 = vld [vmem:[%s294 + $0x34] sm:$0xf]
      %v345 = vld [vmem:[%s294 + $0x38] sm:$0xf]
      %v346 = vld [vmem:[%s294 + $0x3c] sm:$0xf]
      %v347 = vld [vmem:[%s294 + $0x40] sm:$0xf]
      %v348 = vld [vmem:[%s294 + $0x44] sm:$0xf]
      %v349 = vld [vmem:[%s294 + $0x48] sm:$0xf]
      %v350 = vld [vmem:[%s294 + $0x4c] sm:$0xf]
      %v351 = vld [vmem:[%s294 + $0x50] sm:$0xf]
      %v352 = vld [vmem:[%s294 + $0x54] sm:$0xf]
      %v353 = vld [vmem:[%s294 + $0x58] sm:$0xf]
      %v354 = vld [vmem:[%s294 + $0x5c] sm:$0xf]
      %v355 = vld [vmem:[%s294 + $0x60] sm:$0xf]
      %v356 = vld [vmem:[%s294 + $0x64] sm:$0xf]
      %v357 = vld [vmem:[%s294 + $0x68] sm:$0xf]
      %v358 = vld [vmem:[%s294 + $0x6c] sm:$0xf]
      %v359 = vld [vmem:[%s294 + $0x70] sm:$0xf]
      %v360 = vld [vmem:[%s294 + $0x74] sm:$0xf]
      %v361 = vld [vmem:[%s294 + $0x78] sm:$0xf]
      %v362 = vld [vmem:[%s294 + $0x7c] sm:$0xf]
      %v379 = vunpack.c.l.b16 %v315
      %v380 = vunpack.c.h.b16 %v315
      %v381 = vunpack.c.l.b16 %v316
      %v382 = vunpack.c.h.b16 %v316
      %v383 = vunpack.c.l.b16 %v317
      %v384 = vunpack.c.h.b16 %v317
      %v385 = vunpack.c.l.b16 %v318
      %v386 = vunpack.c.h.b16 %v318
      %v387 = vunpack.c.l.b16 %v319
      %v388 = vunpack.c.h.b16 %v319
      %v389 = vunpack.c.l.b16 %v320
      %v390 = vunpack.c.h.b16 %v320
      %v391 = vunpack.c.l.b16 %v321
      %v392 = vunpack.c.h.b16 %v321
      %v393 = vunpack.c.l.b16 %v322
      %v394 = vunpack.c.h.b16 %v322
      %v395 = vunpack.c.l.b16 %v323
      %v396 = vunpack.c.h.b16 %v323
      %v397 = vunpack.c.l.b16 %v324
      %v398 = vunpack.c.h.b16 %v324
      %v399 = vunpack.c.l.b16 %v325
      %v400 = vunpack.c.h.b16 %v325
      %v401 = vunpack.c.l.b16 %v326
      %v402 = vunpack.c.h.b16 %v326
      %v403 = vunpack.c.l.b16 %v327
      %v404 = vunpack.c.h.b16 %v327
      %v405 = vunpack.c.l.b16 %v328
      %v406 = vunpack.c.h.b16 %v328
      %v407 = vunpack.c.l.b16 %v329
      %v408 = vunpack.c.h.b16 %v329
      %v409 = vunpack.c.l.b16 %v330
      %v410 = vunpack.c.h.b16 %v330
      %v411 = vpack.c.b16 %v381, %v379
      %v412 = vpack.c.b16 %v382, %v380
      %v413 = vpack.c.b16 %v385, %v383
      %v414 = vpack.c.b16 %v386, %v384
      %v415 = vpack.c.b16 %v389, %v387
      %v416 = vpack.c.b16 %v390, %v388
      %v417 = vpack.c.b16 %v393, %v391
      %v418 = vpack.c.b16 %v394, %v392
      %v419 = vpack.c.b16 %v397, %v395
      %v420 = vpack.c.b16 %v398, %v396
      %v421 = vpack.c.b16 %v401, %v399
      %v422 = vpack.c.b16 %v402, %v400
      %v423 = vpack.c.b16 %v405, %v403
      %v424 = vpack.c.b16 %v406, %v404
      %v425 = vpack.c.b16 %v409, %v407
      %v426 = vpack.c.b16 %v410, %v408
      %v475 = vunpack.c.l.b16 %v331
      %v476 = vunpack.c.l.b16 %v332
      %v477 = vunpack.c.l.b16 %v333
      %v478 = vunpack.c.l.b16 %v334
      %v479 = vunpack.c.l.b16 %v335
      %v480 = vunpack.c.l.b16 %v336
      %v481 = vunpack.c.l.b16 %v337
      %v482 = vunpack.c.l.b16 %v338
      %v483 = vunpack.c.l.b16 %v339
      %v484 = vunpack.c.l.b16 %v340
      %v485 = vunpack.c.l.b16 %v341
      %v486 = vunpack.c.l.b16 %v342
      %v487 = vunpack.c.l.b16 %v343
      %v488 = vunpack.c.l.b16 %v344
      %v489 = vunpack.c.l.b16 %v345
      %v490 = vunpack.c.l.b16 %v346
      %v491 = vunpack.c.l.b16 %v347
      %v492 = vunpack.c.l.b16 %v348
      %v493 = vunpack.c.l.b16 %v349
      %v494 = vunpack.c.l.b16 %v350
      %v495 = vunpack.c.l.b16 %v351
      %v496 = vunpack.c.l.b16 %v352
      %v497 = vunpack.c.l.b16 %v353
      %v498 = vunpack.c.l.b16 %v354
      %v499 = vunpack.c.l.b16 %v355
      %v500 = vunpack.c.l.b16 %v356
      %v501 = vunpack.c.l.b16 %v357
      %v502 = vunpack.c.l.b16 %v358
      %v503 = vunpack.c.l.b16 %v359
      %v504 = vunpack.c.l.b16 %v360
      %v505 = vunpack.c.l.b16 %v361
      %v506 = vunpack.c.l.b16 %v362
      %v507 = vpack.c.b16 %v476, %v475
      %v508 = vpack.c.b16 %v478, %v477
      %v509 = vpack.c.b16 %v480, %v479
      %v510 = vpack.c.b16 %v482, %v481
      %v511 = vpack.c.b16 %v484, %v483
      %v512 = vpack.c.b16 %v486, %v485
      %v513 = vpack.c.b16 %v488, %v487
      %v514 = vpack.c.b16 %v490, %v489
      %v515 = vpack.c.b16 %v492, %v491
      %v516 = vpack.c.b16 %v494, %v493
      %v517 = vpack.c.b16 %v496, %v495
      %v518 = vpack.c.b16 %v498, %v497
      %v519 = vpack.c.b16 %v500, %v499
      %v520 = vpack.c.b16 %v502, %v501
      %v521 = vpack.c.b16 %v504, %v503
      %v522 = vpack.c.b16 %v506, %v505
      %539 = vmatprep.subr.bf16.mxu0 0
      %540 = vmatpush1.bf16.msra.mxu0 %v507
      %541 = vmatprep.subr.bf16.mxu0 0
      %542 = vmatpush1.bf16.msra.mxu0 %v508
      %543 = vmatprep.subr.bf16.mxu0 0
      %544 = vmatpush1.bf16.msra.mxu0 %v509
      %545 = vmatprep.subr.bf16.mxu0 0
      %546 = vmatpush1.bf16.msra.mxu0 %v510
      %547 = vmatprep.subr.bf16.mxu0 0
      %548 = vmatpush1.bf16.msra.mxu0 %v511
      %549 = vmatprep.subr.bf16.mxu0 0
      %550 = vmatpush1.bf16.msra.mxu0 %v512
      %551 = vmatprep.subr.bf16.mxu0 0
      %552 = vmatpush1.bf16.msra.mxu0 %v513
      %553 = vmatprep.subr.bf16.mxu0 0
      %554 = vmatpush1.bf16.msra.mxu0 %v514
      %555 = vmatprep.subr.bf16.mxu0 0
      %556 = vmatpush1.bf16.msra.mxu0 %v515
      %557 = vmatprep.subr.bf16.mxu0 0
      %558 = vmatpush1.bf16.msra.mxu0 %v516
      %559 = vmatprep.subr.bf16.mxu0 0
      %560 = vmatpush1.bf16.msra.mxu0 %v517
      %561 = vmatprep.subr.bf16.mxu0 0
      %562 = vmatpush1.bf16.msra.mxu0 %v518
      %563 = vmatprep.subr.bf16.mxu0 0
      %564 = vmatpush1.bf16.msra.mxu0 %v519
      %565 = vmatprep.subr.bf16.mxu0 0
      %566 = vmatpush1.bf16.msra.mxu0 %v520
      %567 = vmatprep.subr.bf16.mxu0 0
      %568 = vmatpush1.bf16.msra.mxu0 %v521
      %569 = vmatprep.subr.bf16.mxu0 0
      %570 = vmatpush1.bf16.msra.mxu0 %v522
      %571 = vmatprep.mubr.bf16.mxu0 %v412
      %572 = vmatmul.mubr.bf16.gmra.mrb[0].mxu0 %v411
      %v573 = vpop.f32.mrb[0].mxu0
      %v574 = vadd.f32 0.0, %v573
      %v575 = vpop.f32.mrb[0].mxu0
      %v576 = vpop.f32.mrb[0].mxu0
      %v577 = vadd.f32 0.0, %v576
      %v578 = vpop.f32.mrb[0].mxu0
      %579 = vmatprep.mubr.bf16.mxu0 %v414
      %580 = vmatmul.mubr.bf16.gmra.mrb[0].mxu0 %v413
      %v581 = vpop.f32.mrb[0].mxu0
      %v582 = vadd.f32 0.0, %v581
      %v583 = vpop.f32.mrb[0].mxu0
      %v584 = vpop.f32.mrb[0].mxu0
      %v585 = vadd.f32 0.0, %v584
      %v586 = vpop.f32.mrb[0].mxu0
      %587 = vmatprep.mubr.bf16.mxu0 %v416
      %588 = vmatmul.mubr.bf16.gmra.mrb[0].mxu0 %v415
      %v589 = vpop.f32.mrb[0].mxu0
      %v590 = vadd.f32 0.0, %v589
      %v591 = vpop.f32.mrb[0].mxu0
      %v592 = vpop.f32.mrb[0].mxu0
      %v593 = vadd.f32 0.0, %v592
      %v594 = vpop.f32.mrb[0].mxu0
      %595 = vmatprep.mubr.bf16.mxu0 %v418
      %596 = vmatmul.mubr.bf16.gmra.mrb[0].mxu0 %v417
      %v597 = vpop.f32.mrb[0].mxu0
      %v598 = vadd.f32 0.0, %v597
      %v599 = vpop.f32.mrb[0].mxu0
      %v600 = vpop.f32.mrb[0].mxu0
      %v601 = vadd.f32 0.0, %v600
      %v602 = vpop.f32.mrb[0].mxu0
      %603 = vmatprep.mubr.bf16.mxu0 %v420
      %604 = vmatmul.mubr.bf16.gmra.mrb[0].mxu0 %v419
      %v605 = vpop.f32.mrb[0].mxu0
      %v606 = vadd.f32 0.0, %v605
      %v607 = vpop.f32.mrb[0].mxu0
      %v608 = vpop.f32.mrb[0].mxu0
      %v609 = vadd.f32 0.0, %v608
      %v610 = vpop.f32.mrb[0].mxu0
      %611 = vmatprep.mubr.bf16.mxu0 %v422
      %612 = vmatmul.mubr.bf16.gmra.mrb[0].mxu0 %v421
      %v613 = vpop.f32.mrb[0].mxu0
      %v614 = vadd.f32 0.0, %v613
      %v615 = vpop.f32.mrb[0].mxu0
      %v616 = vpop.f32.mrb[0].mxu0
      %v617 = vadd.f32 0.0, %v616
      %v618 = vpop.f32.mrb[0].mxu0
      %619 = vmatprep.mubr.bf16.mxu0 %v424
      %620 = vmatmul.mubr.bf16.gmra.mrb[0].mxu0 %v423
      %v621 = vpop.f32.mrb[0].mxu0
      %v622 = vadd.f32 0.0, %v621
      %v623 = vpop.f32.mrb[0].mxu0
      %v624 = vpop.f32.mrb[0].mxu0
      %v625 = vadd.f32 0.0, %v624
      %v626 = vpop.f32.mrb[0].mxu0
      %627 = vmatprep.mubr.bf16.mxu0 %v426
      %628 = vmatmul.mubr.bf16.gmra.mrb[0].mxu0 %v425
      %v629 = vpop.f32.mrb[0].mxu0
      %v630 = vadd.f32 0.0, %v629
      %v631 = vpop.f32.mrb[0].mxu0
      %v632 = vpop.f32.mrb[0].mxu0
      %v633 = vadd.f32 0.0, %v632
      %v634 = vpop.f32.mrb[0].mxu0
      %635 = vdwg.mxu0
      %v636 = vld [vmem:[%s297] sm:$0x1]
      %v638 = vlaneseq
      %v639 = vshrl.u32 %v638, 7
      %v640 = vsub.s32 0, %v639
      %v641 = vrot.slane %v636, %v640
      %v643 = vmul.f32 %v574, %v641
      %v644 = vmul.f32 %v577, %v641
      %v645 = vmul.f32 %v582, %v641
      %v646 = vmul.f32 %v585, %v641
      %v647 = vmul.f32 %v590, %v641
      %v648 = vmul.f32 %v593, %v641
      %v649 = vmul.f32 %v598, %v641
      %v650 = vmul.f32 %v601, %v641
      %v651 = vmul.f32 %v606, %v641
      %v652 = vmul.f32 %v609, %v641
      %v653 = vmul.f32 %v614, %v641
      %v654 = vmul.f32 %v617, %v641
      %v655 = vmul.f32 %v622, %v641
      %v656 = vmul.f32 %v625, %v641
      %v657 = vmul.f32 %v630, %v641
      %v658 = vmul.f32 %v633, %v641
      %v659 = vld [vmem:[%s300] sm:$0x1]
      %v661 = vlaneseq
      %v662 = vshrl.u32 %v661, 7
      %v663 = vsub.s32 0, %v662
      %v664 = vrot.slane %v659, %v663
      %v666 = vadd.f32 %v643, %v664
      %v667 = vadd.f32 %v644, %v664
      %v668 = vadd.f32 %v645, %v664
      %v669 = vadd.f32 %v646, %v664
      %v670 = vadd.f32 %v647, %v664
      %v671 = vadd.f32 %v648, %v664
      %v672 = vadd.f32 %v649, %v664
      %v673 = vadd.f32 %v650, %v664
      %v674 = vadd.f32 %v651, %v664
      %v675 = vadd.f32 %v652, %v664
      %v676 = vadd.f32 %v653, %v664
      %v677 = vadd.f32 %v654, %v664
      %v678 = vadd.f32 %v655, %v664
      %v679 = vadd.f32 %v656, %v664
      %v680 = vadd.f32 %v657, %v664
      %v681 = vadd.f32 %v658, %v664
      %v682 = vmax.f32 %v666, 0.0
      %v683 = vmax.f32 %v667, 0.0
      %v684 = vmax.f32 %v668, 0.0
      %v685 = vmax.f32 %v669, 0.0
      %v686 = vmax.f32 %v670, 0.0
      %v687 = vmax.f32 %v671, 0.0
      %v688 = vmax.f32 %v672, 0.0
      %v689 = vmax.f32 %v673, 0.0
      %v690 = vmax.f32 %v674, 0.0
      %v691 = vmax.f32 %v675, 0.0
      %v692 = vmax.f32 %v676, 0.0
      %v693 = vmax.f32 %v677, 0.0
      %v694 = vmax.f32 %v678, 0.0
      %v695 = vmax.f32 %v679, 0.0
      %v696 = vmax.f32 %v680, 0.0
      %v697 = vmax.f32 %v681, 0.0
      %v698 = vpack.c.bf16 %v683, %v682
      %v699 = vpack.c.bf16 %v685, %v684
      %v700 = vpack.c.bf16 %v687, %v686
      %v701 = vpack.c.bf16 %v689, %v688
      %v702 = vpack.c.bf16 %v691, %v690
      %v703 = vpack.c.bf16 %v693, %v692
      %v704 = vpack.c.bf16 %v695, %v694
      %v705 = vpack.c.bf16 %v697, %v696
      %v714 = vunpack.c.l.b16 %v698
      %v715 = vunpack.c.h.b16 %v698
      %v716 = vunpack.c.l.b16 %v699
      %v717 = vunpack.c.h.b16 %v699
      %v718 = vunpack.c.l.b16 %v700
      %v719 = vunpack.c.h.b16 %v700
      %v720 = vunpack.c.l.b16 %v701
      %v721 = vunpack.c.h.b16 %v701
      %v722 = vunpack.c.l.b16 %v702
      %v723 = vunpack.c.h.b16 %v702
      %v724 = vunpack.c.l.b16 %v703
      %v725 = vunpack.c.h.b16 %v703
      %v726 = vunpack.c.l.b16 %v704
      %v727 = vunpack.c.h.b16 %v704
      %v728 = vunpack.c.l.b16 %v705
      %v729 = vunpack.c.h.b16 %v705
      %v730 = vpack.c.b16 %v714, %v714
      %v731 = vpack.c.b16 %v715, %v715
      %v732 = vpack.c.b16 %v716, %v716
      %v733 = vpack.c.b16 %v717, %v717
      %v734 = vpack.c.b16 %v718, %v718
      %v735 = vpack.c.b16 %v719, %v719
      %v736 = vpack.c.b16 %v720, %v720
      %v737 = vpack.c.b16 %v721, %v721
      %v738 = vpack.c.b16 %v722, %v722
      %v739 = vpack.c.b16 %v723, %v723
      %v740 = vpack.c.b16 %v724, %v724
      %v741 = vpack.c.b16 %v725, %v725
      %v742 = vpack.c.b16 %v726, %v726
      %v743 = vpack.c.b16 %v727, %v727
      %v744 = vpack.c.b16 %v728, %v728
      %v745 = vpack.c.b16 %v729, %v729
      %762 = vst [vmem:[%s312] sm:$0xf] %v730
      %763 = vst [vmem:[%s312 + $0x4] sm:$0xf] %v731
      %764 = vst [vmem:[%s312 + $0x8] sm:$0xf] %v732
      %765 = vst [vmem:[%s312 + $0xc] sm:$0xf] %v733
      %766 = vst [vmem:[%s312 + $0x10] sm:$0xf] %v734
      %767 = vst [vmem:[%s312 + $0x14] sm:$0xf] %v735
      %768 = vst [vmem:[%s312 + $0x18] sm:$0xf] %v736
      %769 = vst [vmem:[%s312 + $0x1c] sm:$0xf] %v737
      %770 = vst [vmem:[%s312 + $0x20] sm:$0xf] %v738
      %771 = vst [vmem:[%s312 + $0x24] sm:$0xf] %v739
      %772 = vst [vmem:[%s312 + $0x28] sm:$0xf] %v740
      %773 = vst [vmem:[%s312 + $0x2c] sm:$0xf] %v741
      %774 = vst [vmem:[%s312 + $0x30] sm:$0xf] %v742
      %775 = vst [vmem:[%s312 + $0x34] sm:$0xf] %v743
      %776 = vst [vmem:[%s312 + $0x38] sm:$0xf] %v744
      %777 = vst [vmem:[%s312 + $0x3c] sm:$0xf] %v745
      %s778 = smul.u32 16, %s21
      %p779 = scmp.lt.s32.totalorder %s20, 3
      %s780 = scalar_select %p779, %s20, 3
      %p781 = scmp.lt.s32.totalorder %s778, 15
      %s782 = scalar_select %p781, %s778, 15
      %p783 = scmp.lt.s32.totalorder %s22, 0
      %s784 = scalar_select %p783, %s22, 0
      %s785 = sadd.s32 %s784, %s782
      %s786 = smul.addr %s780, 16
      %s787 = sadd.s32 %s785, %s786
      %s788 = smul.addr %s787, 4
      %s789 = scalar_lea.vmem %s4, %s788
      // Predicated region
      $region37: #{_lambda_.7} parent=35 // pred_check
        %p790 = pneg %p164
      $region38: #{_lambda_.7} parent=35 // pred_check_branch
        %792 = sbr.rel (%p790) target = $region40
      $region39: #{_lambda_.7} parent=35 // pred_region
        %s793 = smul.u32 16, %s21
      $region40: #{_lambda_.7} parent=35 // pred_fallthru
        _
    $region36: #{_lambda_.7} parent=5 // pred_fallthru
      _
    %p794 = scmp.le.s32.totalorder 2, %s10
    // Predicated region
    $region41: #{_lambda_.7} parent=5 // pred_check
      %p795 = pneg %p794
    $region42: #{_lambda_.7} parent=5 // pred_check_branch
      %797 = sbr.rel (%p795) target = $region44
    $region43: #{_lambda_.7} parent=5 // pred_region
      %s798 = ssub.s32 %s10, 2
      // Predicated region
      $region45: #{_lambda_.7} parent=43 // pred_check
        %p799 = pneg %p170
      $region46: #{_lambda_.7} parent=43 // pred_check_branch
        %801 = sbr.rel (%p799) target = $region48
      $region47: #{_lambda_.7} parent=43 // pred_region
        %s802 = smul.u32 16, %s24
        %p803 = scmp.lt.s32.totalorder %s23, 3
        %s804 = scalar_select %p803, %s23, 3
        %p805 = scmp.lt.s32.totalorder %s802, 15
        %s806 = scalar_select %p805, %s802, 15
        %p807 = scmp.lt.s32.totalorder %s25, 0
        %s808 = scalar_select %p807, %s25, 0
        %s809 = sadd.s32 %s808, %s806
        %s810 = smul.addr %s804, 16
        %s811 = sadd.s32 %s809, %s810
        %s812 = smul.addr %s811, 4
        %s813 = scalar_lea.vmem %s4, %s812
      $region48: #{_lambda_.7} parent=43 // pred_fallthru
        _
    $region44: #{_lambda_.7} parent=5 // pred_fallthru
      _
  $region6: #{_lambda_.7} parent=0 // loop_footer
    %s14 = sadd.s32 1, %s10
  $region7: #{_lambda_.7} parent=0 // loop_footer_branch
    %9 = sbr.rel target = $region3
  $region8: #{_lambda_.7} parent=0 // loop_exit
    _

// kernel: _lambda_.8
$region0: #{_lambda_.8}
  #allocation0 [shape = 'u32[]', space=smem, size = 0x4, offset = 0x4, fixed_abs, tag = 'smem constant byte address 0x4 - core index']
  #allocation1 [shape = 'u32[144,128]{1,0:T(1,128)}', space=vmem, size = 0x12000, scoped, tag = 'internal scratch']
  %s0 = inlined_call_operand.vmem [shape: bf16[4,512,128], index: 0, kind: input, shape index: {}]
  %s1 = inlined_call_operand.vmem [shape: bf16[4,128,128], index: 1, kind: input, shape index: {}]
  %s2 = inlined_call_operand.vmem [shape: f32[1,128], index: 2, kind: input, shape index: {}]
  %s3 = inlined_call_operand.vmem [shape: f32[1,128], index: 3, kind: input, shape index: {}]
  %s4 = inlined_call_operand.vmem [shape: bf16[4,512,128], index: 4, kind: output, shape index: {}]
  %s5 = sld [smem:[#allocation0]]
  $region49: #{_lambda_.8} parent=0
    _
  %s7 = ssub.s32 1, %s5
  %s8 = scalar_select 0, %s7, %s5
  loop: start=0, step=1, limit=6
  $region2: #{_lambda_.8} parent=0 // loop_pre_header
    _
  $region3: #{_lambda_.8} parent=0 // loop_header
    %s10 = sphi 0, %s14
    %p11 = scmp.ge.s32.totalorder %s10, 6
    %s17 = sphi 0, %s36
    %s18 = sphi 0, %s32
    %s19 = sphi 0, %s28
    %s20 = sphi 0, %s17
    %s21 = sphi 0, %s18
    %s22 = sphi 0, %s19
    %s23 = sphi 0, %s20
    %s24 = sphi 0, %s21
    %s25 = sphi 0, %s22
    %s41 = sphi 0, %s43
    %s44 = sphi 0, %s41
    %s45 = sphi 0, %s44
    %s61 = sphi 0, %s45
    %s69 = sphi 0, %s71
    %s72 = sphi 0, %s69
    %s73 = sphi 0, %s72
    %s89 = sphi 0, %s73
    %s95 = sphi 0, %s97
    %s98 = sphi 0, %s95
    %s99 = sphi 0, %s98
    %s115 = sphi 0, %s99
    %s121 = sphi 0, %s123
    %s124 = sphi 0, %s121
    %s125 = sphi 0, %s124
    %s141 = sphi 0, %s125
    %s151 = sphi 0, %s153
    %s154 = sphi 0, %s151
    %s155 = sphi 0, %s154
    %s171 = sphi 0, %s155
  $region4: #{_lambda_.8} parent=0 // loop_header_branch
    %13 = sbr.rel (%p11) target = $region8
  $region5: #{_lambda_.8} parent=0 // loop_body
    %s15 = ssub.s32 %s10, 1
    %s16 = ssub.s32 %s10, 2
    %s26 = sadd.s32 1, %s19
    %p27 = scmp.ge.s32.totalorder %s26, 1
    %s28 = scalar_select %p27, 0, %s26
    %s29 = sadd.s32 1, %s18
    %s30 = scalar_select %p27, %s29, %s18
    %p31 = scmp.ge.s32.totalorder %s30, 1
    %s32 = scalar_select %p31, 0, %s30
    %s33 = sadd.s32 1, %s17
    %s34 = scalar_select %p31, %s33, %s17
    %p35 = scmp.ge.s32.totalorder %s34, 4
    %s36 = scalar_select %p35, 0, %s34
    %s37 = ssub.s32 %s17, %s36
    %s38 = ssub.s32 %s18, %s32
    %s39 = sor.u32 %s37, %s38
    %p40 = scmp.eq.s32.totalorder %s39, 0
    %s42 = sadd.s32 %s41, 1
    %s43 = scalar_select %p40, %s41, %s42
    %p46 = pneg %p40
    %p47 = scmp.eq.s32.totalorder %s10, 3
    %p48 = por %p46, %p47
    %p49 = scmp.ne.s32.totalorder %s41, %s44
    %p50 = scmp.eq.s32.totalorder %s10, 0
    %p51 = por %p49, %p50
    %p52 = scmp.ne.s32.totalorder %s41, %s44
    %p53 = scmp.eq.s32.totalorder %s15, 3
    %p54 = por %p52, %p53
    %p55 = scmp.ne.s32.totalorder %s44, %s45
    %p56 = scmp.eq.s32.totalorder %s15, 0
    %p57 = por %p55, %p56
    %p58 = scmp.ne.s32.totalorder %s44, %s45
    %p59 = scmp.eq.s32.totalorder %s16, 3
    %p60 = por %p58, %p59
    %p62 = scmp.ne.s32.totalorder %s45, %s61
    %p63 = scmp.eq.s32.totalorder %s16, 0
    %p64 = por %p62, %p63
    %s65 = ssub.s32 %s17, %s36
    %s66 = ssub.s32 %s19, %s28
    %s67 = sor.u32 %s65, %s66
    %p68 = scmp.eq.s32.totalorder %s67, 0
    %s70 = sadd.s32 %s69, 1
    %s71 = scalar_select %p68, %s69, %s70
    %p74 = pneg %p68
    %p75 = scmp.eq.s32.totalorder %s10, 3
    %p76 = por %p74, %p75
    %p77 = scmp.ne.s32.totalorder %s69, %s72
    %p78 = scmp.eq.s32.totalorder %s10, 0
    %p79 = por %p77, %p78
    %p80 = scmp.ne.s32.totalorder %s69, %s72
    %p81 = scmp.eq.s32.totalorder %s15, 3
    %p82 = por %p80, %p81
    %p83 = scmp.ne.s32.totalorder %s72, %s73
    %p84 = scmp.eq.s32.totalorder %s15, 0
    %p85 = por %p83, %p84
    %p86 = scmp.ne.s32.totalorder %s72, %s73
    %p87 = scmp.eq.s32.totalorder %s16, 3
    %p88 = por %p86, %p87
    %p90 = scmp.ne.s32.totalorder %s73, %s89
    %p91 = scmp.eq.s32.totalorder %s16, 0
    %p92 = por %p90, %p91
    %s93 = ssub.s32 %s19, %s28
    %p94 = scmp.eq.s32.totalorder %s93, 0
    %s96 = sadd.s32 %s95, 1
    %s97 = scalar_select %p94, %s95, %s96
    %p100 = pneg %p94
    %p101 = scmp.eq.s32.totalorder %s10, 3
    %p102 = por %p100, %p101
    %p103 = scmp.ne.s32.totalorder %s95, %s98
    %p104 = scmp.eq.s32.totalorder %s10, 0
    %p105 = por %p103, %p104
    %p106 = scmp.ne.s32.totalorder %s95, %s98
    %p107 = scmp.eq.s32.totalorder %s15, 3
    %p108 = por %p106, %p107
    %p109 = scmp.ne.s32.totalorder %s98, %s99
    %p110 = scmp.eq.s32.totalorder %s15, 0
    %p111 = por %p109, %p110
    %p112 = scmp.ne.s32.totalorder %s98, %s99
    %p113 = scmp.eq.s32.totalorder %s16, 3
    %p114 = por %p112, %p113
    %p116 = scmp.ne.s32.totalorder %s99, %s115
    %p117 = scmp.eq.s32.totalorder %s16, 0
    %p118 = por %p116, %p117
    %s119 = ssub.s32 %s19, %s28
    %p120 = scmp.eq.s32.totalorder %s119, 0
    %s122 = sadd.s32 %s121, 1
    %s123 = scalar_select %p120, %s121, %s122
    %p126 = pneg %p120
    %p127 = scmp.eq.s32.totalorder %s10, 3
    %p128 = por %p126, %p127
    %p129 = scmp.ne.s32.totalorder %s121, %s124
    %p130 = scmp.eq.s32.totalorder %s10, 0
    %p131 = por %p129, %p130
    %p132 = scmp.ne.s32.totalorder %s121, %s124
    %p133 = scmp.eq.s32.totalorder %s15, 3
    %p134 = por %p132, %p133
    %p135 = scmp.ne.s32.totalorder %s124, %s125
    %p136 = scmp.eq.s32.totalorder %s15, 0
    %p137 = por %p135, %p136
    %p138 = scmp.ne.s32.totalorder %s124, %s125
    %p139 = scmp.eq.s32.totalorder %s16, 3
    %p140 = por %p138, %p139
    %p142 = scmp.ne.s32.totalorder %s125, %s141
    %p143 = scmp.eq.s32.totalorder %s16, 0
    %p144 = por %p142, %p143
    %s145 = ssub.s32 %s17, %s36
    %s146 = ssub.s32 %s18, %s32
    %s147 = sor.u32 %s145, %s146
    %s148 = ssub.s32 %s19, %s28
    %s149 = sor.u32 %s147, %s148
    %p150 = scmp.eq.s32.totalorder %s149, 0
    %s152 = sadd.s32 %s151, 1
    %s153 = scalar_select %p150, %s151, %s152
    %p156 = pneg %p150
    %p157 = scmp.eq.s32.totalorder %s10, 3
    %p158 = por %p156, %p157
    %p159 = scmp.ne.s32.totalorder %s151, %s154
    %p160 = scmp.eq.s32.totalorder %s10, 0
    %p161 = por %p159, %p160
    %p162 = scmp.ne.s32.totalorder %s151, %s154
    %p163 = scmp.eq.s32.totalorder %s15, 3
    %p164 = por %p162, %p163
    %p165 = scmp.ne.s32.totalorder %s154, %s155
    %p166 = scmp.eq.s32.totalorder %s15, 0
    %p167 = por %p165, %p166
    %p168 = scmp.ne.s32.totalorder %s154, %s155
    %p169 = scmp.eq.s32.totalorder %s16, 3
    %p170 = por %p168, %p169
    %p172 = scmp.ne.s32.totalorder %s155, %s171
    %p173 = scmp.eq.s32.totalorder %s16, 0
    %p174 = por %p172, %p173
    %p175 = scmp.le.s32.totalorder 1, %s10
    %p176 = scmp.lt.s32.totalorder %s10, 5
    %p177 = pnand %p175, %p176
    %p178 = pneg %p177
    // Predicated region
    $region9: #{_lambda_.8} parent=5 // pred_check
      _
    $region10: #{_lambda_.8} parent=5 // pred_check_branch
      %180 = sbr.rel (%p177) target = $region12
    $region11: #{_lambda_.8} parent=5 // pred_region
      %s181 = ssub.s32 %s10, 1
      // Predicated region
      $region13: #{_lambda_.8} parent=11 // pred_check
        %p182 = pneg %p111
      $region14: #{_lambda_.8} parent=11 // pred_check_branch
        %184 = sbr.rel (%p182) target = $region16
      $region15: #{_lambda_.8} parent=11 // pred_region
        %p185 = scmp.lt.s32.totalorder %s22, 0
        %s186 = scalar_select %p185, %s22, 0
        %s187 = scalar_lea.vmem %s2, %s186
      $region16: #{_lambda_.8} parent=11 // pred_fallthru
        _
      // Predicated region
      $region17: #{_lambda_.8} parent=11 // pred_check
        %p188 = pneg %p137
      $region18: #{_lambda_.8} parent=11 // pred_check_branch
        %190 = sbr.rel (%p188) target = $region20
      $region19: #{_lambda_.8} parent=11 // pred_region
        %p191 = scmp.lt.s32.totalorder %s22, 0
        %s192 = scalar_select %p191, %s22, 0
        %s193 = scalar_lea.vmem %s3, %s192
      $region20: #{_lambda_.8} parent=11 // pred_fallthru
        _
    $region12: #{_lambda_.8} parent=5 // pred_fallthru
      _
    %p194 = scmp.lt.s32.totalorder %s10, 4
    // Predicated region
    $region21: #{_lambda_.8} parent=5 // pred_check
      %p195 = pneg %p194
    $region22: #{_lambda_.8} parent=5 // pred_check_branch
      %197 = sbr.rel (%p195) target = $region24
    $region23: #{_lambda_.8} parent=5 // pred_region
      // Predicated region
      $region25: #{_lambda_.8} parent=23 // pred_check
        %p198 = pneg %p51
      $region26: #{_lambda_.8} parent=23 // pred_check_branch
        %200 = sbr.rel (%p198) target = $region28
      $region27: #{_lambda_.8} parent=23 // pred_region
        %s201 = smul.u32 64, %s18
        %p202 = scmp.lt.s32.totalorder %s17, 3
        %s203 = scalar_select %p202, %s17, 3
        %p204 = scmp.lt.s32.totalorder %s201, 63
        %s205 = scalar_select %p204, %s201, 63
        %s206 = smul.addr %s203, 64
        %s207 = sadd.s32 %s205, %s206
        %s208 = smul.addr %s207, 4
        %s209 = scalar_lea.vmem %s0, %s208
        %s210 = smul.u32 64, %s18
      $region28: #{_lambda_.8} parent=23 // pred_fallthru
        _
      // Predicated region
      $region29: #{_lambda_.8} parent=23 // pred_check
        %p211 = pneg %p79
      $region30: #{_lambda_.8} parent=23 // pred_check_branch
        %213 = sbr.rel (%p211) target = $region32
      $region31: #{_lambda_.8} parent=23 // pred_region
        %p214 = scmp.lt.s32.totalorder %s17, 3
        %s215 = scalar_select %p214, %s17, 3
        %p216 = scmp.lt.s32.totalorder %s19, 0
        %s217 = scalar_select %p216, %s19, 0
        %s218 = smul.addr %s215, 16
        %s219 = sadd.s32 %s217, %s218
        %s220 = smul.addr %s219, 4
        %s221 = scalar_lea.vmem %s1, %s220
      $region32: #{_lambda_.8} parent=23 // pred_fallthru
        _
    $region24: #{_lambda_.8} parent=5 // pred_fallthru
      _
    %p222 = scmp.le.s32.totalorder 1, %s10
    %p223 = scmp.lt.s32.totalorder %s10, 5
    %p224 = pnand %p222, %p223
    %p225 = pneg %p224
    // Predicated region
    $region33: #{_lambda_.8} parent=5 // pred_check
      _
    $region34: #{_lambda_.8} parent=5 // pred_check_branch
      %227 = sbr.rel (%p224) target = $region36
    $region35: #{_lambda_.8} parent=5 // pred_region
      %s228 = ssub.s32 %s10, 1
      %s229 = smul.u32 64, %s21
      %p230 = scmp.lt.s32.totalorder %s20, 3
      %s231 = scalar_select %p230, %s20, 3
      %p232 = scmp.lt.s32.totalorder %s229, 63
      %s233 = scalar_select %p232, %s229, 63
      %s234 = smul.addr %s231, 64
      %s235 = sadd.s32 %s233, %s234
      %s236 = smul.addr %s235, 4
      %s237 = scalar_lea.vmem %s0, %s236
      %p238 = pneg %p57
      %p239 = pneg %p54
      %p240 = scmp.lt.s32.totalorder %s20, 3
      %s241 = scalar_select %p240, %s20, 3
      %p242 = scmp.lt.s32.totalorder %s22, 0
      %s243 = scalar_select %p242, %s22, 0
      %s244 = smul.addr %s241, 16
      %s245 = sadd.s32 %s243, %s244
      %s246 = smul.addr %s245, 4
      %s247 = scalar_lea.vmem %s1, %s246
      %p248 = pneg %p85
      %p249 = pneg %p82
      %p250 = scmp.lt.s32.totalorder %s22, 0
      %s251 = scalar_select %p250, %s22, 0
      %s252 = scalar_lea.vmem %s2, %s251
      %p253 = pneg %p111
      %p254 = pneg %p108
      %p255 = scmp.lt.s32.totalorder %s22, 0
      %s256 = scalar_select %p255, %s22, 0
      %s257 = scalar_lea.vmem %s3, %s256
      %p258 = pneg %p137
      %p259 = pneg %p134
      %p260 = pneg %p167
      %p261 = pneg %p164
      %s262 = smul.u32 64, %s21
      %p263 = scmp.lt.s32.totalorder %s20, 3
      %s264 = scalar_select %p263, %s20, 3
      %p265 = scmp.lt.s32.totalorder %s262, 63
      %s266 = scalar_select %p265, %s262, 63
      %p267 = scmp.lt.s32.totalorder %s22, 0
      %s268 = scalar_select %p267, %s22, 0
      %s269 = sadd.s32 %s268, %s266
      %s270 = smul.addr %s264, 64
      %s271 = sadd.s32 %s269, %s270
      %s272 = smul.addr %s271, 4
      %s273 = scalar_lea.vmem %s4, %s272
      %s274 = smul.u32 64, %s21
      %p275 = scmp.lt.s32.totalorder %s20, 3
      %s276 = scalar_select %p275, %s20, 3
      %p277 = scmp.lt.s32.totalorder %s274, 63
      %s278 = scalar_select %p277, %s274, 63
      %s279 = smul.addr %s276, 64
      %s280 = sadd.s32 %s278, %s279
      %s281 = smul.addr %s280, 4
      %s282 = scalar_lea.vmem %s0, %s281
      %s283 = smul.u32 64, %s21
      %p284 = scmp.lt.s32.totalorder %s20, 3
      %s285 = scalar_select %p284, %s20, 3
      %p286 = scmp.lt.s32.totalorder %s22, 0
      %s287 = scalar_select %p286, %s22, 0
      %s288 = smul.addr %s285, 16
      %s289 = sadd.s32 %s287, %s288
      %s290 = smul.addr %s289, 4
      %s291 = scalar_lea.vmem %s1, %s290
      %p292 = scmp.lt.s32.totalorder %s22, 0
      %s293 = scalar_select %p292, %s22, 0
      %s294 = scalar_lea.vmem %s2, %s293
      %p295 = scmp.lt.s32.totalorder %s22, 0
      %s296 = scalar_select %p295, %s22, 0
      %s297 = scalar_lea.vmem %s3, %s296
      %s298 = smul.u32 64, %s21
      %p299 = scmp.lt.s32.totalorder %s20, 3
      %s300 = scalar_select %p299, %s20, 3
      %p301 = scmp.lt.s32.totalorder %s298, 63
      %s302 = scalar_select %p301, %s298, 63
      %p303 = scmp.lt.s32.totalorder %s22, 0
      %s304 = scalar_select %p303, %s22, 0
      %s305 = sadd.s32 %s304, %s302
      %s306 = smul.addr %s300, 64
      %s307 = sadd.s32 %s305, %s306
      %s308 = smul.addr %s307, 4
      %s309 = scalar_lea.vmem %s4, %s308
      %s310 = smul.u32 64, %s21
      %v312 = vld [vmem:[%s282] sm:$0xf]
      %v313 = vld [vmem:[%s282 + $0x4] sm:$0xf]
      %v314 = vld [vmem:[%s282 + $0x8] sm:$0xf]
      %v315 = vld [vmem:[%s282 + $0xc] sm:$0xf]
      %v316 = vld [vmem:[%s282 + $0x10] sm:$0xf]
      %v317 = vld [vmem:[%s282 + $0x14] sm:$0xf]
      %v318 = vld [vmem:[%s282 + $0x18] sm:$0xf]
      %v319 = vld [vmem:[%s282 + $0x1c] sm:$0xf]
      %v320 = vld [vmem:[%s282 + $0x20] sm:$0xf]
      %v321 = vld [vmem:[%s282 + $0x24] sm:$0xf]
      %v322 = vld [vmem:[%s282 + $0x28] sm:$0xf]
      %v323 = vld [vmem:[%s282 + $0x2c] sm:$0xf]
      %v324 = vld [vmem:[%s282 + $0x30] sm:$0xf]
      %v325 = vld [vmem:[%s282 + $0x34] sm:$0xf]
      %v326 = vld [vmem:[%s282 + $0x38] sm:$0xf]
      %v327 = vld [vmem:[%s282 + $0x3c] sm:$0xf]
      %v328 = vld [vmem:[%s282 + $0x40] sm:$0xf]
      %v329 = vld [vmem:[%s282 + $0x44] sm:$0xf]
      %v330 = vld [vmem:[%s282 + $0x48] sm:$0xf]
      %v331 = vld [vmem:[%s282 + $0x4c] sm:$0xf]
      %v332 = vld [vmem:[%s282 + $0x50] sm:$0xf]
      %v333 = vld [vmem:[%s282 + $0x54] sm:$0xf]
      %v334 = vld [vmem:[%s282 + $0x58] sm:$0xf]
      %v335 = vld [vmem:[%s282 + $0x5c] sm:$0xf]
      %v336 = vld [vmem:[%s282 + $0x60] sm:$0xf]
      %v337 = vld [vmem:[%s282 + $0x64] sm:$0xf]
      %v338 = vld [vmem:[%s282 + $0x68] sm:$0xf]
      %v339 = vld [vmem:[%s282 + $0x6c] sm:$0xf]
      %v340 = vld [vmem:[%s282 + $0x70] sm:$0xf]
      %v341 = vld [vmem:[%s282 + $0x74] sm:$0xf]
      %v342 = vld [vmem:[%s282 + $0x78] sm:$0xf]
      %v343 = vld [vmem:[%s282 + $0x7c] sm:$0xf]
      %v344 = vld [vmem:[%s282 + $0x80] sm:$0xf]
      %v345 = vld [vmem:[%s282 + $0x84] sm:$0xf]
      %v346 = vld [vmem:[%s282 + $0x88] sm:$0xf]
      %v347 = vld [vmem:[%s282 + $0x8c] sm:$0xf]
      %v348 = vld [vmem:[%s282 + $0x90] sm:$0xf]
      %v349 = vld [vmem:[%s282 + $0x94] sm:$0xf]
      %v350 = vld [vmem:[%s282 + $0x98] sm:$0xf]
      %v351 = vld [vmem:[%s282 + $0x9c] sm:$0xf]
      %v352 = vld [vmem:[%s282 + $0xa0] sm:$0xf]
      %v353 = vld [vmem:[%s282 + $0xa4] sm:$0xf]
      %v354 = vld [vmem:[%s282 + $0xa8] sm:$0xf]
      %v355 = vld [vmem:[%s282 + $0xac] sm:$0xf]
      %v356 = vld [vmem:[%s282 + $0xb0] sm:$0xf]
      %v357 = vld [vmem:[%s282 + $0xb4] sm:$0xf]
      %v358 = vld [vmem:[%s282 + $0xb8] sm:$0xf]
      %v359 = vld [vmem:[%s282 + $0xbc] sm:$0xf]
      %v360 = vld [vmem:[%s282 + $0xc0] sm:$0xf]
      %v361 = vld [vmem:[%s282 + $0xc4] sm:$0xf]
      %v362 = vld [vmem:[%s282 + $0xc8] sm:$0xf]
      %v363 = vld [vmem:[%s282 + $0xcc] sm:$0xf]
      %v364 = vld [vmem:[%s282 + $0xd0] sm:$0xf]
      %v365 = vld [vmem:[%s282 + $0xd4] sm:$0xf]
      %v366 = vld [vmem:[%s282 + $0xd8] sm:$0xf]
      %v367 = vld [vmem:[%s282 + $0xdc] sm:$0xf]
      %v368 = vld [vmem:[%s282 + $0xe0] sm:$0xf]
      %v369 = vld [vmem:[%s282 + $0xe4] sm:$0xf]
      %v370 = vld [vmem:[%s282 + $0xe8] sm:$0xf]
      %v371 = vld [vmem:[%s282 + $0xec] sm:$0xf]
      %v372 = vld [vmem:[%s282 + $0xf0] sm:$0xf]
      %v373 = vld [vmem:[%s282 + $0xf4] sm:$0xf]
      %v374 = vld [vmem:[%s282 + $0xf8] sm:$0xf]
      %v375 = vld [vmem:[%s282 + $0xfc] sm:$0xf]
      %v376 = vld [vmem:[%s291] sm:$0xf]
      %v377 = vld [vmem:[%s291 + $0x4] sm:$0xf]
      %v378 = vld [vmem:[%s291 + $0x8] sm:$0xf]
      %v379 = vld [vmem:[%s291 + $0xc] sm:$0xf]
      %v380 = vld [vmem:[%s291 + $0x10] sm:$0xf]
      %v381 = vld [vmem:[%s291 + $0x14] sm:$0xf]
      %v382 = vld [vmem:[%s291 + $0x18] sm:$0xf]
      %v383 = vld [vmem:[%s291 + $0x1c] sm:$0xf]
      %v384 = vld [vmem:[%s291 + $0x20] sm:$0xf]
      %v385 = vld [vmem:[%s291 + $0x24] sm:$0xf]
      %v386 = vld [vmem:[%s291 + $0x28] sm:$0xf]
      %v387 = vld [vmem:[%s291 + $0x2c] sm:$0xf]
      %v388 = vld [vmem:[%s291 + $0x30] sm:$0xf]
      %v389 = vld [vmem:[%s291 + $0x34] sm:$0xf]
      %v390 = vld [vmem:[%s291 + $0x38] sm:$0xf]
      %v391 = vld [vmem:[%s291 + $0x3c] sm:$0xf]
      %v456 = vunpack.c.l.b16 %v312
      %v457 = vunpack.c.l.b16 %v313
      %v458 = vunpack.c.l.b16 %v314
      %v459 = vunpack.c.l.b16 %v315
      %v460 = vunpack.c.l.b16 %v316
      %v461 = vunpack.c.l.b16 %v317
      %v462 = vunpack.c.l.b16 %v318
      %v463 = vunpack.c.l.b16 %v319
      %v464 = vunpack.c.l.b16 %v320
      %v465 = vunpack.c.l.b16 %v321
      %v466 = vunpack.c.l.b16 %v322
      %v467 = vunpack.c.l.b16 %v323
      %v468 = vunpack.c.l.b16 %v324
      %v469 = vunpack.c.l.b16 %v325
      %v470 = vunpack.c.l.b16 %v326
      %v471 = vunpack.c.l.b16 %v327
      %v472 = vunpack.c.l.b16 %v328
      %v473 = vunpack.c.l.b16 %v329
      %v474 = vunpack.c.l.b16 %v330
      %v475 = vunpack.c.l.b16 %v331
      %v476 = vunpack.c.l.b16 %v332
      %v477 = vunpack.c.l.b16 %v333
      %v478 = vunpack.c.l.b16 %v334
      %v479 = vunpack.c.l.b16 %v335
      %v480 = vunpack.c.l.b16 %v336
      %v481 = vunpack.c.l.b16 %v337
      %v482 = vunpack.c.l.b16 %v338
      %v483 = vunpack.c.l.b16 %v339
      %v484 = vunpack.c.l.b16 %v340
      %v485 = vunpack.c.l.b16 %v341
      %v486 = vunpack.c.l.b16 %v342
      %v487 = vunpack.c.l.b16 %v343
      %v488 = vunpack.c.l.b16 %v344
      %v489 = vunpack.c.l.b16 %v345
      %v490 = vunpack.c.l.b16 %v346
      %v491 = vunpack.c.l.b16 %v347
      %v492 = vunpack.c.l.b16 %v348
      %v493 = vunpack.c.l.b16 %v349
      %v494 = vunpack.c.l.b16 %v350
      %v495 = vunpack.c.l.b16 %v351
      %v496 = vunpack.c.l.b16 %v352
      %v497 = vunpack.c.l.b16 %v353
      %v498 = vunpack.c.l.b16 %v354
      %v499 = vunpack.c.l.b16 %v355
      %v500 = vunpack.c.l.b16 %v356
      %v501 = vunpack.c.l.b16 %v357
      %v502 = vunpack.c.l.b16 %v358
      %v503 = vunpack.c.l.b16 %v359
      %v504 = vunpack.c.l.b16 %v360
      %v505 = vunpack.c.l.b16 %v361
      %v506 = vunpack.c.l.b16 %v362
      %v507 = vunpack.c.l.b16 %v363
      %v508 = vunpack.c.l.b16 %v364
      %v509 = vunpack.c.l.b16 %v365
      %v510 = vunpack.c.l.b16 %v366
      %v511 = vunpack.c.l.b16 %v367
      %v512 = vunpack.c.l.b16 %v368
      %v513 = vunpack.c.l.b16 %v369
      %v514 = vunpack.c.l.b16 %v370
      %v515 = vunpack.c.l.b16 %v371
      %v516 = vunpack.c.l.b16 %v372
      %v517 = vunpack.c.l.b16 %v373
      %v518 = vunpack.c.l.b16 %v374
      %v519 = vunpack.c.l.b16 %v375
      %v520 = vpack.c.b16 %v457, %v456
      %v521 = vpack.c.b16 %v459, %v458
      %v522 = vpack.c.b16 %v461, %v460
      %v523 = vpack.c.b16 %v463, %v462
      %v524 = vpack.c.b16 %v465, %v464
      %v525 = vpack.c.b16 %v467, %v466
      %v526 = vpack.c.b16 %v469, %v468
      %v527 = vpack.c.b16 %v471, %v470
      %v528 = vpack.c.b16 %v473, %v472
      %v529 = vpack.c.b16 %v475, %v474
      %v530 = vpack.c.b16 %v477, %v476
      %v531 = vpack.c.b16 %v479, %v478
      %v532 = vpack.c.b16 %v481, %v480
      %v533 = vpack.c.b16 %v483, %v482
      %v534 = vpack.c.b16 %v485, %v484
      %v535 = vpack.c.b16 %v487, %v486
      %v536 = vpack.c.b16 %v489, %v488
      %v537 = vpack.c.b16 %v491, %v490
      %v538 = vpack.c.b16 %v493, %v492
      %v539 = vpack.c.b16 %v495, %v494
      %v540 = vpack.c.b16 %v497, %v496
      %v541 = vpack.c.b16 %v499, %v498
      %v542 = vpack.c.b16 %v501, %v500
      %v543 = vpack.c.b16 %v503, %v502
      %v544 = vpack.c.b16 %v505, %v504
      %v545 = vpack.c.b16 %v507, %v506
      %v546 = vpack.c.b16 %v509, %v508
      %v547 = vpack.c.b16 %v511, %v510
      %v548 = vpack.c.b16 %v513, %v512
      %v549 = vpack.c.b16 %v515, %v514
      %v550 = vpack.c.b16 %v517, %v516
      %v551 = vpack.c.b16 %v519, %v518
      %v600 = vunpack.c.l.b16 %v376
      %v601 = vunpack.c.l.b16 %v377
      %v602 = vunpack.c.l.b16 %v378
      %v603 = vunpack.c.l.b16 %v379
      %v604 = vunpack.c.l.b16 %v380
      %v605 = vunpack.c.l.b16 %v381
      %v606 = vunpack.c.l.b16 %v382
      %v607 = vunpack.c.l.b16 %v383
      %v608 = vunpack.c.l.b16 %v384
      %v609 = vunpack.c.l.b16 %v385
      %v610 = vunpack.c.l.b16 %v386
      %v611 = vunpack.c.l.b16 %v387
      %v612 = vunpack.c.l.b16 %v388
      %v613 = vunpack.c.l.b16 %v389
      %v614 = vunpack.c.l.b16 %v390
      %v615 = vunpack.c.l.b16 %v391
      %v616 = vpack.c.b16 %v601, %v600
      %v617 = vpack.c.b16 %v603, %v602
      %v618 = vpack.c.b16 %v605, %v604
      %v619 = vpack.c.b16 %v607, %v606
      %v620 = vpack.c.b16 %v609, %v608
      %v621 = vpack.c.b16 %v611, %v610
      %v622 = vpack.c.b16 %v613, %v612
      %v623 = vpack.c.b16 %v615, %v614
      %632 = vmatprep.subr.bf16.mxu0 0
      %633 = vmatpush1.bf16.msra.mxu0 %v616
      %634 = vmatprep.subr.bf16.mxu0 0
      %635 = vmatpush1.bf16.msra.mxu0 %v617
      %636 = vmatprep.subr.bf16.mxu0 0
      %637 = vmatpush1.bf16.msra.mxu0 %v618
      %638 = vmatprep.subr.bf16.mxu0 0
      %639 = vmatpush1.bf16.msra.mxu0 %v619
      %640 = vmatprep.subr.bf16.mxu0 0
      %641 = vmatpush1.bf16.msra.mxu0 %v620
      %642 = vmatprep.subr.bf16.mxu0 0
      %643 = vmatpush1.bf16.msra.mxu0 %v621
      %644 = vmatprep.subr.bf16.mxu0 0
      %645 = vmatpush1.bf16.msra.mxu0 %v622
      %646 = vmatprep.subr.bf16.mxu0 0
      %647 = vmatpush1.bf16.msra.mxu0 %v623
      %648 = vmatprep.subr.bf16.mxu0 0
      %649 = vmatpush1.bf16.msra.mxu0 0
      %650 = vmatprep.subr.bf16.mxu0 0
      %651 = vmatpush1.bf16.msra.mxu0 0
      %652 = vmatprep.subr.bf16.mxu0 0
      %653 = vmatpush1.bf16.msra.mxu0 0
      %654 = vmatprep.subr.bf16.mxu0 0
      %655 = vmatpush1.bf16.msra.mxu0 0
      %656 = vmatprep.subr.bf16.mxu0 0
      %657 = vmatpush1.bf16.msra.mxu0 0
      %658 = vmatprep.subr.bf16.mxu0 0
      %659 = vmatpush1.bf16.msra.mxu0 0
      %660 = vmatprep.subr.bf16.mxu0 0
      %661 = vmatpush1.bf16.msra.mxu0 0
      %662 = vmatprep.subr.bf16.mxu0 0
      %663 = vmatpush1.bf16.msra.mxu0 0
      %664 = vmatprep.mubr.bf16.mxu0 0
      %665 = vmatmul.mubr.bf16.gmra.mrb[0].mxu0 %v520
      %v666 = vpop.f32.mrb[0].mxu0
      %v667 = vadd.f32 0.0, %v666
      %v668 = vpop.f32.mrb[0].mxu0
      %v669 = vpop.f32.mrb[0].mxu0
      %v670 = vadd.f32 0.0, %v669
      %v671 = vpop.f32.mrb[0].mxu0
      %672 = vmatprep.mubr.bf16.mxu0 0
      %673 = vmatmul.mubr.bf16.gmra.mrb[0].mxu0 %v521
      %v674 = vpop.f32.mrb[0].mxu0
      %v675 = vadd.f32 0.0, %v674
      %v676 = vpop.f32.mrb[0].mxu0
      %v677 = vpop.f32.mrb[0].mxu0
      %v678 = vadd.f32 0.0, %v677
      %v679 = vpop.f32.mrb[0].mxu0
      %680 = vmatprep.mubr.bf16.mxu0 0
      %681 = vmatmul.mubr.bf16.gmra.mrb[0].mxu0 %v522
      %v682 = vpop.f32.mrb[0].mxu0
      %v683 = vadd.f32 0.0, %v682
      %v684 = vpop.f32.mrb[0].mxu0
      %v685 = vpop.f32.mrb[0].mxu0
      %v686 = vadd.f32 0.0, %v685
      %v687 = vpop.f32.mrb[0].mxu0
      %688 = vmatprep.mubr.bf16.mxu0 0
      %689 = vmatmul.mubr.bf16.gmra.mrb[0].mxu0 %v523
      %v690 = vpop.f32.mrb[0].mxu0
      %v691 = vadd.f32 0.0, %v690
      %v692 = vpop.f32.mrb[0].mxu0
      %v693 = vpop.f32.mrb[0].mxu0
      %v694 = vadd.f32 0.0, %v693
      %v695 = vpop.f32.mrb[0].mxu0
      %696 = vmatprep.mubr.bf16.mxu0 0
      %697 = vmatmul.mubr.bf16.gmra.mrb[0].mxu0 %v524
      %v698 = vpop.f32.mrb[0].mxu0
      %v699 = vadd.f32 0.0, %v698
      %v700 = vpop.f32.mrb[0].mxu0
      %v701 = vpop.f32.mrb[0].mxu0
      %v702 = vadd.f32 0.0, %v701
      %v703 = vpop.f32.mrb[0].mxu0
      %704 = vmatprep.mubr.bf16.mxu0 0
      %705 = vmatmul.mubr.bf16.gmra.mrb[0].mxu0 %v525
      %v706 = vpop.f32.mrb[0].mxu0
      %v707 = vadd.f32 0.0, %v706
      %v708 = vpop.f32.mrb[0].mxu0
      %v709 = vpop.f32.mrb[0].mxu0
      %v710 = vadd.f32 0.0, %v709
      %v711 = vpop.f32.mrb[0].mxu0
      %712 = vmatprep.mubr.bf16.mxu0 0
      %713 = vmatmul.mubr.bf16.gmra.mrb[0].mxu0 %v526
      %v714 = vpop.f32.mrb[0].mxu0
      %v715 = vadd.f32 0.0, %v714
      %v716 = vpop.f32.mrb[0].mxu0
      %v717 = vpop.f32.mrb[0].mxu0
      %v718 = vadd.f32 0.0, %v717
      %v719 = vpop.f32.mrb[0].mxu0
      %720 = vmatprep.mubr.bf16.mxu0 0
      %721 = vmatmul.mubr.bf16.gmra.mrb[0].mxu0 %v527
      %v722 = vpop.f32.mrb[0].mxu0
      %v723 = vadd.f32 0.0, %v722
      %v724 = vpop.f32.mrb[0].mxu0
      %v725 = vpop.f32.mrb[0].mxu0
      %v726 = vadd.f32 0.0, %v725
      %v727 = vpop.f32.mrb[0].mxu0
      %728 = vmatprep.mubr.bf16.mxu0 0
      %729 = vmatmul.mubr.bf16.gmra.mrb[0].mxu0 %v528
      %v730 = vpop.f32.mrb[0].mxu0
      %v731 = vadd.f32 0.0, %v730
      %v732 = vpop.f32.mrb[0].mxu0
      %v733 = vpop.f32.mrb[0].mxu0
      %v734 = vadd.f32 0.0, %v733
      %v735 = vpop.f32.mrb[0].mxu0
      %736 = vmatprep.mubr.bf16.mxu0 0
      %737 = vmatmul.mubr.bf16.gmra.mrb[0].mxu0 %v529
      %v738 = vpop.f32.mrb[0].mxu0
      %v739 = vadd.f32 0.0, %v738
      %v740 = vpop.f32.mrb[0].mxu0
      %v741 = vpop.f32.mrb[0].mxu0
      %v742 = vadd.f32 0.0, %v741
      %v743 = vpop.f32.mrb[0].mxu0
      %744 = vmatprep.mubr.bf16.mxu0 0
      %745 = vmatmul.mubr.bf16.gmra.mrb[0].mxu0 %v530
      %v746 = vpop.f32.mrb[0].mxu0
      %v747 = vadd.f32 0.0, %v746
      %v748 = vpop.f32.mrb[0].mxu0
      %v749 = vpop.f32.mrb[0].mxu0
      %v750 = vadd.f32 0.0, %v749
      %v751 = vpop.f32.mrb[0].mxu0
      %752 = vmatprep.mubr.bf16.mxu0 0
      %753 = vmatmul.mubr.bf16.gmra.mrb[0].mxu0 %v531
      %v754 = vpop.f32.mrb[0].mxu0
      %v755 = vadd.f32 0.0, %v754
      %v756 = vpop.f32.mrb[0].mxu0
      %v757 = vpop.f32.mrb[0].mxu0
      %v758 = vadd.f32 0.0, %v757
      %v759 = vpop.f32.mrb[0].mxu0
      %760 = vmatprep.mubr.bf16.mxu0 0
      %761 = vmatmul.mubr.bf16.gmra.mrb[0].mxu0 %v532
      %v762 = vpop.f32.mrb[0].mxu0
      %v763 = vadd.f32 0.0, %v762
      %v764 = vpop.f32.mrb[0].mxu0
      %v765 = vpop.f32.mrb[0].mxu0
      %v766 = vadd.f32 0.0, %v765
      %v767 = vpop.f32.mrb[0].mxu0
      %768 = vmatprep.mubr.bf16.mxu0 0
      %769 = vmatmul.mubr.bf16.gmra.mrb[0].mxu0 %v533
      %v770 = vpop.f32.mrb[0].mxu0
      %v771 = vadd.f32 0.0, %v770
      %v772 = vpop.f32.mrb[0].mxu0
      %v773 = vpop.f32.mrb[0].mxu0
      %v774 = vadd.f32 0.0, %v773
      %v775 = vpop.f32.mrb[0].mxu0
      %776 = vmatprep.mubr.bf16.mxu0 0
      %777 = vmatmul.mubr.bf16.gmra.mrb[0].mxu0 %v534
      %v778 = vpop.f32.mrb[0].mxu0
      %v779 = vadd.f32 0.0, %v778
      %v780 = vpop.f32.mrb[0].mxu0
      %v781 = vpop.f32.mrb[0].mxu0
      %v782 = vadd.f32 0.0, %v781
      %v783 = vpop.f32.mrb[0].mxu0
      %784 = vmatprep.mubr.bf16.mxu0 0
      %785 = vmatmul.mubr.bf16.gmra.mrb[0].mxu0 %v535
      %v786 = vpop.f32.mrb[0].mxu0
      %v787 = vadd.f32 0.0, %v786
      %v788 = vpop.f32.mrb[0].mxu0
      %v789 = vpop.f32.mrb[0].mxu0
      %v790 = vadd.f32 0.0, %v789
      %v791 = vpop.f32.mrb[0].mxu0
      %792 = vmatprep.mubr.bf16.mxu0 0
      %793 = vmatmul.mubr.bf16.gmra.mrb[0].mxu0 %v536
      %v794 = vpop.f32.mrb[0].mxu0
      %v795 = vadd.f32 0.0, %v794
      %v796 = vpop.f32.mrb[0].mxu0
      %v797 = vpop.f32.mrb[0].mxu0
      %v798 = vadd.f32 0.0, %v797
      %v799 = vpop.f32.mrb[0].mxu0
      %800 = vmatprep.mubr.bf16.mxu0 0
      %801 = vmatmul.mubr.bf16.gmra.mrb[0].mxu0 %v537
      %v802 = vpop.f32.mrb[0].mxu0
      %v803 = vadd.f32 0.0, %v802
      %v804 = vpop.f32.mrb[0].mxu0
      %v805 = vpop.f32.mrb[0].mxu0
      %v806 = vadd.f32 0.0, %v805
      %v807 = vpop.f32.mrb[0].mxu0
      %808 = vmatprep.mubr.bf16.mxu0 0
      %809 = vmatmul.mubr.bf16.gmra.mrb[0].mxu0 %v538
      %v810 = vpop.f32.mrb[0].mxu0
      %v811 = vadd.f32 0.0, %v810
      %v812 = vpop.f32.mrb[0].mxu0
      %v813 = vpop.f32.mrb[0].mxu0
      %v814 = vadd.f32 0.0, %v813
      %v815 = vpop.f32.mrb[0].mxu0
      %816 = vmatprep.mubr.bf16.mxu0 0
      %817 = vmatmul.mubr.bf16.gmra.mrb[0].mxu0 %v539
      %v818 = vpop.f32.mrb[0].mxu0
      %v819 = vadd.f32 0.0, %v818
      %v820 = vpop.f32.mrb[0].mxu0
      %v821 = vpop.f32.mrb[0].mxu0
      %v822 = vadd.f32 0.0, %v821
      %v823 = vpop.f32.mrb[0].mxu0
      %824 = vmatprep.mubr.bf16.mxu0 0
      %825 = vmatmul.mubr.bf16.gmra.mrb[0].mxu0 %v540
      %v826 = vpop.f32.mrb[0].mxu0
      %v827 = vadd.f32 0.0, %v826
      %v828 = vpop.f32.mrb[0].mxu0
      %v829 = vpop.f32.mrb[0].mxu0
      %v830 = vadd.f32 0.0, %v829
      %v831 = vpop.f32.mrb[0].mxu0
      %832 = vmatprep.mubr.bf16.mxu0 0
      %833 = vmatmul.mubr.bf16.gmra.mrb[0].mxu0 %v541
      %v834 = vpop.f32.mrb[0].mxu0
      %v835 = vadd.f32 0.0, %v834
      %v836 = vpop.f32.mrb[0].mxu0
      %v837 = vpop.f32.mrb[0].mxu0
      %v838 = vadd.f32 0.0, %v837
      %v839 = vpop.f32.mrb[0].mxu0
      %840 = vmatprep.mubr.bf16.mxu0 0
      %841 = vmatmul.mubr.bf16.gmra.mrb[0].mxu0 %v542
      %v842 = vpop.f32.mrb[0].mxu0
      %v843 = vadd.f32 0.0, %v842
      %v844 = vpop.f32.mrb[0].mxu0
      %v845 = vpop.f32.mrb[0].mxu0
      %v846 = vadd.f32 0.0, %v845
      %v847 = vpop.f32.mrb[0].mxu0
      %848 = vmatprep.mubr.bf16.mxu0 0
      %849 = vmatmul.mubr.bf16.gmra.mrb[0].mxu0 %v543
      %v850 = vpop.f32.mrb[0].mxu0
      %v851 = vadd.f32 0.0, %v850
      %v852 = vpop.f32.mrb[0].mxu0
      %v853 = vpop.f32.mrb[0].mxu0
      %v854 = vadd.f32 0.0, %v853
      %v855 = vpop.f32.mrb[0].mxu0
      %856 = vmatprep.mubr.bf16.mxu0 0
      %857 = vmatmul.mubr.bf16.gmra.mrb[0].mxu0 %v544
      %v858 = vpop.f32.mrb[0].mxu0
      %v859 = vadd.f32 0.0, %v858
      %v860 = vpop.f32.mrb[0].mxu0
      %v861 = vpop.f32.mrb[0].mxu0
      %v862 = vadd.f32 0.0, %v861
      %v863 = vpop.f32.mrb[0].mxu0
      %864 = vmatprep.mubr.bf16.mxu0 0
      %865 = vmatmul.mubr.bf16.gmra.mrb[0].mxu0 %v545
      %v866 = vpop.f32.mrb[0].mxu0
      %v867 = vadd.f32 0.0, %v866
      %v868 = vpop.f32.mrb[0].mxu0
      %v869 = vpop.f32.mrb[0].mxu0
      %v870 = vadd.f32 0.0, %v869
      %v871 = vpop.f32.mrb[0].mxu0
      %872 = vmatprep.mubr.bf16.mxu0 0
      %873 = vmatmul.mubr.bf16.gmra.mrb[0].mxu0 %v546
      %v874 = vpop.f32.mrb[0].mxu0
      %v875 = vadd.f32 0.0, %v874
      %v876 = vpop.f32.mrb[0].mxu0
      %v877 = vpop.f32.mrb[0].mxu0
      %v878 = vadd.f32 0.0, %v877
      %v879 = vpop.f32.mrb[0].mxu0
      %880 = vmatprep.mubr.bf16.mxu0 0
      %881 = vmatmul.mubr.bf16.gmra.mrb[0].mxu0 %v547
      %v882 = vpop.f32.mrb[0].mxu0
      %v883 = vadd.f32 0.0, %v882
      %v884 = vpop.f32.mrb[0].mxu0
      %v885 = vpop.f32.mrb[0].mxu0
      %v886 = vadd.f32 0.0, %v885
      %v887 = vpop.f32.mrb[0].mxu0
      %888 = vmatprep.mubr.bf16.mxu0 0
      %889 = vmatmul.mubr.bf16.gmra.mrb[0].mxu0 %v548
      %v890 = vpop.f32.mrb[0].mxu0
      %v891 = vadd.f32 0.0, %v890
      %v892 = vpop.f32.mrb[0].mxu0
      %v893 = vpop.f32.mrb[0].mxu0
      %v894 = vadd.f32 0.0, %v893
      %v895 = vpop.f32.mrb[0].mxu0
      %896 = vmatprep.mubr.bf16.mxu0 0
      %897 = vmatmul.mubr.bf16.gmra.mrb[0].mxu0 %v549
      %v898 = vpop.f32.mrb[0].mxu0
      %v899 = vadd.f32 0.0, %v898
      %v900 = vpop.f32.mrb[0].mxu0
      %v901 = vpop.f32.mrb[0].mxu0
      %v902 = vadd.f32 0.0, %v901
      %v903 = vpop.f32.mrb[0].mxu0
      %904 = vmatprep.mubr.bf16.mxu0 0
      %905 = vmatmul.mubr.bf16.gmra.mrb[0].mxu0 %v550
      %v906 = vpop.f32.mrb[0].mxu0
      %v907 = vadd.f32 0.0, %v906
      %v908 = vpop.f32.mrb[0].mxu0
      %v909 = vpop.f32.mrb[0].mxu0
      %v910 = vadd.f32 0.0, %v909
      %v911 = vpop.f32.mrb[0].mxu0
      %912 = vmatprep.mubr.bf16.mxu0 0
      %913 = vmatmul.mubr.bf16.gmra.mrb[0].mxu0 %v551
      %v914 = vpop.f32.mrb[0].mxu0
      %v915 = vadd.f32 0.0, %v914
      %v916 = vpop.f32.mrb[0].mxu0
      %v917 = vpop.f32.mrb[0].mxu0
      %v918 = vadd.f32 0.0, %v917
      %v919 = vpop.f32.mrb[0].mxu0
      %920 = vdwg.mxu0
      %v921 = vld [vmem:[%s294] sm:$0x1]
      %v923 = vlaneseq
      %v924 = vshrl.u32 %v923, 7
      %v925 = vsub.s32 0, %v924
      %v926 = vrot.slane %v921, %v925
      %v928 = vmul.f32 %v667, %v926
      %v929 = vmul.f32 %v670, %v926
      %v930 = vmul.f32 %v675, %v926
      %v931 = vmul.f32 %v678, %v926
      %v932 = vmul.f32 %v683, %v926
      %v933 = vmul.f32 %v686, %v926
      %v934 = vmul.f32 %v691, %v926
      %v935 = vmul.f32 %v694, %v926
      %v936 = vmul.f32 %v699, %v926
      %v937 = vmul.f32 %v702, %v926
      %v938 = vmul.f32 %v707, %v926
      %v939 = vmul.f32 %v710, %v926
      %v940 = vmul.f32 %v715, %v926
      %v941 = vmul.f32 %v718, %v926
      %v942 = vmul.f32 %v723, %v926
      %v943 = vmul.f32 %v726, %v926
      %v944 = vmul.f32 %v731, %v926
      %v945 = vmul.f32 %v734, %v926
      %v946 = vmul.f32 %v739, %v926
      %v947 = vmul.f32 %v742, %v926
      %v948 = vmul.f32 %v747, %v926
      %v949 = vmul.f32 %v750, %v926
      %v950 = vmul.f32 %v755, %v926
      %v951 = vmul.f32 %v758, %v926
      %v952 = vmul.f32 %v763, %v926
      %v953 = vmul.f32 %v766, %v926
      %v954 = vmul.f32 %v771, %v926
      %v955 = vmul.f32 %v774, %v926
      %v956 = vmul.f32 %v779, %v926
      %v957 = vmul.f32 %v782, %v926
      %v958 = vmul.f32 %v787, %v926
      %v959 = vmul.f32 %v790, %v926
      %v960 = vmul.f32 %v795, %v926
      %v961 = vmul.f32 %v798, %v926
      %v962 = vmul.f32 %v803, %v926
      %v963 = vmul.f32 %v806, %v926
      %v964 = vmul.f32 %v811, %v926
      %v965 = vmul.f32 %v814, %v926
      %v966 = vmul.f32 %v819, %v926
      %v967 = vmul.f32 %v822, %v926
      %v968 = vmul.f32 %v827, %v926
      %v969 = vmul.f32 %v830, %v926
      %v970 = vmul.f32 %v835, %v926
      %v971 = vmul.f32 %v838, %v926
      %v972 = vmul.f32 %v843, %v926
      %v973 = vmul.f32 %v846, %v926
      %v974 = vmul.f32 %v851, %v926
      %v975 = vmul.f32 %v854, %v926
      %v976 = vmul.f32 %v859, %v926
      %v977 = vmul.f32 %v862, %v926
      %v978 = vmul.f32 %v867, %v926
      %v979 = vmul.f32 %v870, %v926
      %v980 = vmul.f32 %v875, %v926
      %v981 = vmul.f32 %v878, %v926
      %v982 = vmul.f32 %v883, %v926
      %v983 = vmul.f32 %v886, %v926
      %v984 = vmul.f32 %v891, %v926
      %v985 = vmul.f32 %v894, %v926
      %v986 = vmul.f32 %v899, %v926
      %v987 = vmul.f32 %v902, %v926
      %v988 = vmul.f32 %v907, %v926
      %v989 = vmul.f32 %v910, %v926
      %v990 = vmul.f32 %v915, %v926
      %v991 = vmul.f32 %v918, %v926
      %v992 = vld [vmem:[%s297] sm:$0x1]
      %v994 = vlaneseq
      %v995 = vshrl.u32 %v994, 7
      %v996 = vsub.s32 0, %v995
      %v997 = vrot.slane %v992, %v996
      %v999 = vadd.f32 %v928, %v997
      %v1000 = vadd.f32 %v929, %v997
      %v1001 = vadd.f32 %v930, %v997
      %v1002 = vadd.f32 %v931, %v997
      %v1003 = vadd.f32 %v932, %v997
      %v1004 = vadd.f32 %v933, %v997
      %v1005 = vadd.f32 %v934, %v997
      %v1006 = vadd.f32 %v935, %v997
      %v1007 = vadd.f32 %v936, %v997
      %v1008 = vadd.f32 %v937, %v997
      %v1009 = vadd.f32 %v938, %v997
      %v1010 = vadd.f32 %v939, %v997
      %v1011 = vadd.f32 %v940, %v997
      %v1012 = vadd.f32 %v941, %v997
      %v1013 = vadd.f32 %v942, %v997
      %v1014 = vadd.f32 %v943, %v997
      %v1015 = vadd.f32 %v944, %v997
      %v1016 = vadd.f32 %v945, %v997
      %v1017 = vadd.f32 %v946, %v997
      %v1018 = vadd.f32 %v947, %v997
      %v1019 = vadd.f32 %v948, %v997
      %v1020 = vadd.f32 %v949, %v997
      %v1021 = vadd.f32 %v950, %v997
      %v1022 = vadd.f32 %v951, %v997
      %v1023 = vadd.f32 %v952, %v997
      %v1024 = vadd.f32 %v953, %v997
      %v1025 = vadd.f32 %v954, %v997
      %v1026 = vadd.f32 %v955, %v997
      %v1027 = vadd.f32 %v956, %v997
      %v1028 = vadd.f32 %v957, %v997
      %v1029 = vadd.f32 %v958, %v997
      %v1030 = vadd.f32 %v959, %v997
      %v1031 = vadd.f32 %v960, %v997
      %v1032 = vadd.f32 %v961, %v997
      %v1033 = vadd.f32 %v962, %v997
      %v1034 = vadd.f32 %v963, %v997
      %v1035 = vadd.f32 %v964, %v997
      %v1036 = vadd.f32 %v965, %v997
      %v1037 = vadd.f32 %v966, %v997
      %v1038 = vadd.f32 %v967, %v997
      %v1039 = vadd.f32 %v968, %v997
      %v1040 = vadd.f32 %v969, %v997
      %v1041 = vadd.f32 %v970, %v997
      %v1042 = vadd.f32 %v971, %v997
      %v1043 = vadd.f32 %v972, %v997
      %v1044 = vadd.f32 %v973, %v997
      %v1045 = vadd.f32 %v974, %v997
      %v1046 = vadd.f32 %v975, %v997
      %v1047 = vadd.f32 %v976, %v997
      %v1048 = vadd.f32 %v977, %v997
      %v1049 = vadd.f32 %v978, %v997
      %v1050 = vadd.f32 %v979, %v997
      %v1051 = vadd.f32 %v980, %v997
      %v1052 = vadd.f32 %v981, %v997
      %v1053 = vadd.f32 %v982, %v997
      %v1054 = vadd.f32 %v983, %v997
      %v1055 = vadd.f32 %v984, %v997
      %v1056 = vadd.f32 %v985, %v997
      %v1057 = vadd.f32 %v986, %v997
      %v1058 = vadd.f32 %v987, %v997
      %v1059 = vadd.f32 %v988, %v997
      %v1060 = vadd.f32 %v989, %v997
      %v1061 = vadd.f32 %v990, %v997
      %v1062 = vadd.f32 %v991, %v997
      %v1063 = vmax.f32 %v999, 0.0
      %v1064 = vmax.f32 %v1000, 0.0
      %v1065 = vmax.f32 %v1001, 0.0
      %v1066 = vmax.f32 %v1002, 0.0
      %v1067 = vmax.f32 %v1003, 0.0
      %v1068 = vmax.f32 %v1004, 0.0
      %v1069 = vmax.f32 %v1005, 0.0
      %v1070 = vmax.f32 %v1006, 0.0
      %v1071 = vmax.f32 %v1007, 0.0
      %v1072 = vmax.f32 %v1008, 0.0
      %v1073 = vmax.f32 %v1009, 0.0
      %v1074 = vmax.f32 %v1010, 0.0
      %v1075 = vmax.f32 %v1011, 0.0
      %v1076 = vmax.f32 %v1012, 0.0
      %v1077 = vmax.f32 %v1013, 0.0
      %v1078 = vmax.f32 %v1014, 0.0
      %v1079 = vmax.f32 %v1015, 0.0
      %v1080 = vmax.f32 %v1016, 0.0
      %v1081 = vmax.f32 %v1017, 0.0
      %v1082 = vmax.f32 %v1018, 0.0
      %v1083 = vmax.f32 %v1019, 0.0
      %v1084 = vmax.f32 %v1020, 0.0
      %v1085 = vmax.f32 %v1021, 0.0
      %v1086 = vmax.f32 %v1022, 0.0
      %v1087 = vmax.f32 %v1023, 0.0
      %v1088 = vmax.f32 %v1024, 0.0
      %v1089 = vmax.f32 %v1025, 0.0
      %v1090 = vmax.f32 %v1026, 0.0
      %v1091 = vmax.f32 %v1027, 0.0
      %v1092 = vmax.f32 %v1028, 0.0
      %v1093 = vmax.f32 %v1029, 0.0
      %v1094 = vmax.f32 %v1030, 0.0
      %v1095 = vmax.f32 %v1031, 0.0
      %v1096 = vmax.f32 %v1032, 0.0
      %v1097 = vmax.f32 %v1033, 0.0
      %v1098 = vmax.f32 %v1034, 0.0
      %v1099 = vmax.f32 %v1035, 0.0
      %v1100 = vmax.f32 %v1036, 0.0
      %v1101 = vmax.f32 %v1037, 0.0
      %v1102 = vmax.f32 %v1038, 0.0
      %v1103 = vmax.f32 %v1039, 0.0
      %v1104 = vmax.f32 %v1040, 0.0
      %v1105 = vmax.f32 %v1041, 0.0
      %v1106 = vmax.f32 %v1042, 0.0
      %v1107 = vmax.f32 %v1043, 0.0
      %v1108 = vmax.f32 %v1044, 0.0
      %v1109 = vmax.f32 %v1045, 0.0
      %v1110 = vmax.f32 %v1046, 0.0
      %v1111 = vmax.f32 %v1047, 0.0
      %v1112 = vmax.f32 %v1048, 0.0
      %v1113 = vmax.f32 %v1049, 0.0
      %v1114 = vmax.f32 %v1050, 0.0
      %v1115 = vmax.f32 %v1051, 0.0
      %v1116 = vmax.f32 %v1052, 0.0
      %v1117 = vmax.f32 %v1053, 0.0
      %v1118 = vmax.f32 %v1054, 0.0
      %v1119 = vmax.f32 %v1055, 0.0
      %v1120 = vmax.f32 %v1056, 0.0
      %v1121 = vmax.f32 %v1057, 0.0
      %v1122 = vmax.f32 %v1058, 0.0
      %v1123 = vmax.f32 %v1059, 0.0
      %v1124 = vmax.f32 %v1060, 0.0
      %v1125 = vmax.f32 %v1061, 0.0
      %v1126 = vmax.f32 %v1062, 0.0
      %v1127 = vpack.c.bf16 %v1064, %v1063
      %v1128 = vpack.c.bf16 %v1066, %v1065
      %v1129 = vpack.c.bf16 %v1068, %v1067
      %v1130 = vpack.c.bf16 %v1070, %v1069
      %v1131 = vpack.c.bf16 %v1072, %v1071
      %v1132 = vpack.c.bf16 %v1074, %v1073
      %v1133 = vpack.c.bf16 %v1076, %v1075
      %v1134 = vpack.c.bf16 %v1078, %v1077
      %v1135 = vpack.c.bf16 %v1080, %v1079
      %v1136 = vpack.c.bf16 %v1082, %v1081
      %v1137 = vpack.c.bf16 %v1084, %v1083
      %v1138 = vpack.c.bf16 %v1086, %v1085
      %v1139 = vpack.c.bf16 %v1088, %v1087
      %v1140 = vpack.c.bf16 %v1090, %v1089
      %v1141 = vpack.c.bf16 %v1092, %v1091
      %v1142 = vpack.c.bf16 %v1094, %v1093
      %v1143 = vpack.c.bf16 %v1096, %v1095
      %v1144 = vpack.c.bf16 %v1098, %v1097
      %v1145 = vpack.c.bf16 %v1100, %v1099
      %v1146 = vpack.c.bf16 %v1102, %v1101
      %v1147 = vpack.c.bf16 %v1104, %v1103
      %v1148 = vpack.c.bf16 %v1106, %v1105
      %v1149 = vpack.c.bf16 %v1108, %v1107
      %v1150 = vpack.c.bf16 %v1110, %v1109
      %v1151 = vpack.c.bf16 %v1112, %v1111
      %v1152 = vpack.c.bf16 %v1114, %v1113
      %v1153 = vpack.c.bf16 %v1116, %v1115
      %v1154 = vpack.c.bf16 %v1118, %v1117
      %v1155 = vpack.c.bf16 %v1120, %v1119
      %v1156 = vpack.c.bf16 %v1122, %v1121
      %v1157 = vpack.c.bf16 %v1124, %v1123
      %v1158 = vpack.c.bf16 %v1126, %v1125
      %v1191 = vunpack.c.l.b16 %v1127
      %v1192 = vunpack.c.h.b16 %v1127
      %v1193 = vunpack.c.l.b16 %v1128
      %v1194 = vunpack.c.h.b16 %v1128
      %v1195 = vunpack.c.l.b16 %v1129
      %v1196 = vunpack.c.h.b16 %v1129
      %v1197 = vunpack.c.l.b16 %v1130
      %v1198 = vunpack.c.h.b16 %v1130
      %v1199 = vunpack.c.l.b16 %v1131
      %v1200 = vunpack.c.h.b16 %v1131
      %v1201 = vunpack.c.l.b16 %v1132
      %v1202 = vunpack.c.h.b16 %v1132
      %v1203 = vunpack.c.l.b16 %v1133
      %v1204 = vunpack.c.h.b16 %v1133
      %v1205 = vunpack.c.l.b16 %v1134
      %v1206 = vunpack.c.h.b16 %v1134
      %v1207 = vunpack.c.l.b16 %v1135
      %v1208 = vunpack.c.h.b16 %v1135
      %v1209 = vunpack.c.l.b16 %v1136
      %v1210 = vunpack.c.h.b16 %v1136
      %v1211 = vunpack.c.l.b16 %v1137
      %v1212 = vunpack.c.h.b16 %v1137
      %v1213 = vunpack.c.l.b16 %v1138
      %v1214 = vunpack.c.h.b16 %v1138
      %v1215 = vunpack.c.l.b16 %v1139
      %v1216 = vunpack.c.h.b16 %v1139
      %v1217 = vunpack.c.l.b16 %v1140
      %v1218 = vunpack.c.h.b16 %v1140
      %v1219 = vunpack.c.l.b16 %v1141
      %v1220 = vunpack.c.h.b16 %v1141
      %v1221 = vunpack.c.l.b16 %v1142
      %v1222 = vunpack.c.h.b16 %v1142
      %v1223 = vunpack.c.l.b16 %v1143
      %v1224 = vunpack.c.h.b16 %v1143
      %v1225 = vunpack.c.l.b16 %v1144
      %v1226 = vunpack.c.h.b16 %v1144
      %v1227 = vunpack.c.l.b16 %v1145
      %v1228 = vunpack.c.h.b16 %v1145
      %v1229 = vunpack.c.l.b16 %v1146
      %v1230 = vunpack.c.h.b16 %v1146
      %v1231 = vunpack.c.l.b16 %v1147
      %v1232 = vunpack.c.h.b16 %v1147
      %v1233 = vunpack.c.l.b16 %v1148
      %v1234 = vunpack.c.h.b16 %v1148
      %v1235 = vunpack.c.l.b16 %v1149
      %v1236 = vunpack.c.h.b16 %v1149
      %v1237 = vunpack.c.l.b16 %v1150
      %v1238 = vunpack.c.h.b16 %v1150
      %v1239 = vunpack.c.l.b16 %v1151
      %v1240 = vunpack.c.h.b16 %v1151
      %v1241 = vunpack.c.l.b16 %v1152
      %v1242 = vunpack.c.h.b16 %v1152
      %v1243 = vunpack.c.l.b16 %v1153
      %v1244 = vunpack.c.h.b16 %v1153
      %v1245 = vunpack.c.l.b16 %v1154
      %v1246 = vunpack.c.h.b16 %v1154
      %v1247 = vunpack.c.l.b16 %v1155
      %v1248 = vunpack.c.h.b16 %v1155
      %v1249 = vunpack.c.l.b16 %v1156
      %v1250 = vunpack.c.h.b16 %v1156
      %v1251 = vunpack.c.l.b16 %v1157
      %v1252 = vunpack.c.h.b16 %v1157
      %v1253 = vunpack.c.l.b16 %v1158
      %v1254 = vunpack.c.h.b16 %v1158
      %v1255 = vpack.c.b16 %v1191, %v1191
      %v1256 = vpack.c.b16 %v1192, %v1192
      %v1257 = vpack.c.b16 %v1193, %v1193
      %v1258 = vpack.c.b16 %v1194, %v1194
      %v1259 = vpack.c.b16 %v1195, %v1195
      %v1260 = vpack.c.b16 %v1196, %v1196
      %v1261 = vpack.c.b16 %v1197, %v1197
      %v1262 = vpack.c.b16 %v1198, %v1198
      %v1263 = vpack.c.b16 %v1199, %v1199
      %v1264 = vpack.c.b16 %v1200, %v1200
      %v1265 = vpack.c.b16 %v1201, %v1201
      %v1266 = vpack.c.b16 %v1202, %v1202
      %v1267 = vpack.c.b16 %v1203, %v1203
      %v1268 = vpack.c.b16 %v1204, %v1204
      %v1269 = vpack.c.b16 %v1205, %v1205
      %v1270 = vpack.c.b16 %v1206, %v1206
      %v1271 = vpack.c.b16 %v1207, %v1207
      %v1272 = vpack.c.b16 %v1208, %v1208
      %v1273 = vpack.c.b16 %v1209, %v1209
      %v1274 = vpack.c.b16 %v1210, %v1210
      %v1275 = vpack.c.b16 %v1211, %v1211
      %v1276 = vpack.c.b16 %v1212, %v1212
      %v1277 = vpack.c.b16 %v1213, %v1213
      %v1278 = vpack.c.b16 %v1214, %v1214
      %v1279 = vpack.c.b16 %v1215, %v1215
      %v1280 = vpack.c.b16 %v1216, %v1216
      %v1281 = vpack.c.b16 %v1217, %v1217
      %v1282 = vpack.c.b16 %v1218, %v1218
      %v1283 = vpack.c.b16 %v1219, %v1219
      %v1284 = vpack.c.b16 %v1220, %v1220
      %v1285 = vpack.c.b16 %v1221, %v1221
      %v1286 = vpack.c.b16 %v1222, %v1222
      %v1287 = vpack.c.b16 %v1223, %v1223
      %v1288 = vpack.c.b16 %v1224, %v1224
      %v1289 = vpack.c.b16 %v1225, %v1225
      %v1290 = vpack.c.b16 %v1226, %v1226
      %v1291 = vpack.c.b16 %v1227, %v1227
      %v1292 = vpack.c.b16 %v1228, %v1228
      %v1293 = vpack.c.b16 %v1229, %v1229
      %v1294 = vpack.c.b16 %v1230, %v1230
      %v1295 = vpack.c.b16 %v1231, %v1231
      %v1296 = vpack.c.b16 %v1232, %v1232
      %v1297 = vpack.c.b16 %v1233, %v1233
      %v1298 = vpack.c.b16 %v1234, %v1234
      %v1299 = vpack.c.b16 %v1235, %v1235
      %v1300 = vpack.c.b16 %v1236, %v1236
      %v1301 = vpack.c.b16 %v1237, %v1237
      %v1302 = vpack.c.b16 %v1238, %v1238
      %v1303 = vpack.c.b16 %v1239, %v1239
      %v1304 = vpack.c.b16 %v1240, %v1240
      %v1305 = vpack.c.b16 %v1241, %v1241
      %v1306 = vpack.c.b16 %v1242, %v1242
      %v1307 = vpack.c.b16 %v1243, %v1243
      %v1308 = vpack.c.b16 %v1244, %v1244
      %v1309 = vpack.c.b16 %v1245, %v1245
      %v1310 = vpack.c.b16 %v1246, %v1246
      %v1311 = vpack.c.b16 %v1247, %v1247
      %v1312 = vpack.c.b16 %v1248, %v1248
      %v1313 = vpack.c.b16 %v1249, %v1249
      %v1314 = vpack.c.b16 %v1250, %v1250
      %v1315 = vpack.c.b16 %v1251, %v1251
      %v1316 = vpack.c.b16 %v1252, %v1252
      %v1317 = vpack.c.b16 %v1253, %v1253
      %v1318 = vpack.c.b16 %v1254, %v1254
      %1383 = vst [vmem:[%s309] sm:$0xf] %v1255
      %1384 = vst [vmem:[%s309 + $0x4] sm:$0xf] %v1256
      %1385 = vst [vmem:[%s309 + $0x8] sm:$0xf] %v1257
      %1386 = vst [vmem:[%s309 + $0xc] sm:$0xf] %v1258
      %1387 = vst [vmem:[%s309 + $0x10] sm:$0xf] %v1259
      %1388 = vst [vmem:[%s309 + $0x14] sm:$0xf] %v1260
      %1389 = vst [vmem:[%s309 + $0x18] sm:$0xf] %v1261
      %1390 = vst [vmem:[%s309 + $0x1c] sm:$0xf] %v1262
      %1391 = vst [vmem:[%s309 + $0x20] sm:$0xf] %v1263
      %1392 = vst [vmem:[%s309 + $0x24] sm:$0xf] %v1264
      %1393 = vst [vmem:[%s309 + $0x28] sm:$0xf] %v1265
      %1394 = vst [vmem:[%s309 + $0x2c] sm:$0xf] %v1266
      %1395 = vst [vmem:[%s309 + $0x30] sm:$0xf] %v1267
      %1396 = vst [vmem:[%s309 + $0x34] sm:$0xf] %v1268
      %1397 = vst [vmem:[%s309 + $0x38] sm:$0xf] %v1269
      %1398 = vst [vmem:[%s309 + $0x3c] sm:$0xf] %v1270
      %1399 = vst [vmem:[%s309 + $0x40] sm:$0xf] %v1271
      %1400 = vst [vmem:[%s309 + $0x44] sm:$0xf] %v1272
      %1401 = vst [vmem:[%s309 + $0x48] sm:$0xf] %v1273
      %1402 = vst [vmem:[%s309 + $0x4c] sm:$0xf] %v1274
      %1403 = vst [vmem:[%s309 + $0x50] sm:$0xf] %v1275
      %1404 = vst [vmem:[%s309 + $0x54] sm:$0xf] %v1276
      %1405 = vst [vmem:[%s309 + $0x58] sm:$0xf] %v1277
      %1406 = vst [vmem:[%s309 + $0x5c] sm:$0xf] %v1278
      %1407 = vst [vmem:[%s309 + $0x60] sm:$0xf] %v1279
      %1408 = vst [vmem:[%s309 + $0x64] sm:$0xf] %v1280
      %1409 = vst [vmem:[%s309 + $0x68] sm:$0xf] %v1281
      %1410 = vst [vmem:[%s309 + $0x6c] sm:$0xf] %v1282
      %1411 = vst [vmem:[%s309 + $0x70] sm:$0xf] %v1283
      %1412 = vst [vmem:[%s309 + $0x74] sm:$0xf] %v1284
      %1413 = vst [vmem:[%s309 + $0x78] sm:$0xf] %v1285
      %1414 = vst [vmem:[%s309 + $0x7c] sm:$0xf] %v1286
      %1415 = vst [vmem:[%s309 + $0x80] sm:$0xf] %v1287
      %1416 = vst [vmem:[%s309 + $0x84] sm:$0xf] %v1288
      %1417 = vst [vmem:[%s309 + $0x88] sm:$0xf] %v1289
      %1418 = vst [vmem:[%s309 + $0x8c] sm:$0xf] %v1290
      %1419 = vst [vmem:[%s309 + $0x90] sm:$0xf] %v1291
      %1420 = vst [vmem:[%s309 + $0x94] sm:$0xf] %v1292
      %1421 = vst [vmem:[%s309 + $0x98] sm:$0xf] %v1293
      %1422 = vst [vmem:[%s309 + $0x9c] sm:$0xf] %v1294
      %1423 = vst [vmem:[%s309 + $0xa0] sm:$0xf] %v1295
      %1424 = vst [vmem:[%s309 + $0xa4] sm:$0xf] %v1296
      %1425 = vst [vmem:[%s309 + $0xa8] sm:$0xf] %v1297
      %1426 = vst [vmem:[%s309 + $0xac] sm:$0xf] %v1298
      %1427 = vst [vmem:[%s309 + $0xb0] sm:$0xf] %v1299
      %1428 = vst [vmem:[%s309 + $0xb4] sm:$0xf] %v1300
      %1429 = vst [vmem:[%s309 + $0xb8] sm:$0xf] %v1301
      %1430 = vst [vmem:[%s309 + $0xbc] sm:$0xf] %v1302
      %1431 = vst [vmem:[%s309 + $0xc0] sm:$0xf] %v1303
      %1432 = vst [vmem:[%s309 + $0xc4] sm:$0xf] %v1304
      %1433 = vst [vmem:[%s309 + $0xc8] sm:$0xf] %v1305
      %1434 = vst [vmem:[%s309 + $0xcc] sm:$0xf] %v1306
      %1435 = vst [vmem:[%s309 + $0xd0] sm:$0xf] %v1307
      %1436 = vst [vmem:[%s309 + $0xd4] sm:$0xf] %v1308
      %1437 = vst [vmem:[%s309 + $0xd8] sm:$0xf] %v1309
      %1438 = vst [vmem:[%s309 + $0xdc] sm:$0xf] %v1310
      %1439 = vst [vmem:[%s309 + $0xe0] sm:$0xf] %v1311
      %1440 = vst [vmem:[%s309 + $0xe4] sm:$0xf] %v1312
      %1441 = vst [vmem:[%s309 + $0xe8] sm:$0xf] %v1313
      %1442 = vst [vmem:[%s309 + $0xec] sm:$0xf] %v1314
      %1443 = vst [vmem:[%s309 + $0xf0] sm:$0xf] %v1315
      %1444 = vst [vmem:[%s309 + $0xf4] sm:$0xf] %v1316
      %1445 = vst [vmem:[%s309 + $0xf8] sm:$0xf] %v1317
      %1446 = vst [vmem:[%s309 + $0xfc] sm:$0xf] %v1318
      %s1447 = smul.u32 64, %s21
      %p1448 = scmp.lt.s32.totalorder %s20, 3
      %s1449 = scalar_select %p1448, %s20, 3
      %p1450 = scmp.lt.s32.totalorder %s1447, 63
      %s1451 = scalar_select %p1450, %s1447, 63
      %p1452 = scmp.lt.s32.totalorder %s22, 0
      %s1453 = scalar_select %p1452, %s22, 0
      %s1454 = sadd.s32 %s1453, %s1451
      %s1455 = smul.addr %s1449, 64
      %s1456 = sadd.s32 %s1454, %s1455
      %s1457 = smul.addr %s1456, 4
      %s1458 = scalar_lea.vmem %s4, %s1457
      // Predicated region
      $region37: #{_lambda_.8} parent=35 // pred_check
        %p1459 = pneg %p164
      $region38: #{_lambda_.8} parent=35 // pred_check_branch
        %1461 = sbr.rel (%p1459) target = $region40
      $region39: #{_lambda_.8} parent=35 // pred_region
        %s1462 = smul.u32 64, %s21
      $region40: #{_lambda_.8} parent=35 // pred_fallthru
        _
    $region36: #{_lambda_.8} parent=5 // pred_fallthru
      _
    %p1463 = scmp.le.s32.totalorder 2, %s10
    // Predicated region
    $region41: #{_lambda_.8} parent=5 // pred_check
      %p1464 = pneg %p1463
    $region42: #{_lambda_.8} parent=5 // pred_check_branch
      %1466 = sbr.rel (%p1464) target = $region44
    $region43: #{_lambda_.8} parent=5 // pred_region
      %s1467 = ssub.s32 %s10, 2
      // Predicated region
      $region45: #{_lambda_.8} parent=43 // pred_check
        %p1468 = pneg %p170
      $region46: #{_lambda_.8} parent=43 // pred_check_branch
        %1470 = sbr.rel (%p1468) target = $region48
      $region47: #{_lambda_.8} parent=43 // pred_region
        %s1471 = smul.u32 64, %s24
        %p1472 = scmp.lt.s32.totalorder %s23, 3
        %s1473 = scalar_select %p1472, %s23, 3
        %p1474 = scmp.lt.s32.totalorder %s1471, 63
        %s1475 = scalar_select %p1474, %s1471, 63
        %p1476 = scmp.lt.s32.totalorder %s25, 0
        %s1477 = scalar_select %p1476, %s25, 0
        %s1478 = sadd.s32 %s1477, %s1475
        %s1479 = smul.addr %s1473, 64
        %s1480 = sadd.s32 %s1478, %s1479
        %s1481 = smul.addr %s1480, 4
        %s1482 = scalar_lea.vmem %s4, %s1481
      $region48: #{_lambda_.8} parent=43 // pred_fallthru
        _
    $region44: #{_lambda_.8} parent=5 // pred_fallthru
      _
  $region6: #{_lambda_.8} parent=0 // loop_footer
    %s14 = sadd.s32 1, %s10
  $region7: #{_lambda_.8} parent=0 // loop_footer_branch
    %9 = sbr.rel target = $region3
  $region8: #{_lambda_.8} parent=0 // loop_exit
    _

// kernel: _lambda_.9
$region0: #{_lambda_.9}
  #allocation0 [shape = 'u32[]', space=smem, size = 0x4, offset = 0x4, fixed_abs, tag = 'smem constant byte address 0x4 - core index']
  #allocation1 [shape = 'u32[144,128]{1,0:T(1,128)}', space=vmem, size = 0x12000, scoped, tag = 'internal scratch']
  %s0 = inlined_call_operand.vmem [shape: bf16[4,2048,64], index: 0, kind: input, shape index: {}]
  %s1 = inlined_call_operand.vmem [shape: bf16[4,64,128], index: 1, kind: input, shape index: {}]
  %s2 = inlined_call_operand.vmem [shape: f32[1,128], index: 2, kind: input, shape index: {}]
  %s3 = inlined_call_operand.vmem [shape: f32[1,128], index: 3, kind: input, shape index: {}]
  %s4 = inlined_call_operand.vmem [shape: bf16[4,2048,128], index: 4, kind: output, shape index: {}]
  %s5 = sld [smem:[#allocation0]]
  $region49: #{_lambda_.9} parent=0
    _
  %s7 = ssub.s32 1, %s5
  %s8 = scalar_select 0, %s7, %s5
  loop: start=0, step=1, limit=18
  $region2: #{_lambda_.9} parent=0 // loop_pre_header
    _
  $region3: #{_lambda_.9} parent=0 // loop_header
    %s10 = sphi 0, %s14
    %p11 = scmp.ge.s32.totalorder %s10, 18
    %s17 = sphi 0, %s36
    %s18 = sphi 0, %s32
    %s19 = sphi 0, %s28
    %s20 = sphi 0, %s17
    %s21 = sphi 0, %s18
    %s22 = sphi 0, %s19
    %s23 = sphi 0, %s20
    %s24 = sphi 0, %s21
    %s25 = sphi 0, %s22
    %s41 = sphi 0, %s43
    %s44 = sphi 0, %s41
    %s45 = sphi 0, %s44
    %s61 = sphi 0, %s45
    %s69 = sphi 0, %s71
    %s72 = sphi 0, %s69
    %s73 = sphi 0, %s72
    %s89 = sphi 0, %s73
    %s95 = sphi 0, %s97
    %s98 = sphi 0, %s95
    %s99 = sphi 0, %s98
    %s115 = sphi 0, %s99
    %s121 = sphi 0, %s123
    %s124 = sphi 0, %s121
    %s125 = sphi 0, %s124
    %s141 = sphi 0, %s125
    %s151 = sphi 0, %s153
    %s154 = sphi 0, %s151
    %s155 = sphi 0, %s154
    %s171 = sphi 0, %s155
  $region4: #{_lambda_.9} parent=0 // loop_header_branch
    %13 = sbr.rel (%p11) target = $region8
  $region5: #{_lambda_.9} parent=0 // loop_body
    %s15 = ssub.s32 %s10, 1
    %s16 = ssub.s32 %s10, 2
    %s26 = sadd.s32 1, %s19
    %p27 = scmp.ge.s32.totalorder %s26, 1
    %s28 = scalar_select %p27, 0, %s26
    %s29 = sadd.s32 1, %s18
    %s30 = scalar_select %p27, %s29, %s18
    %p31 = scmp.ge.s32.totalorder %s30, 4
    %s32 = scalar_select %p31, 0, %s30
    %s33 = sadd.s32 1, %s17
    %s34 = scalar_select %p31, %s33, %s17
    %p35 = scmp.ge.s32.totalorder %s34, 4
    %s36 = scalar_select %p35, 0, %s34
    %s37 = ssub.s32 %s17, %s36
    %s38 = ssub.s32 %s18, %s32
    %s39 = sor.u32 %s37, %s38
    %p40 = scmp.eq.s32.totalorder %s39, 0
    %s42 = sadd.s32 %s41, 1
    %s43 = scalar_select %p40, %s41, %s42
    %p46 = pneg %p40
    %p47 = scmp.eq.s32.totalorder %s10, 15
    %p48 = por %p46, %p47
    %p49 = scmp.ne.s32.totalorder %s41, %s44
    %p50 = scmp.eq.s32.totalorder %s10, 0
    %p51 = por %p49, %p50
    %p52 = scmp.ne.s32.totalorder %s41, %s44
    %p53 = scmp.eq.s32.totalorder %s15, 15
    %p54 = por %p52, %p53
    %p55 = scmp.ne.s32.totalorder %s44, %s45
    %p56 = scmp.eq.s32.totalorder %s15, 0
    %p57 = por %p55, %p56
    %p58 = scmp.ne.s32.totalorder %s44, %s45
    %p59 = scmp.eq.s32.totalorder %s16, 15
    %p60 = por %p58, %p59
    %p62 = scmp.ne.s32.totalorder %s45, %s61
    %p63 = scmp.eq.s32.totalorder %s16, 0
    %p64 = por %p62, %p63
    %s65 = ssub.s32 %s17, %s36
    %s66 = ssub.s32 %s19, %s28
    %s67 = sor.u32 %s65, %s66
    %p68 = scmp.eq.s32.totalorder %s67, 0
    %s70 = sadd.s32 %s69, 1
    %s71 = scalar_select %p68, %s69, %s70
    %p74 = pneg %p68
    %p75 = scmp.eq.s32.totalorder %s10, 15
    %p76 = por %p74, %p75
    %p77 = scmp.ne.s32.totalorder %s69, %s72
    %p78 = scmp.eq.s32.totalorder %s10, 0
    %p79 = por %p77, %p78
    %p80 = scmp.ne.s32.totalorder %s69, %s72
    %p81 = scmp.eq.s32.totalorder %s15, 15
    %p82 = por %p80, %p81
    %p83 = scmp.ne.s32.totalorder %s72, %s73
    %p84 = scmp.eq.s32.totalorder %s15, 0
    %p85 = por %p83, %p84
    %p86 = scmp.ne.s32.totalorder %s72, %s73
    %p87 = scmp.eq.s32.totalorder %s16, 15
    %p88 = por %p86, %p87
    %p90 = scmp.ne.s32.totalorder %s73, %s89
    %p91 = scmp.eq.s32.totalorder %s16, 0
    %p92 = por %p90, %p91
    %s93 = ssub.s32 %s19, %s28
    %p94 = scmp.eq.s32.totalorder %s93, 0
    %s96 = sadd.s32 %s95, 1
    %s97 = scalar_select %p94, %s95, %s96
    %p100 = pneg %p94
    %p101 = scmp.eq.s32.totalorder %s10, 15
    %p102 = por %p100, %p101
    %p103 = scmp.ne.s32.totalorder %s95, %s98
    %p104 = scmp.eq.s32.totalorder %s10, 0
    %p105 = por %p103, %p104
    %p106 = scmp.ne.s32.totalorder %s95, %s98
    %p107 = scmp.eq.s32.totalorder %s15, 15
    %p108 = por %p106, %p107
    %p109 = scmp.ne.s32.totalorder %s98, %s99
    %p110 = scmp.eq.s32.totalorder %s15, 0
    %p111 = por %p109, %p110
    %p112 = scmp.ne.s32.totalorder %s98, %s99
    %p113 = scmp.eq.s32.totalorder %s16, 15
    %p114 = por %p112, %p113
    %p116 = scmp.ne.s32.totalorder %s99, %s115
    %p117 = scmp.eq.s32.totalorder %s16, 0
    %p118 = por %p116, %p117
    %s119 = ssub.s32 %s19, %s28
    %p120 = scmp.eq.s32.totalorder %s119, 0
    %s122 = sadd.s32 %s121, 1
    %s123 = scalar_select %p120, %s121, %s122
    %p126 = pneg %p120
    %p127 = scmp.eq.s32.totalorder %s10, 15
    %p128 = por %p126, %p127
    %p129 = scmp.ne.s32.totalorder %s121, %s124
    %p130 = scmp.eq.s32.totalorder %s10, 0
    %p131 = por %p129, %p130
    %p132 = scmp.ne.s32.totalorder %s121, %s124
    %p133 = scmp.eq.s32.totalorder %s15, 15
    %p134 = por %p132, %p133
    %p135 = scmp.ne.s32.totalorder %s124, %s125
    %p136 = scmp.eq.s32.totalorder %s15, 0
    %p137 = por %p135, %p136
    %p138 = scmp.ne.s32.totalorder %s124, %s125
    %p139 = scmp.eq.s32.totalorder %s16, 15
    %p140 = por %p138, %p139
    %p142 = scmp.ne.s32.totalorder %s125, %s141
    %p143 = scmp.eq.s32.totalorder %s16, 0
    %p144 = por %p142, %p143
    %s145 = ssub.s32 %s17, %s36
    %s146 = ssub.s32 %s18, %s32
    %s147 = sor.u32 %s145, %s146
    %s148 = ssub.s32 %s19, %s28
    %s149 = sor.u32 %s147, %s148
    %p150 = scmp.eq.s32.totalorder %s149, 0
    %s152 = sadd.s32 %s151, 1
    %s153 = scalar_select %p150, %s151, %s152
    %p156 = pneg %p150
    %p157 = scmp.eq.s32.totalorder %s10, 15
    %p158 = por %p156, %p157
    %p159 = scmp.ne.s32.totalorder %s151, %s154
    %p160 = scmp.eq.s32.totalorder %s10, 0
    %p161 = por %p159, %p160
    %p162 = scmp.ne.s32.totalorder %s151, %s154
    %p163 = scmp.eq.s32.totalorder %s15, 15
    %p164 = por %p162, %p163
    %p165 = scmp.ne.s32.totalorder %s154, %s155
    %p166 = scmp.eq.s32.totalorder %s15, 0
    %p167 = por %p165, %p166
    %p168 = scmp.ne.s32.totalorder %s154, %s155
    %p169 = scmp.eq.s32.totalorder %s16, 15
    %p170 = por %p168, %p169
    %p172 = scmp.ne.s32.totalorder %s155, %s171
    %p173 = scmp.eq.s32.totalorder %s16, 0
    %p174 = por %p172, %p173
    %p175 = scmp.le.s32.totalorder 1, %s10
    %p176 = scmp.lt.s32.totalorder %s10, 17
    %p177 = pnand %p175, %p176
    %p178 = pneg %p177
    // Predicated region
    $region9: #{_lambda_.9} parent=5 // pred_check
      _
    $region10: #{_lambda_.9} parent=5 // pred_check_branch
      %180 = sbr.rel (%p177) target = $region12
    $region11: #{_lambda_.9} parent=5 // pred_region
      %s181 = ssub.s32 %s10, 1
      // Predicated region
      $region13: #{_lambda_.9} parent=11 // pred_check
        %p182 = pneg %p111
      $region14: #{_lambda_.9} parent=11 // pred_check_branch
        %184 = sbr.rel (%p182) target = $region16
      $region15: #{_lambda_.9} parent=11 // pred_region
        %p185 = scmp.lt.s32.totalorder %s22, 0
        %s186 = scalar_select %p185, %s22, 0
        %s187 = scalar_lea.vmem %s2, %s186
      $region16: #{_lambda_.9} parent=11 // pred_fallthru
        _
      // Predicated region
      $region17: #{_lambda_.9} parent=11 // pred_check
        %p188 = pneg %p137
      $region18: #{_lambda_.9} parent=11 // pred_check_branch
        %190 = sbr.rel (%p188) target = $region20
      $region19: #{_lambda_.9} parent=11 // pred_region
        %p191 = scmp.lt.s32.totalorder %s22, 0
        %s192 = scalar_select %p191, %s22, 0
        %s193 = scalar_lea.vmem %s3, %s192
      $region20: #{_lambda_.9} parent=11 // pred_fallthru
        _
    $region12: #{_lambda_.9} parent=5 // pred_fallthru
      _
    %p194 = scmp.lt.s32.totalorder %s10, 16
    // Predicated region
    $region21: #{_lambda_.9} parent=5 // pred_check
      %p195 = pneg %p194
    $region22: #{_lambda_.9} parent=5 // pred_check_branch
      %197 = sbr.rel (%p195) target = $region24
    $region23: #{_lambda_.9} parent=5 // pred_region
      // Predicated region
      $region25: #{_lambda_.9} parent=23 // pred_check
        %p198 = pneg %p51
      $region26: #{_lambda_.9} parent=23 // pred_check_branch
        %200 = sbr.rel (%p198) target = $region28
      $region27: #{_lambda_.9} parent=23 // pred_region
        %s201 = smul.u32 64, %s18
        %p202 = scmp.lt.s32.totalorder %s17, 3
        %s203 = scalar_select %p202, %s17, 3
        %p204 = scmp.lt.s32.totalorder %s201, 255
        %s205 = scalar_select %p204, %s201, 255
        %s206 = smul.addr %s203, 256
        %s207 = sadd.s32 %s205, %s206
        %s208 = smul.addr %s207, 4
        %s209 = scalar_lea.vmem %s0, %s208
        %s210 = smul.u32 64, %s18
      $region28: #{_lambda_.9} parent=23 // pred_fallthru
        _
      // Predicated region
      $region29: #{_lambda_.9} parent=23 // pred_check
        %p211 = pneg %p79
      $region30: #{_lambda_.9} parent=23 // pred_check_branch
        %213 = sbr.rel (%p211) target = $region32
      $region31: #{_lambda_.9} parent=23 // pred_region
        %p214 = scmp.lt.s32.totalorder %s17, 3
        %s215 = scalar_select %p214, %s17, 3
        %p216 = scmp.lt.s32.totalorder %s19, 0
        %s217 = scalar_select %p216, %s19, 0
        %s218 = smul.addr %s215, 8
        %s219 = sadd.s32 %s217, %s218
        %s220 = smul.addr %s219, 4
        %s221 = scalar_lea.vmem %s1, %s220
      $region32: #{_lambda_.9} parent=23 // pred_fallthru
        _
    $region24: #{_lambda_.9} parent=5 // pred_fallthru
      _
    %p222 = scmp.le.s32.totalorder 1, %s10
    %p223 = scmp.lt.s32.totalorder %s10, 17
    %p224 = pnand %p222, %p223
    %p225 = pneg %p224
    // Predicated region
    $region33: #{_lambda_.9} parent=5 // pred_check
      _
    $region34: #{_lambda_.9} parent=5 // pred_check_branch
      %227 = sbr.rel (%p224) target = $region36
    $region35: #{_lambda_.9} parent=5 // pred_region
      %s228 = ssub.s32 %s10, 1
      %s229 = smul.u32 64, %s21
      %p230 = scmp.lt.s32.totalorder %s20, 3
      %s231 = scalar_select %p230, %s20, 3
      %p232 = scmp.lt.s32.totalorder %s229, 255
      %s233 = scalar_select %p232, %s229, 255
      %s234 = smul.addr %s231, 256
      %s235 = sadd.s32 %s233, %s234
      %s236 = smul.addr %s235, 4
      %s237 = scalar_lea.vmem %s0, %s236
      %p238 = pneg %p57
      %p239 = pneg %p54
      %p240 = scmp.lt.s32.totalorder %s20, 3
      %s241 = scalar_select %p240, %s20, 3
      %p242 = scmp.lt.s32.totalorder %s22, 0
      %s243 = scalar_select %p242, %s22, 0
      %s244 = smul.addr %s241, 8
      %s245 = sadd.s32 %s243, %s244
      %s246 = smul.addr %s245, 4
      %s247 = scalar_lea.vmem %s1, %s246
      %p248 = pneg %p85
      %p249 = pneg %p82
      %p250 = scmp.lt.s32.totalorder %s22, 0
      %s251 = scalar_select %p250, %s22, 0
      %s252 = scalar_lea.vmem %s2, %s251
      %p253 = pneg %p111
      %p254 = pneg %p108
      %p255 = scmp.lt.s32.totalorder %s22, 0
      %s256 = scalar_select %p255, %s22, 0
      %s257 = scalar_lea.vmem %s3, %s256
      %p258 = pneg %p137
      %p259 = pneg %p134
      %p260 = pneg %p167
      %p261 = pneg %p164
      %s262 = smul.u32 64, %s21
      %p263 = scmp.lt.s32.totalorder %s20, 3
      %s264 = scalar_select %p263, %s20, 3
      %p265 = scmp.lt.s32.totalorder %s262, 255
      %s266 = scalar_select %p265, %s262, 255
      %p267 = scmp.lt.s32.totalorder %s22, 0
      %s268 = scalar_select %p267, %s22, 0
      %s269 = sadd.s32 %s268, %s266
      %s270 = smul.addr %s264, 256
      %s271 = sadd.s32 %s269, %s270
      %s272 = smul.addr %s271, 4
      %s273 = scalar_lea.vmem %s4, %s272
      %s274 = smul.u32 64, %s21
      %p275 = scmp.lt.s32.totalorder %s20, 3
      %s276 = scalar_select %p275, %s20, 3
      %p277 = scmp.lt.s32.totalorder %s274, 255
      %s278 = scalar_select %p277, %s274, 255
      %s279 = smul.addr %s276, 256
      %s280 = sadd.s32 %s278, %s279
      %s281 = smul.addr %s280, 4
      %s282 = scalar_lea.vmem %s0, %s281
      %s283 = smul.u32 64, %s21
      %p284 = scmp.lt.s32.totalorder %s20, 3
      %s285 = scalar_select %p284, %s20, 3
      %p286 = scmp.lt.s32.totalorder %s22, 0
      %s287 = scalar_select %p286, %s22, 0
      %s288 = smul.addr %s285, 8
      %s289 = sadd.s32 %s287, %s288
      %s290 = smul.addr %s289, 4
      %s291 = scalar_lea.vmem %s1, %s290
      %p292 = scmp.lt.s32.totalorder %s22, 0
      %s293 = scalar_select %p292, %s22, 0
      %s294 = scalar_lea.vmem %s2, %s293
      %p295 = scmp.lt.s32.totalorder %s22, 0
      %s296 = scalar_select %p295, %s22, 0
      %s297 = scalar_lea.vmem %s3, %s296
      %s298 = smul.u32 64, %s21
      %p299 = scmp.lt.s32.totalorder %s20, 3
      %s300 = scalar_select %p299, %s20, 3
      %p301 = scmp.lt.s32.totalorder %s298, 255
      %s302 = scalar_select %p301, %s298, 255
      %p303 = scmp.lt.s32.totalorder %s22, 0
      %s304 = scalar_select %p303, %s22, 0
      %s305 = sadd.s32 %s304, %s302
      %s306 = smul.addr %s300, 256
      %s307 = sadd.s32 %s305, %s306
      %s308 = smul.addr %s307, 4
      %s309 = scalar_lea.vmem %s4, %s308
      %s310 = smul.u32 64, %s21
      %v312 = vld [vmem:[%s282] sm:$0xf]
      %v313 = vld [vmem:[%s282 + $0x4] sm:$0xf]
      %v314 = vld [vmem:[%s282 + $0x8] sm:$0xf]
      %v315 = vld [vmem:[%s282 + $0xc] sm:$0xf]
      %v316 = vld [vmem:[%s282 + $0x10] sm:$0xf]
      %v317 = vld [vmem:[%s282 + $0x14] sm:$0xf]
      %v318 = vld [vmem:[%s282 + $0x18] sm:$0xf]
      %v319 = vld [vmem:[%s282 + $0x1c] sm:$0xf]
      %v320 = vld [vmem:[%s282 + $0x20] sm:$0xf]
      %v321 = vld [vmem:[%s282 + $0x24] sm:$0xf]
      %v322 = vld [vmem:[%s282 + $0x28] sm:$0xf]
      %v323 = vld [vmem:[%s282 + $0x2c] sm:$0xf]
      %v324 = vld [vmem:[%s282 + $0x30] sm:$0xf]
      %v325 = vld [vmem:[%s282 + $0x34] sm:$0xf]
      %v326 = vld [vmem:[%s282 + $0x38] sm:$0xf]
      %v327 = vld [vmem:[%s282 + $0x3c] sm:$0xf]
      %v328 = vld [vmem:[%s282 + $0x40] sm:$0xf]
      %v329 = vld [vmem:[%s282 + $0x44] sm:$0xf]
      %v330 = vld [vmem:[%s282 + $0x48] sm:$0xf]
      %v331 = vld [vmem:[%s282 + $0x4c] sm:$0xf]
      %v332 = vld [vmem:[%s282 + $0x50] sm:$0xf]
      %v333 = vld [vmem:[%s282 + $0x54] sm:$0xf]
      %v334 = vld [vmem:[%s282 + $0x58] sm:$0xf]
      %v335 = vld [vmem:[%s282 + $0x5c] sm:$0xf]
      %v336 = vld [vmem:[%s282 + $0x60] sm:$0xf]
      %v337 = vld [vmem:[%s282 + $0x64] sm:$0xf]
      %v338 = vld [vmem:[%s282 + $0x68] sm:$0xf]
      %v339 = vld [vmem:[%s282 + $0x6c] sm:$0xf]
      %v340 = vld [vmem:[%s282 + $0x70] sm:$0xf]
      %v341 = vld [vmem:[%s282 + $0x74] sm:$0xf]
      %v342 = vld [vmem:[%s282 + $0x78] sm:$0xf]
      %v343 = vld [vmem:[%s282 + $0x7c] sm:$0xf]
      %v344 = vld [vmem:[%s282 + $0x80] sm:$0xf]
      %v345 = vld [vmem:[%s282 + $0x84] sm:$0xf]
      %v346 = vld [vmem:[%s282 + $0x88] sm:$0xf]
      %v347 = vld [vmem:[%s282 + $0x8c] sm:$0xf]
      %v348 = vld [vmem:[%s282 + $0x90] sm:$0xf]
      %v349 = vld [vmem:[%s282 + $0x94] sm:$0xf]
      %v350 = vld [vmem:[%s282 + $0x98] sm:$0xf]
      %v351 = vld [vmem:[%s282 + $0x9c] sm:$0xf]
      %v352 = vld [vmem:[%s282 + $0xa0] sm:$0xf]
      %v353 = vld [vmem:[%s282 + $0xa4] sm:$0xf]
      %v354 = vld [vmem:[%s282 + $0xa8] sm:$0xf]
      %v355 = vld [vmem:[%s282 + $0xac] sm:$0xf]
      %v356 = vld [vmem:[%s282 + $0xb0] sm:$0xf]
      %v357 = vld [vmem:[%s282 + $0xb4] sm:$0xf]
      %v358 = vld [vmem:[%s282 + $0xb8] sm:$0xf]
      %v359 = vld [vmem:[%s282 + $0xbc] sm:$0xf]
      %v360 = vld [vmem:[%s282 + $0xc0] sm:$0xf]
      %v361 = vld [vmem:[%s282 + $0xc4] sm:$0xf]
      %v362 = vld [vmem:[%s282 + $0xc8] sm:$0xf]
      %v363 = vld [vmem:[%s282 + $0xcc] sm:$0xf]
      %v364 = vld [vmem:[%s282 + $0xd0] sm:$0xf]
      %v365 = vld [vmem:[%s282 + $0xd4] sm:$0xf]
      %v366 = vld [vmem:[%s282 + $0xd8] sm:$0xf]
      %v367 = vld [vmem:[%s282 + $0xdc] sm:$0xf]
      %v368 = vld [vmem:[%s282 + $0xe0] sm:$0xf]
      %v369 = vld [vmem:[%s282 + $0xe4] sm:$0xf]
      %v370 = vld [vmem:[%s282 + $0xe8] sm:$0xf]
      %v371 = vld [vmem:[%s282 + $0xec] sm:$0xf]
      %v372 = vld [vmem:[%s282 + $0xf0] sm:$0xf]
      %v373 = vld [vmem:[%s282 + $0xf4] sm:$0xf]
      %v374 = vld [vmem:[%s282 + $0xf8] sm:$0xf]
      %v375 = vld [vmem:[%s282 + $0xfc] sm:$0xf]
      %v376 = vld [vmem:[%s291] sm:$0xf]
      %v377 = vld [vmem:[%s291 + $0x4] sm:$0xf]
      %v378 = vld [vmem:[%s291 + $0x8] sm:$0xf]
      %v379 = vld [vmem:[%s291 + $0xc] sm:$0xf]
      %v380 = vld [vmem:[%s291 + $0x10] sm:$0xf]
      %v381 = vld [vmem:[%s291 + $0x14] sm:$0xf]
      %v382 = vld [vmem:[%s291 + $0x18] sm:$0xf]
      %v383 = vld [vmem:[%s291 + $0x1c] sm:$0xf]
      %v448 = vunpack.c.l.b16 %v312
      %v449 = vunpack.c.l.b16 %v313
      %v450 = vunpack.c.l.b16 %v314
      %v451 = vunpack.c.l.b16 %v315
      %v452 = vunpack.c.l.b16 %v316
      %v453 = vunpack.c.l.b16 %v317
      %v454 = vunpack.c.l.b16 %v318
      %v455 = vunpack.c.l.b16 %v319
      %v456 = vunpack.c.l.b16 %v320
      %v457 = vunpack.c.l.b16 %v321
      %v458 = vunpack.c.l.b16 %v322
      %v459 = vunpack.c.l.b16 %v323
      %v460 = vunpack.c.l.b16 %v324
      %v461 = vunpack.c.l.b16 %v325
      %v462 = vunpack.c.l.b16 %v326
      %v463 = vunpack.c.l.b16 %v327
      %v464 = vunpack.c.l.b16 %v328
      %v465 = vunpack.c.l.b16 %v329
      %v466 = vunpack.c.l.b16 %v330
      %v467 = vunpack.c.l.b16 %v331
      %v468 = vunpack.c.l.b16 %v332
      %v469 = vunpack.c.l.b16 %v333
      %v470 = vunpack.c.l.b16 %v334
      %v471 = vunpack.c.l.b16 %v335
      %v472 = vunpack.c.l.b16 %v336
      %v473 = vunpack.c.l.b16 %v337
      %v474 = vunpack.c.l.b16 %v338
      %v475 = vunpack.c.l.b16 %v339
      %v476 = vunpack.c.l.b16 %v340
      %v477 = vunpack.c.l.b16 %v341
      %v478 = vunpack.c.l.b16 %v342
      %v479 = vunpack.c.l.b16 %v343
      %v480 = vunpack.c.l.b16 %v344
      %v481 = vunpack.c.l.b16 %v345
      %v482 = vunpack.c.l.b16 %v346
      %v483 = vunpack.c.l.b16 %v347
      %v484 = vunpack.c.l.b16 %v348
      %v485 = vunpack.c.l.b16 %v349
      %v486 = vunpack.c.l.b16 %v350
      %v487 = vunpack.c.l.b16 %v351
      %v488 = vunpack.c.l.b16 %v352
      %v489 = vunpack.c.l.b16 %v353
      %v490 = vunpack.c.l.b16 %v354
      %v491 = vunpack.c.l.b16 %v355
      %v492 = vunpack.c.l.b16 %v356
      %v493 = vunpack.c.l.b16 %v357
      %v494 = vunpack.c.l.b16 %v358
      %v495 = vunpack.c.l.b16 %v359
      %v496 = vunpack.c.l.b16 %v360
      %v497 = vunpack.c.l.b16 %v361
      %v498 = vunpack.c.l.b16 %v362
      %v499 = vunpack.c.l.b16 %v363
      %v500 = vunpack.c.l.b16 %v364
      %v501 = vunpack.c.l.b16 %v365
      %v502 = vunpack.c.l.b16 %v366
      %v503 = vunpack.c.l.b16 %v367
      %v504 = vunpack.c.l.b16 %v368
      %v505 = vunpack.c.l.b16 %v369
      %v506 = vunpack.c.l.b16 %v370
      %v507 = vunpack.c.l.b16 %v371
      %v508 = vunpack.c.l.b16 %v372
      %v509 = vunpack.c.l.b16 %v373
      %v510 = vunpack.c.l.b16 %v374
      %v511 = vunpack.c.l.b16 %v375
      %v512 = vpack.c.b16 %v449, %v448
      %v513 = vpack.c.b16 %v451, %v450
      %v514 = vpack.c.b16 %v453, %v452
      %v515 = vpack.c.b16 %v455, %v454
      %v516 = vpack.c.b16 %v457, %v456
      %v517 = vpack.c.b16 %v459, %v458
      %v518 = vpack.c.b16 %v461, %v460
      %v519 = vpack.c.b16 %v463, %v462
      %v520 = vpack.c.b16 %v465, %v464
      %v521 = vpack.c.b16 %v467, %v466
      %v522 = vpack.c.b16 %v469, %v468
      %v523 = vpack.c.b16 %v471, %v470
      %v524 = vpack.c.b16 %v473, %v472
      %v525 = vpack.c.b16 %v475, %v474
      %v526 = vpack.c.b16 %v477, %v476
      %v527 = vpack.c.b16 %v479, %v478
      %v528 = vpack.c.b16 %v481, %v480
      %v529 = vpack.c.b16 %v483, %v482
      %v530 = vpack.c.b16 %v485, %v484
      %v531 = vpack.c.b16 %v487, %v486
      %v532 = vpack.c.b16 %v489, %v488
      %v533 = vpack.c.b16 %v491, %v490
      %v534 = vpack.c.b16 %v493, %v492
      %v535 = vpack.c.b16 %v495, %v494
      %v536 = vpack.c.b16 %v497, %v496
      %v537 = vpack.c.b16 %v499, %v498
      %v538 = vpack.c.b16 %v501, %v500
      %v539 = vpack.c.b16 %v503, %v502
      %v540 = vpack.c.b16 %v505, %v504
      %v541 = vpack.c.b16 %v507, %v506
      %v542 = vpack.c.b16 %v509, %v508
      %v543 = vpack.c.b16 %v511, %v510
      %v552 = vunpack.c.l.b16 %v376
      %v553 = vunpack.c.l.b16 %v377
      %v554 = vunpack.c.l.b16 %v378
      %v555 = vunpack.c.l.b16 %v379
      %v556 = vunpack.c.l.b16 %v380
      %v557 = vunpack.c.l.b16 %v381
      %v558 = vunpack.c.l.b16 %v382
      %v559 = vunpack.c.l.b16 %v383
      %v560 = vpack.c.b16 %v553, %v552
      %v561 = vpack.c.b16 %v555, %v554
      %v562 = vpack.c.b16 %v557, %v556
      %v563 = vpack.c.b16 %v559, %v558
      %vm568 = vcmask 523264
      %v570 = vsel %vm568, %v512, 0
      %v573 = vsel %vm568, %v513, 0
      %v576 = vsel %vm568, %v514, 0
      %v579 = vsel %vm568, %v515, 0
      %v582 = vsel %vm568, %v516, 0
      %v585 = vsel %vm568, %v517, 0
      %v588 = vsel %vm568, %v518, 0
      %v591 = vsel %vm568, %v519, 0
      %v594 = vsel %vm568, %v520, 0
      %v597 = vsel %vm568, %v521, 0
      %v600 = vsel %vm568, %v522, 0
      %v603 = vsel %vm568, %v523, 0
      %v606 = vsel %vm568, %v524, 0
      %v609 = vsel %vm568, %v525, 0
      %v612 = vsel %vm568, %v526, 0
      %v615 = vsel %vm568, %v527, 0
      %v618 = vsel %vm568, %v528, 0
      %v621 = vsel %vm568, %v529, 0
      %v624 = vsel %vm568, %v530, 0
      %v627 = vsel %vm568, %v531, 0
      %v630 = vsel %vm568, %v532, 0
      %v633 = vsel %vm568, %v533, 0
      %v636 = vsel %vm568, %v534, 0
      %v639 = vsel %vm568, %v535, 0
      %v642 = vsel %vm568, %v536, 0
      %v645 = vsel %vm568, %v537, 0
      %v648 = vsel %vm568, %v538, 0
      %v651 = vsel %vm568, %v539, 0
      %v654 = vsel %vm568, %v540, 0
      %v657 = vsel %vm568, %v541, 0
      %v660 = vsel %vm568, %v542, 0
      %v663 = vsel %vm568, %v543, 0
      %665 = vmatprep.subr.bf16.mxu0 0
      %666 = vmatpush1.bf16.msra.mxu0 %v560
      %667 = vmatprep.subr.bf16.mxu0 0
      %668 = vmatpush1.bf16.msra.mxu0 %v561
      %669 = vmatprep.subr.bf16.mxu0 0
      %670 = vmatpush1.bf16.msra.mxu0 %v562
      %671 = vmatprep.subr.bf16.mxu0 0
      %672 = vmatpush1.bf16.msra.mxu0 %v563
      %673 = vmatprep.subr.bf16.mxu0 0
      %674 = vmatpush1.bf16.msra.mxu0 0
      %675 = vmatprep.subr.bf16.mxu0 0
      %676 = vmatpush1.bf16.msra.mxu0 0
      %677 = vmatprep.subr.bf16.mxu0 0
      %678 = vmatpush1.bf16.msra.mxu0 0
      %679 = vmatprep.subr.bf16.mxu0 0
      %680 = vmatpush1.bf16.msra.mxu0 0
      %681 = vmatprep.subr.bf16.mxu0 0
      %682 = vmatpush1.bf16.msra.mxu0 0
      %683 = vmatprep.subr.bf16.mxu0 0
      %684 = vmatpush1.bf16.msra.mxu0 0
      %685 = vmatprep.subr.bf16.mxu0 0
      %686 = vmatpush1.bf16.msra.mxu0 0
      %687 = vmatprep.subr.bf16.mxu0 0
      %688 = vmatpush1.bf16.msra.mxu0 0
      %689 = vmatprep.subr.bf16.mxu0 0
      %690 = vmatpush1.bf16.msra.mxu0 0
      %691 = vmatprep.subr.bf16.mxu0 0
      %692 = vmatpush1.bf16.msra.mxu0 0
      %693 = vmatprep.subr.bf16.mxu0 0
      %694 = vmatpush1.bf16.msra.mxu0 0
      %695 = vmatprep.subr.bf16.mxu0 0
      %696 = vmatpush1.bf16.msra.mxu0 0
      %697 = vmatprep.mubr.bf16.mxu0 0
      %698 = vmatmul.mubr.bf16.gmra.mrb[0].mxu0 %v570
      %v699 = vpop.f32.mrb[0].mxu0
      %v700 = vadd.f32 0.0, %v699
      %v701 = vpop.f32.mrb[0].mxu0
      %v702 = vpop.f32.mrb[0].mxu0
      %v703 = vadd.f32 0.0, %v702
      %v704 = vpop.f32.mrb[0].mxu0
      %705 = vmatprep.mubr.bf16.mxu0 0
      %706 = vmatmul.mubr.bf16.gmra.mrb[0].mxu0 %v573
      %v707 = vpop.f32.mrb[0].mxu0
      %v708 = vadd.f32 0.0, %v707
      %v709 = vpop.f32.mrb[0].mxu0
      %v710 = vpop.f32.mrb[0].mxu0
      %v711 = vadd.f32 0.0, %v710
      %v712 = vpop.f32.mrb[0].mxu0
      %713 = vmatprep.mubr.bf16.mxu0 0
      %714 = vmatmul.mubr.bf16.gmra.mrb[0].mxu0 %v576
      %v715 = vpop.f32.mrb[0].mxu0
      %v716 = vadd.f32 0.0, %v715
      %v717 = vpop.f32.mrb[0].mxu0
      %v718 = vpop.f32.mrb[0].mxu0
      %v719 = vadd.f32 0.0, %v718
      %v720 = vpop.f32.mrb[0].mxu0
      %721 = vmatprep.mubr.bf16.mxu0 0
      %722 = vmatmul.mubr.bf16.gmra.mrb[0].mxu0 %v579
      %v723 = vpop.f32.mrb[0].mxu0
      %v724 = vadd.f32 0.0, %v723
      %v725 = vpop.f32.mrb[0].mxu0
      %v726 = vpop.f32.mrb[0].mxu0
      %v727 = vadd.f32 0.0, %v726
      %v728 = vpop.f32.mrb[0].mxu0
      %729 = vmatprep.mubr.bf16.mxu0 0
      %730 = vmatmul.mubr.bf16.gmra.mrb[0].mxu0 %v582
      %v731 = vpop.f32.mrb[0].mxu0
      %v732 = vadd.f32 0.0, %v731
      %v733 = vpop.f32.mrb[0].mxu0
      %v734 = vpop.f32.mrb[0].mxu0
      %v735 = vadd.f32 0.0, %v734
      %v736 = vpop.f32.mrb[0].mxu0
      %737 = vmatprep.mubr.bf16.mxu0 0
      %738 = vmatmul.mubr.bf16.gmra.mrb[0].mxu0 %v585
      %v739 = vpop.f32.mrb[0].mxu0
      %v740 = vadd.f32 0.0, %v739
      %v741 = vpop.f32.mrb[0].mxu0
      %v742 = vpop.f32.mrb[0].mxu0
      %v743 = vadd.f32 0.0, %v742
      %v744 = vpop.f32.mrb[0].mxu0
      %745 = vmatprep.mubr.bf16.mxu0 0
      %746 = vmatmul.mubr.bf16.gmra.mrb[0].mxu0 %v588
      %v747 = vpop.f32.mrb[0].mxu0
      %v748 = vadd.f32 0.0, %v747
      %v749 = vpop.f32.mrb[0].mxu0
      %v750 = vpop.f32.mrb[0].mxu0
      %v751 = vadd.f32 0.0, %v750
      %v752 = vpop.f32.mrb[0].mxu0
      %753 = vmatprep.mubr.bf16.mxu0 0
      %754 = vmatmul.mubr.bf16.gmra.mrb[0].mxu0 %v591
      %v755 = vpop.f32.mrb[0].mxu0
      %v756 = vadd.f32 0.0, %v755
      %v757 = vpop.f32.mrb[0].mxu0
      %v758 = vpop.f32.mrb[0].mxu0
      %v759 = vadd.f32 0.0, %v758
      %v760 = vpop.f32.mrb[0].mxu0
      %761 = vmatprep.mubr.bf16.mxu0 0
      %762 = vmatmul.mubr.bf16.gmra.mrb[0].mxu0 %v594
      %v763 = vpop.f32.mrb[0].mxu0
      %v764 = vadd.f32 0.0, %v763
      %v765 = vpop.f32.mrb[0].mxu0
      %v766 = vpop.f32.mrb[0].mxu0
      %v767 = vadd.f32 0.0, %v766
      %v768 = vpop.f32.mrb[0].mxu0
      %769 = vmatprep.mubr.bf16.mxu0 0
      %770 = vmatmul.mubr.bf16.gmra.mrb[0].mxu0 %v597
      %v771 = vpop.f32.mrb[0].mxu0
      %v772 = vadd.f32 0.0, %v771
      %v773 = vpop.f32.mrb[0].mxu0
      %v774 = vpop.f32.mrb[0].mxu0
      %v775 = vadd.f32 0.0, %v774
      %v776 = vpop.f32.mrb[0].mxu0
      %777 = vmatprep.mubr.bf16.mxu0 0
      %778 = vmatmul.mubr.bf16.gmra.mrb[0].mxu0 %v600
      %v779 = vpop.f32.mrb[0].mxu0
      %v780 = vadd.f32 0.0, %v779
      %v781 = vpop.f32.mrb[0].mxu0
      %v782 = vpop.f32.mrb[0].mxu0
      %v783 = vadd.f32 0.0, %v782
      %v784 = vpop.f32.mrb[0].mxu0
      %785 = vmatprep.mubr.bf16.mxu0 0
      %786 = vmatmul.mubr.bf16.gmra.mrb[0].mxu0 %v603
      %v787 = vpop.f32.mrb[0].mxu0
      %v788 = vadd.f32 0.0, %v787
      %v789 = vpop.f32.mrb[0].mxu0
      %v790 = vpop.f32.mrb[0].mxu0
      %v791 = vadd.f32 0.0, %v790
      %v792 = vpop.f32.mrb[0].mxu0
      %793 = vmatprep.mubr.bf16.mxu0 0
      %794 = vmatmul.mubr.bf16.gmra.mrb[0].mxu0 %v606
      %v795 = vpop.f32.mrb[0].mxu0
      %v796 = vadd.f32 0.0, %v795
      %v797 = vpop.f32.mrb[0].mxu0
      %v798 = vpop.f32.mrb[0].mxu0
      %v799 = vadd.f32 0.0, %v798
      %v800 = vpop.f32.mrb[0].mxu0
      %801 = vmatprep.mubr.bf16.mxu0 0
      %802 = vmatmul.mubr.bf16.gmra.mrb[0].mxu0 %v609
      %v803 = vpop.f32.mrb[0].mxu0
      %v804 = vadd.f32 0.0, %v803
      %v805 = vpop.f32.mrb[0].mxu0
      %v806 = vpop.f32.mrb[0].mxu0
      %v807 = vadd.f32 0.0, %v806
      %v808 = vpop.f32.mrb[0].mxu0
      %809 = vmatprep.mubr.bf16.mxu0 0
      %810 = vmatmul.mubr.bf16.gmra.mrb[0].mxu0 %v612
      %v811 = vpop.f32.mrb[0].mxu0
      %v812 = vadd.f32 0.0, %v811
      %v813 = vpop.f32.mrb[0].mxu0
      %v814 = vpop.f32.mrb[0].mxu0
      %v815 = vadd.f32 0.0, %v814
      %v816 = vpop.f32.mrb[0].mxu0
      %817 = vmatprep.mubr.bf16.mxu0 0
      %818 = vmatmul.mubr.bf16.gmra.mrb[0].mxu0 %v615
      %v819 = vpop.f32.mrb[0].mxu0
      %v820 = vadd.f32 0.0, %v819
      %v821 = vpop.f32.mrb[0].mxu0
      %v822 = vpop.f32.mrb[0].mxu0
      %v823 = vadd.f32 0.0, %v822
      %v824 = vpop.f32.mrb[0].mxu0
      %825 = vmatprep.mubr.bf16.mxu0 0
      %826 = vmatmul.mubr.bf16.gmra.mrb[0].mxu0 %v618
      %v827 = vpop.f32.mrb[0].mxu0
      %v828 = vadd.f32 0.0, %v827
      %v829 = vpop.f32.mrb[0].mxu0
      %v830 = vpop.f32.mrb[0].mxu0
      %v831 = vadd.f32 0.0, %v830
      %v832 = vpop.f32.mrb[0].mxu0
      %833 = vmatprep.mubr.bf16.mxu0 0
      %834 = vmatmul.mubr.bf16.gmra.mrb[0].mxu0 %v621
      %v835 = vpop.f32.mrb[0].mxu0
      %v836 = vadd.f32 0.0, %v835
      %v837 = vpop.f32.mrb[0].mxu0
      %v838 = vpop.f32.mrb[0].mxu0
      %v839 = vadd.f32 0.0, %v838
      %v840 = vpop.f32.mrb[0].mxu0
      %841 = vmatprep.mubr.bf16.mxu0 0
      %842 = vmatmul.mubr.bf16.gmra.mrb[0].mxu0 %v624
      %v843 = vpop.f32.mrb[0].mxu0
      %v844 = vadd.f32 0.0, %v843
      %v845 = vpop.f32.mrb[0].mxu0
      %v846 = vpop.f32.mrb[0].mxu0
      %v847 = vadd.f32 0.0, %v846
      %v848 = vpop.f32.mrb[0].mxu0
      %849 = vmatprep.mubr.bf16.mxu0 0
      %850 = vmatmul.mubr.bf16.gmra.mrb[0].mxu0 %v627
      %v851 = vpop.f32.mrb[0].mxu0
      %v852 = vadd.f32 0.0, %v851
      %v853 = vpop.f32.mrb[0].mxu0
      %v854 = vpop.f32.mrb[0].mxu0
      %v855 = vadd.f32 0.0, %v854
      %v856 = vpop.f32.mrb[0].mxu0
      %857 = vmatprep.mubr.bf16.mxu0 0
      %858 = vmatmul.mubr.bf16.gmra.mrb[0].mxu0 %v630
      %v859 = vpop.f32.mrb[0].mxu0
      %v860 = vadd.f32 0.0, %v859
      %v861 = vpop.f32.mrb[0].mxu0
      %v862 = vpop.f32.mrb[0].mxu0
      %v863 = vadd.f32 0.0, %v862
      %v864 = vpop.f32.mrb[0].mxu0
      %865 = vmatprep.mubr.bf16.mxu0 0
      %866 = vmatmul.mubr.bf16.gmra.mrb[0].mxu0 %v633
      %v867 = vpop.f32.mrb[0].mxu0
      %v868 = vadd.f32 0.0, %v867
      %v869 = vpop.f32.mrb[0].mxu0
      %v870 = vpop.f32.mrb[0].mxu0
      %v871 = vadd.f32 0.0, %v870
      %v872 = vpop.f32.mrb[0].mxu0
      %873 = vmatprep.mubr.bf16.mxu0 0
      %874 = vmatmul.mubr.bf16.gmra.mrb[0].mxu0 %v636
      %v875 = vpop.f32.mrb[0].mxu0
      %v876 = vadd.f32 0.0, %v875
      %v877 = vpop.f32.mrb[0].mxu0
      %v878 = vpop.f32.mrb[0].mxu0
      %v879 = vadd.f32 0.0, %v878
      %v880 = vpop.f32.mrb[0].mxu0
      %881 = vmatprep.mubr.bf16.mxu0 0
      %882 = vmatmul.mubr.bf16.gmra.mrb[0].mxu0 %v639
      %v883 = vpop.f32.mrb[0].mxu0
      %v884 = vadd.f32 0.0, %v883
      %v885 = vpop.f32.mrb[0].mxu0
      %v886 = vpop.f32.mrb[0].mxu0
      %v887 = vadd.f32 0.0, %v886
      %v888 = vpop.f32.mrb[0].mxu0
      %889 = vmatprep.mubr.bf16.mxu0 0
      %890 = vmatmul.mubr.bf16.gmra.mrb[0].mxu0 %v642
      %v891 = vpop.f32.mrb[0].mxu0
      %v892 = vadd.f32 0.0, %v891
      %v893 = vpop.f32.mrb[0].mxu0
      %v894 = vpop.f32.mrb[0].mxu0
      %v895 = vadd.f32 0.0, %v894
      %v896 = vpop.f32.mrb[0].mxu0
      %897 = vmatprep.mubr.bf16.mxu0 0
      %898 = vmatmul.mubr.bf16.gmra.mrb[0].mxu0 %v645
      %v899 = vpop.f32.mrb[0].mxu0
      %v900 = vadd.f32 0.0, %v899
      %v901 = vpop.f32.mrb[0].mxu0
      %v902 = vpop.f32.mrb[0].mxu0
      %v903 = vadd.f32 0.0, %v902
      %v904 = vpop.f32.mrb[0].mxu0
      %905 = vmatprep.mubr.bf16.mxu0 0
      %906 = vmatmul.mubr.bf16.gmra.mrb[0].mxu0 %v648
      %v907 = vpop.f32.mrb[0].mxu0
      %v908 = vadd.f32 0.0, %v907
      %v909 = vpop.f32.mrb[0].mxu0
      %v910 = vpop.f32.mrb[0].mxu0
      %v911 = vadd.f32 0.0, %v910
      %v912 = vpop.f32.mrb[0].mxu0
      %913 = vmatprep.mubr.bf16.mxu0 0
      %914 = vmatmul.mubr.bf16.gmra.mrb[0].mxu0 %v651
      %v915 = vpop.f32.mrb[0].mxu0
      %v916 = vadd.f32 0.0, %v915
      %v917 = vpop.f32.mrb[0].mxu0
      %v918 = vpop.f32.mrb[0].mxu0
      %v919 = vadd.f32 0.0, %v918
      %v920 = vpop.f32.mrb[0].mxu0
      %921 = vmatprep.mubr.bf16.mxu0 0
      %922 = vmatmul.mubr.bf16.gmra.mrb[0].mxu0 %v654
      %v923 = vpop.f32.mrb[0].mxu0
      %v924 = vadd.f32 0.0, %v923
      %v925 = vpop.f32.mrb[0].mxu0
      %v926 = vpop.f32.mrb[0].mxu0
      %v927 = vadd.f32 0.0, %v926
      %v928 = vpop.f32.mrb[0].mxu0
      %929 = vmatprep.mubr.bf16.mxu0 0
      %930 = vmatmul.mubr.bf16.gmra.mrb[0].mxu0 %v657
      %v931 = vpop.f32.mrb[0].mxu0
      %v932 = vadd.f32 0.0, %v931
      %v933 = vpop.f32.mrb[0].mxu0
      %v934 = vpop.f32.mrb[0].mxu0
      %v935 = vadd.f32 0.0, %v934
      %v936 = vpop.f32.mrb[0].mxu0
      %937 = vmatprep.mubr.bf16.mxu0 0
      %938 = vmatmul.mubr.bf16.gmra.mrb[0].mxu0 %v660
      %v939 = vpop.f32.mrb[0].mxu0
      %v940 = vadd.f32 0.0, %v939
      %v941 = vpop.f32.mrb[0].mxu0
      %v942 = vpop.f32.mrb[0].mxu0
      %v943 = vadd.f32 0.0, %v942
      %v944 = vpop.f32.mrb[0].mxu0
      %945 = vmatprep.mubr.bf16.mxu0 0
      %946 = vmatmul.mubr.bf16.gmra.mrb[0].mxu0 %v663
      %v947 = vpop.f32.mrb[0].mxu0
      %v948 = vadd.f32 0.0, %v947
      %v949 = vpop.f32.mrb[0].mxu0
      %v950 = vpop.f32.mrb[0].mxu0
      %v951 = vadd.f32 0.0, %v950
      %v952 = vpop.f32.mrb[0].mxu0
      %953 = vdwg.mxu0
      %v954 = vld [vmem:[%s294] sm:$0x1]
      %v956 = vlaneseq
      %v957 = vshrl.u32 %v956, 7
      %v958 = vsub.s32 0, %v957
      %v959 = vrot.slane %v954, %v958
      %v961 = vmul.f32 %v700, %v959
      %v962 = vmul.f32 %v703, %v959
      %v963 = vmul.f32 %v708, %v959
      %v964 = vmul.f32 %v711, %v959
      %v965 = vmul.f32 %v716, %v959
      %v966 = vmul.f32 %v719, %v959
      %v967 = vmul.f32 %v724, %v959
      %v968 = vmul.f32 %v727, %v959
      %v969 = vmul.f32 %v732, %v959
      %v970 = vmul.f32 %v735, %v959
      %v971 = vmul.f32 %v740, %v959
      %v972 = vmul.f32 %v743, %v959
      %v973 = vmul.f32 %v748, %v959
      %v974 = vmul.f32 %v751, %v959
      %v975 = vmul.f32 %v756, %v959
      %v976 = vmul.f32 %v759, %v959
      %v977 = vmul.f32 %v764, %v959
      %v978 = vmul.f32 %v767, %v959
      %v979 = vmul.f32 %v772, %v959
      %v980 = vmul.f32 %v775, %v959
      %v981 = vmul.f32 %v780, %v959
      %v982 = vmul.f32 %v783, %v959
      %v983 = vmul.f32 %v788, %v959
      %v984 = vmul.f32 %v791, %v959
      %v985 = vmul.f32 %v796, %v959
      %v986 = vmul.f32 %v799, %v959
      %v987 = vmul.f32 %v804, %v959
      %v988 = vmul.f32 %v807, %v959
      %v989 = vmul.f32 %v812, %v959
      %v990 = vmul.f32 %v815, %v959
      %v991 = vmul.f32 %v820, %v959
      %v992 = vmul.f32 %v823, %v959
      %v993 = vmul.f32 %v828, %v959
      %v994 = vmul.f32 %v831, %v959
      %v995 = vmul.f32 %v836, %v959
      %v996 = vmul.f32 %v839, %v959
      %v997 = vmul.f32 %v844, %v959
      %v998 = vmul.f32 %v847, %v959
      %v999 = vmul.f32 %v852, %v959
      %v1000 = vmul.f32 %v855, %v959
      %v1001 = vmul.f32 %v860, %v959
      %v1002 = vmul.f32 %v863, %v959
      %v1003 = vmul.f32 %v868, %v959
      %v1004 = vmul.f32 %v871, %v959
      %v1005 = vmul.f32 %v876, %v959
      %v1006 = vmul.f32 %v879, %v959
      %v1007 = vmul.f32 %v884, %v959
      %v1008 = vmul.f32 %v887, %v959
      %v1009 = vmul.f32 %v892, %v959
      %v1010 = vmul.f32 %v895, %v959
      %v1011 = vmul.f32 %v900, %v959
      %v1012 = vmul.f32 %v903, %v959
      %v1013 = vmul.f32 %v908, %v959
      %v1014 = vmul.f32 %v911, %v959
      %v1015 = vmul.f32 %v916, %v959
      %v1016 = vmul.f32 %v919, %v959
      %v1017 = vmul.f32 %v924, %v959
      %v1018 = vmul.f32 %v927, %v959
      %v1019 = vmul.f32 %v932, %v959
      %v1020 = vmul.f32 %v935, %v959
      %v1021 = vmul.f32 %v940, %v959
      %v1022 = vmul.f32 %v943, %v959
      %v1023 = vmul.f32 %v948, %v959
      %v1024 = vmul.f32 %v951, %v959
      %v1025 = vld [vmem:[%s297] sm:$0x1]
      %v1027 = vlaneseq
      %v1028 = vshrl.u32 %v1027, 7
      %v1029 = vsub.s32 0, %v1028
      %v1030 = vrot.slane %v1025, %v1029
      %v1032 = vadd.f32 %v961, %v1030
      %v1033 = vadd.f32 %v962, %v1030
      %v1034 = vadd.f32 %v963, %v1030
      %v1035 = vadd.f32 %v964, %v1030
      %v1036 = vadd.f32 %v965, %v1030
      %v1037 = vadd.f32 %v966, %v1030
      %v1038 = vadd.f32 %v967, %v1030
      %v1039 = vadd.f32 %v968, %v1030
      %v1040 = vadd.f32 %v969, %v1030
      %v1041 = vadd.f32 %v970, %v1030
      %v1042 = vadd.f32 %v971, %v1030
      %v1043 = vadd.f32 %v972, %v1030
      %v1044 = vadd.f32 %v973, %v1030
      %v1045 = vadd.f32 %v974, %v1030
      %v1046 = vadd.f32 %v975, %v1030
      %v1047 = vadd.f32 %v976, %v1030
      %v1048 = vadd.f32 %v977, %v1030
      %v1049 = vadd.f32 %v978, %v1030
      %v1050 = vadd.f32 %v979, %v1030
      %v1051 = vadd.f32 %v980, %v1030
      %v1052 = vadd.f32 %v981, %v1030
      %v1053 = vadd.f32 %v982, %v1030
      %v1054 = vadd.f32 %v983, %v1030
      %v1055 = vadd.f32 %v984, %v1030
      %v1056 = vadd.f32 %v985, %v1030
      %v1057 = vadd.f32 %v986, %v1030
      %v1058 = vadd.f32 %v987, %v1030
      %v1059 = vadd.f32 %v988, %v1030
      %v1060 = vadd.f32 %v989, %v1030
      %v1061 = vadd.f32 %v990, %v1030
      %v1062 = vadd.f32 %v991, %v1030
      %v1063 = vadd.f32 %v992, %v1030
      %v1064 = vadd.f32 %v993, %v1030
      %v1065 = vadd.f32 %v994, %v1030
      %v1066 = vadd.f32 %v995, %v1030
      %v1067 = vadd.f32 %v996, %v1030
      %v1068 = vadd.f32 %v997, %v1030
      %v1069 = vadd.f32 %v998, %v1030
      %v1070 = vadd.f32 %v999, %v1030
      %v1071 = vadd.f32 %v1000, %v1030
      %v1072 = vadd.f32 %v1001, %v1030
      %v1073 = vadd.f32 %v1002, %v1030
      %v1074 = vadd.f32 %v1003, %v1030
      %v1075 = vadd.f32 %v1004, %v1030
      %v1076 = vadd.f32 %v1005, %v1030
      %v1077 = vadd.f32 %v1006, %v1030
      %v1078 = vadd.f32 %v1007, %v1030
      %v1079 = vadd.f32 %v1008, %v1030
      %v1080 = vadd.f32 %v1009, %v1030
      %v1081 = vadd.f32 %v1010, %v1030
      %v1082 = vadd.f32 %v1011, %v1030
      %v1083 = vadd.f32 %v1012, %v1030
      %v1084 = vadd.f32 %v1013, %v1030
      %v1085 = vadd.f32 %v1014, %v1030
      %v1086 = vadd.f32 %v1015, %v1030
      %v1087 = vadd.f32 %v1016, %v1030
      %v1088 = vadd.f32 %v1017, %v1030
      %v1089 = vadd.f32 %v1018, %v1030
      %v1090 = vadd.f32 %v1019, %v1030
      %v1091 = vadd.f32 %v1020, %v1030
      %v1092 = vadd.f32 %v1021, %v1030
      %v1093 = vadd.f32 %v1022, %v1030
      %v1094 = vadd.f32 %v1023, %v1030
      %v1095 = vadd.f32 %v1024, %v1030
      %v1096 = vtanh.pop %v1032
      %v1097 = vtanh.pop %v1033
      %v1098 = vtanh.pop %v1034
      %v1099 = vtanh.pop %v1035
      %v1100 = vtanh.pop %v1036
      %v1101 = vtanh.pop %v1037
      %v1102 = vtanh.pop %v1038
      %v1103 = vtanh.pop %v1039
      %v1104 = vtanh.pop %v1040
      %v1105 = vtanh.pop %v1041
      %v1106 = vtanh.pop %v1042
      %v1107 = vtanh.pop %v1043
      %v1108 = vtanh.pop %v1044
      %v1109 = vtanh.pop %v1045
      %v1110 = vtanh.pop %v1046
      %v1111 = vtanh.pop %v1047
      %v1112 = vtanh.pop %v1048
      %v1113 = vtanh.pop %v1049
      %v1114 = vtanh.pop %v1050
      %v1115 = vtanh.pop %v1051
      %v1116 = vtanh.pop %v1052
      %v1117 = vtanh.pop %v1053
      %v1118 = vtanh.pop %v1054
      %v1119 = vtanh.pop %v1055
      %v1120 = vtanh.pop %v1056
      %v1121 = vtanh.pop %v1057
      %v1122 = vtanh.pop %v1058
      %v1123 = vtanh.pop %v1059
      %v1124 = vtanh.pop %v1060
      %v1125 = vtanh.pop %v1061
      %v1126 = vtanh.pop %v1062
      %v1127 = vtanh.pop %v1063
      %v1128 = vtanh.pop %v1064
      %v1129 = vtanh.pop %v1065
      %v1130 = vtanh.pop %v1066
      %v1131 = vtanh.pop %v1067
      %v1132 = vtanh.pop %v1068
      %v1133 = vtanh.pop %v1069
      %v1134 = vtanh.pop %v1070
      %v1135 = vtanh.pop %v1071
      %v1136 = vtanh.pop %v1072
      %v1137 = vtanh.pop %v1073
      %v1138 = vtanh.pop %v1074
      %v1139 = vtanh.pop %v1075
      %v1140 = vtanh.pop %v1076
      %v1141 = vtanh.pop %v1077
      %v1142 = vtanh.pop %v1078
      %v1143 = vtanh.pop %v1079
      %v1144 = vtanh.pop %v1080
      %v1145 = vtanh.pop %v1081
      %v1146 = vtanh.pop %v1082
      %v1147 = vtanh.pop %v1083
      %v1148 = vtanh.pop %v1084
      %v1149 = vtanh.pop %v1085
      %v1150 = vtanh.pop %v1086
      %v1151 = vtanh.pop %v1087
      %v1152 = vtanh.pop %v1088
      %v1153 = vtanh.pop %v1089
      %v1154 = vtanh.pop %v1090
      %v1155 = vtanh.pop %v1091
      %v1156 = vtanh.pop %v1092
      %v1157 = vtanh.pop %v1093
      %v1158 = vtanh.pop %v1094
      %v1159 = vtanh.pop %v1095
      %v1160 = vpack.c.bf16 %v1097, %v1096
      %v1161 = vpack.c.bf16 %v1099, %v1098
      %v1162 = vpack.c.bf16 %v1101, %v1100
      %v1163 = vpack.c.bf16 %v1103, %v1102
      %v1164 = vpack.c.bf16 %v1105, %v1104
      %v1165 = vpack.c.bf16 %v1107, %v1106
      %v1166 = vpack.c.bf16 %v1109, %v1108
      %v1167 = vpack.c.bf16 %v1111, %v1110
      %v1168 = vpack.c.bf16 %v1113, %v1112
      %v1169 = vpack.c.bf16 %v1115, %v1114
      %v1170 = vpack.c.bf16 %v1117, %v1116
      %v1171 = vpack.c.bf16 %v1119, %v1118
      %v1172 = vpack.c.bf16 %v1121, %v1120
      %v1173 = vpack.c.bf16 %v1123, %v1122
      %v1174 = vpack.c.bf16 %v1125, %v1124
      %v1175 = vpack.c.bf16 %v1127, %v1126
      %v1176 = vpack.c.bf16 %v1129, %v1128
      %v1177 = vpack.c.bf16 %v1131, %v1130
      %v1178 = vpack.c.bf16 %v1133, %v1132
      %v1179 = vpack.c.bf16 %v1135, %v1134
      %v1180 = vpack.c.bf16 %v1137, %v1136
      %v1181 = vpack.c.bf16 %v1139, %v1138
      %v1182 = vpack.c.bf16 %v1141, %v1140
      %v1183 = vpack.c.bf16 %v1143, %v1142
      %v1184 = vpack.c.bf16 %v1145, %v1144
      %v1185 = vpack.c.bf16 %v1147, %v1146
      %v1186 = vpack.c.bf16 %v1149, %v1148
      %v1187 = vpack.c.bf16 %v1151, %v1150
      %v1188 = vpack.c.bf16 %v1153, %v1152
      %v1189 = vpack.c.bf16 %v1155, %v1154
      %v1190 = vpack.c.bf16 %v1157, %v1156
      %v1191 = vpack.c.bf16 %v1159, %v1158
      %v1224 = vunpack.c.l.b16 %v1160
      %v1225 = vunpack.c.h.b16 %v1160
      %v1226 = vunpack.c.l.b16 %v1161
      %v1227 = vunpack.c.h.b16 %v1161
      %v1228 = vunpack.c.l.b16 %v1162
      %v1229 = vunpack.c.h.b16 %v1162
      %v1230 = vunpack.c.l.b16 %v1163
      %v1231 = vunpack.c.h.b16 %v1163
      %v1232 = vunpack.c.l.b16 %v1164
      %v1233 = vunpack.c.h.b16 %v1164
      %v1234 = vunpack.c.l.b16 %v1165
      %v1235 = vunpack.c.h.b16 %v1165
      %v1236 = vunpack.c.l.b16 %v1166
      %v1237 = vunpack.c.h.b16 %v1166
      %v1238 = vunpack.c.l.b16 %v1167
      %v1239 = vunpack.c.h.b16 %v1167
      %v1240 = vunpack.c.l.b16 %v1168
      %v1241 = vunpack.c.h.b16 %v1168
      %v1242 = vunpack.c.l.b16 %v1169
      %v1243 = vunpack.c.h.b16 %v1169
      %v1244 = vunpack.c.l.b16 %v1170
      %v1245 = vunpack.c.h.b16 %v1170
      %v1246 = vunpack.c.l.b16 %v1171
      %v1247 = vunpack.c.h.b16 %v1171
      %v1248 = vunpack.c.l.b16 %v1172
      %v1249 = vunpack.c.h.b16 %v1172
      %v1250 = vunpack.c.l.b16 %v1173
      %v1251 = vunpack.c.h.b16 %v1173
      %v1252 = vunpack.c.l.b16 %v1174
      %v1253 = vunpack.c.h.b16 %v1174
      %v1254 = vunpack.c.l.b16 %v1175
      %v1255 = vunpack.c.h.b16 %v1175
      %v1256 = vunpack.c.l.b16 %v1176
      %v1257 = vunpack.c.h.b16 %v1176
      %v1258 = vunpack.c.l.b16 %v1177
      %v1259 = vunpack.c.h.b16 %v1177
      %v1260 = vunpack.c.l.b16 %v1178
      %v1261 = vunpack.c.h.b16 %v1178
      %v1262 = vunpack.c.l.b16 %v1179
      %v1263 = vunpack.c.h.b16 %v1179
      %v1264 = vunpack.c.l.b16 %v1180
      %v1265 = vunpack.c.h.b16 %v1180
      %v1266 = vunpack.c.l.b16 %v1181
      %v1267 = vunpack.c.h.b16 %v1181
      %v1268 = vunpack.c.l.b16 %v1182
      %v1269 = vunpack.c.h.b16 %v1182
      %v1270 = vunpack.c.l.b16 %v1183
      %v1271 = vunpack.c.h.b16 %v1183
      %v1272 = vunpack.c.l.b16 %v1184
      %v1273 = vunpack.c.h.b16 %v1184
      %v1274 = vunpack.c.l.b16 %v1185
      %v1275 = vunpack.c.h.b16 %v1185
      %v1276 = vunpack.c.l.b16 %v1186
      %v1277 = vunpack.c.h.b16 %v1186
      %v1278 = vunpack.c.l.b16 %v1187
      %v1279 = vunpack.c.h.b16 %v1187
      %v1280 = vunpack.c.l.b16 %v1188
      %v1281 = vunpack.c.h.b16 %v1188
      %v1282 = vunpack.c.l.b16 %v1189
      %v1283 = vunpack.c.h.b16 %v1189
      %v1284 = vunpack.c.l.b16 %v1190
      %v1285 = vunpack.c.h.b16 %v1190
      %v1286 = vunpack.c.l.b16 %v1191
      %v1287 = vunpack.c.h.b16 %v1191
      %v1288 = vpack.c.b16 %v1224, %v1224
      %v1289 = vpack.c.b16 %v1225, %v1225
      %v1290 = vpack.c.b16 %v1226, %v1226
      %v1291 = vpack.c.b16 %v1227, %v1227
      %v1292 = vpack.c.b16 %v1228, %v1228
      %v1293 = vpack.c.b16 %v1229, %v1229
      %v1294 = vpack.c.b16 %v1230, %v1230
      %v1295 = vpack.c.b16 %v1231, %v1231
      %v1296 = vpack.c.b16 %v1232, %v1232
      %v1297 = vpack.c.b16 %v1233, %v1233
      %v1298 = vpack.c.b16 %v1234, %v1234
      %v1299 = vpack.c.b16 %v1235, %v1235
      %v1300 = vpack.c.b16 %v1236, %v1236
      %v1301 = vpack.c.b16 %v1237, %v1237
      %v1302 = vpack.c.b16 %v1238, %v1238
      %v1303 = vpack.c.b16 %v1239, %v1239
      %v1304 = vpack.c.b16 %v1240, %v1240
      %v1305 = vpack.c.b16 %v1241, %v1241
      %v1306 = vpack.c.b16 %v1242, %v1242
      %v1307 = vpack.c.b16 %v1243, %v1243
      %v1308 = vpack.c.b16 %v1244, %v1244
      %v1309 = vpack.c.b16 %v1245, %v1245
      %v1310 = vpack.c.b16 %v1246, %v1246
      %v1311 = vpack.c.b16 %v1247, %v1247
      %v1312 = vpack.c.b16 %v1248, %v1248
      %v1313 = vpack.c.b16 %v1249, %v1249
      %v1314 = vpack.c.b16 %v1250, %v1250
      %v1315 = vpack.c.b16 %v1251, %v1251
      %v1316 = vpack.c.b16 %v1252, %v1252
      %v1317 = vpack.c.b16 %v1253, %v1253
      %v1318 = vpack.c.b16 %v1254, %v1254
      %v1319 = vpack.c.b16 %v1255, %v1255
      %v1320 = vpack.c.b16 %v1256, %v1256
      %v1321 = vpack.c.b16 %v1257, %v1257
      %v1322 = vpack.c.b16 %v1258, %v1258
      %v1323 = vpack.c.b16 %v1259, %v1259
      %v1324 = vpack.c.b16 %v1260, %v1260
      %v1325 = vpack.c.b16 %v1261, %v1261
      %v1326 = vpack.c.b16 %v1262, %v1262
      %v1327 = vpack.c.b16 %v1263, %v1263
      %v1328 = vpack.c.b16 %v1264, %v1264
      %v1329 = vpack.c.b16 %v1265, %v1265
      %v1330 = vpack.c.b16 %v1266, %v1266
      %v1331 = vpack.c.b16 %v1267, %v1267
      %v1332 = vpack.c.b16 %v1268, %v1268
      %v1333 = vpack.c.b16 %v1269, %v1269
      %v1334 = vpack.c.b16 %v1270, %v1270
      %v1335 = vpack.c.b16 %v1271, %v1271
      %v1336 = vpack.c.b16 %v1272, %v1272
      %v1337 = vpack.c.b16 %v1273, %v1273
      %v1338 = vpack.c.b16 %v1274, %v1274
      %v1339 = vpack.c.b16 %v1275, %v1275
      %v1340 = vpack.c.b16 %v1276, %v1276
      %v1341 = vpack.c.b16 %v1277, %v1277
      %v1342 = vpack.c.b16 %v1278, %v1278
      %v1343 = vpack.c.b16 %v1279, %v1279
      %v1344 = vpack.c.b16 %v1280, %v1280
      %v1345 = vpack.c.b16 %v1281, %v1281
      %v1346 = vpack.c.b16 %v1282, %v1282
      %v1347 = vpack.c.b16 %v1283, %v1283
      %v1348 = vpack.c.b16 %v1284, %v1284
      %v1349 = vpack.c.b16 %v1285, %v1285
      %v1350 = vpack.c.b16 %v1286, %v1286
      %v1351 = vpack.c.b16 %v1287, %v1287
      %1416 = vst [vmem:[%s309] sm:$0xf] %v1288
      %1417 = vst [vmem:[%s309 + $0x4] sm:$0xf] %v1289
      %1418 = vst [vmem:[%s309 + $0x8] sm:$0xf] %v1290
      %1419 = vst [vmem:[%s309 + $0xc] sm:$0xf] %v1291
      %1420 = vst [vmem:[%s309 + $0x10] sm:$0xf] %v1292
      %1421 = vst [vmem:[%s309 + $0x14] sm:$0xf] %v1293
      %1422 = vst [vmem:[%s309 + $0x18] sm:$0xf] %v1294
      %1423 = vst [vmem:[%s309 + $0x1c] sm:$0xf] %v1295
      %1424 = vst [vmem:[%s309 + $0x20] sm:$0xf] %v1296
      %1425 = vst [vmem:[%s309 + $0x24] sm:$0xf] %v1297
      %1426 = vst [vmem:[%s309 + $0x28] sm:$0xf] %v1298
      %1427 = vst [vmem:[%s309 + $0x2c] sm:$0xf] %v1299
      %1428 = vst [vmem:[%s309 + $0x30] sm:$0xf] %v1300
      %1429 = vst [vmem:[%s309 + $0x34] sm:$0xf] %v1301
      %1430 = vst [vmem:[%s309 + $0x38] sm:$0xf] %v1302
      %1431 = vst [vmem:[%s309 + $0x3c] sm:$0xf] %v1303
      %1432 = vst [vmem:[%s309 + $0x40] sm:$0xf] %v1304
      %1433 = vst [vmem:[%s309 + $0x44] sm:$0xf] %v1305
      %1434 = vst [vmem:[%s309 + $0x48] sm:$0xf] %v1306
      %1435 = vst [vmem:[%s309 + $0x4c] sm:$0xf] %v1307
      %1436 = vst [vmem:[%s309 + $0x50] sm:$0xf] %v1308
      %1437 = vst [vmem:[%s309 + $0x54] sm:$0xf] %v1309
      %1438 = vst [vmem:[%s309 + $0x58] sm:$0xf] %v1310
      %1439 = vst [vmem:[%s309 + $0x5c] sm:$0xf] %v1311
      %1440 = vst [vmem:[%s309 + $0x60] sm:$0xf] %v1312
      %1441 = vst [vmem:[%s309 + $0x64] sm:$0xf] %v1313
      %1442 = vst [vmem:[%s309 + $0x68] sm:$0xf] %v1314
      %1443 = vst [vmem:[%s309 + $0x6c] sm:$0xf] %v1315
      %1444 = vst [vmem:[%s309 + $0x70] sm:$0xf] %v1316
      %1445 = vst [vmem:[%s309 + $0x74] sm:$0xf] %v1317
      %1446 = vst [vmem:[%s309 + $0x78] sm:$0xf] %v1318
      %1447 = vst [vmem:[%s309 + $0x7c] sm:$0xf] %v1319
      %1448 = vst [vmem:[%s309 + $0x80] sm:$0xf] %v1320
      %1449 = vst [vmem:[%s309 + $0x84] sm:$0xf] %v1321
      %1450 = vst [vmem:[%s309 + $0x88] sm:$0xf] %v1322
      %1451 = vst [vmem:[%s309 + $0x8c] sm:$0xf] %v1323
      %1452 = vst [vmem:[%s309 + $0x90] sm:$0xf] %v1324
      %1453 = vst [vmem:[%s309 + $0x94] sm:$0xf] %v1325
      %1454 = vst [vmem:[%s309 + $0x98] sm:$0xf] %v1326
      %1455 = vst [vmem:[%s309 + $0x9c] sm:$0xf] %v1327
      %1456 = vst [vmem:[%s309 + $0xa0] sm:$0xf] %v1328
      %1457 = vst [vmem:[%s309 + $0xa4] sm:$0xf] %v1329
      %1458 = vst [vmem:[%s309 + $0xa8] sm:$0xf] %v1330
      %1459 = vst [vmem:[%s309 + $0xac] sm:$0xf] %v1331
      %1460 = vst [vmem:[%s309 + $0xb0] sm:$0xf] %v1332
      %1461 = vst [vmem:[%s309 + $0xb4] sm:$0xf] %v1333
      %1462 = vst [vmem:[%s309 + $0xb8] sm:$0xf] %v1334
      %1463 = vst [vmem:[%s309 + $0xbc] sm:$0xf] %v1335
      %1464 = vst [vmem:[%s309 + $0xc0] sm:$0xf] %v1336
      %1465 = vst [vmem:[%s309 + $0xc4] sm:$0xf] %v1337
      %1466 = vst [vmem:[%s309 + $0xc8] sm:$0xf] %v1338
      %1467 = vst [vmem:[%s309 + $0xcc] sm:$0xf] %v1339
      %1468 = vst [vmem:[%s309 + $0xd0] sm:$0xf] %v1340
      %1469 = vst [vmem:[%s309 + $0xd4] sm:$0xf] %v1341
      %1470 = vst [vmem:[%s309 + $0xd8] sm:$0xf] %v1342
      %1471 = vst [vmem:[%s309 + $0xdc] sm:$0xf] %v1343
      %1472 = vst [vmem:[%s309 + $0xe0] sm:$0xf] %v1344
      %1473 = vst [vmem:[%s309 + $0xe4] sm:$0xf] %v1345
      %1474 = vst [vmem:[%s309 + $0xe8] sm:$0xf] %v1346
      %1475 = vst [vmem:[%s309 + $0xec] sm:$0xf] %v1347
      %1476 = vst [vmem:[%s309 + $0xf0] sm:$0xf] %v1348
      %1477 = vst [vmem:[%s309 + $0xf4] sm:$0xf] %v1349
      %1478 = vst [vmem:[%s309 + $0xf8] sm:$0xf] %v1350
      %1479 = vst [vmem:[%s309 + $0xfc] sm:$0xf] %v1351
      %s1480 = smul.u32 64, %s21
      %p1481 = scmp.lt.s32.totalorder %s20, 3
      %s1482 = scalar_select %p1481, %s20, 3
      %p1483 = scmp.lt.s32.totalorder %s1480, 255
      %s1484 = scalar_select %p1483, %s1480, 255
      %p1485 = scmp.lt.s32.totalorder %s22, 0
      %s1486 = scalar_select %p1485, %s22, 0
      %s1487 = sadd.s32 %s1486, %s1484
      %s1488 = smul.addr %s1482, 256
      %s1489 = sadd.s32 %s1487, %s1488
      %s1490 = smul.addr %s1489, 4
      %s1491 = scalar_lea.vmem %s4, %s1490
      // Predicated region
      $region37: #{_lambda_.9} parent=35 // pred_check
        %p1492 = pneg %p164
      $region38: #{_lambda_.9} parent=35 // pred_check_branch
        %1494 = sbr.rel (%p1492) target = $region40
      $region39: #{_lambda_.9} parent=35 // pred_region
        %s1495 = smul.u32 64, %s21
      $region40: #{_lambda_.9} parent=35 // pred_fallthru
        _
    $region36: #{_lambda_.9} parent=5 // pred_fallthru
      _
    %p1496 = scmp.le.s32.totalorder 2, %s10
    // Predicated region
    $region41: #{_lambda_.9} parent=5 // pred_check
      %p1497 = pneg %p1496
    $region42: #{_lambda_.9} parent=5 // pred_check_branch
      %1499 = sbr.rel (%p1497) target = $region44
    $region43: #{_lambda_.9} parent=5 // pred_region
      %s1500 = ssub.s32 %s10, 2
      // Predicated region
      $region45: #{_lambda_.9} parent=43 // pred_check
        %p1501 = pneg %p170
      $region46: #{_lambda_.9} parent=43 // pred_check_branch
        %1503 = sbr.rel (%p1501) target = $region48
      $region47: #{_lambda_.9} parent=43 // pred_region
        %s1504 = smul.u32 64, %s24
        %p1505 = scmp.lt.s32.totalorder %s23, 3
        %s1506 = scalar_select %p1505, %s23, 3
        %p1507 = scmp.lt.s32.totalorder %s1504, 255
        %s1508 = scalar_select %p1507, %s1504, 255
        %p1509 = scmp.lt.s32.totalorder %s25, 0
        %s1510 = scalar_select %p1509, %s25, 0
        %s1511 = sadd.s32 %s1510, %s1508
        %s1512 = smul.addr %s1506, 256
        %s1513 = sadd.s32 %s1511, %s1512
        %s1514 = smul.addr %s1513, 4
        %s1515 = scalar_lea.vmem %s4, %s1514
      $region48: #{_lambda_.9} parent=43 // pred_fallthru
        _
    $region44: #{_lambda_.9} parent=5 // pred_fallthru
      _
  $region6: #{_lambda_.9} parent=0 // loop_footer
    %s14 = sadd.s32 1, %s10
  $region7: #{_lambda_.9} parent=0 // loop_footer_branch
    %9 = sbr.rel target = $region3
  $region8: #{_lambda_.9} parent=0 // loop_exit
    _

</llo_original>
